<compile_context>
chip_gen: v6e
topology: v6e:2x2x1
jax: 0.10.0
libtpu: 0.0.40
codegen_flags: <defaults>
</compile_context>

<pallas_src>
import math

import jax
import jax.numpy as jnp
from jax.experimental import pallas as pl
from jax.experimental.pallas import tpu as pltpu


def _pad128(n):
    return ((int(n) + 127) // 128) * 128


# ----------------------------------------------------------------------------
# Pallas kernel
# ----------------------------------------------------------------------------
def make_cnn_kernel(*, batch, length, conv_kernel_sizes, n_mlp_linear,
                    normalization, eps=1e-5):
    """Fused CNN forward.

    Ref order:
      x (B*L, C_pad) f32,
      row_t (B*L, 1) f32,
      for each conv layer:  W (K, C_pad, C_pad) bf16, bias (1, C_pad) f32,
                            gamma (1, C_pad) f32, beta (1, C_pad) f32,
      flatten+Linear0:      W1 (L_last, C_pad, H0_pad) bf16, b1 (1, H0_pad) f32,
      for each later MLP linear:
          [gamma, beta] (1, Hprev_pad) f32   (only if normalization),
          W (Hprev_pad, H_pad) bf16, b (1, H_pad) f32,
      out (B*L, out_pad) f32.
    """
    R = batch * length

    conv_out_lengths = []
    L = length
    for K in conv_kernel_sizes:
        L = L - K + 1
        conv_out_lengths.append(L)
    L_last = L

    def kernel(x_ref, t_ref, *rest):
        o_ref = rest[-1]
        p = rest[:-1]

        row_t = t_ref[...]                          # (R, 1) f32, time index of row

        def shift_up(v, k):
            # result row r holds v[r + k]; tail rows are zero padded.
            if k == 0:
                return v
            pad = jnp.zeros((k, v.shape[1]), v.dtype)
            return jnp.concatenate([v[k:, :], pad], axis=0)

        def conv_matmul(h, w_ref, K):
            # Conv1d in full-length layout: out[r] = sum_k h[r + k] @ W[k].
            # bf16 MXU inputs, f32 accumulation.
            acc = jnp.zeros((R, w_ref.shape[-1]), jnp.float32)
            for k in range(K):
                hk = shift_up(h, k).astype(jnp.bfloat16)
                acc = acc + jnp.dot(hk, w_ref[k],
                                    preferred_element_type=jnp.float32)
            return acc

        def batchnorm(h, valid, count, gamma, beta):
            # Training-mode BatchNorm (biased variance) over `count` valid
            # rows, one pass: sum and sum-of-squares, all in f32.
            hm = h * valid
            inv_n = 1.0 / float(count)
            mu = jnp.sum(hm, axis=0, keepdims=True) * inv_n
            ex2 = jnp.sum(hm * h, axis=0, keepdims=True) * inv_n
            var = ex2 - mu * mu
            return gamma * (h - mu) * jax.lax.rsqrt(var + eps) + beta

        h = x_ref[...]                              # (R, C_pad) f32
        idx = 0

        # --- convolutional base: Conv1d -> BatchNorm1d -> ReLU --------------
        for j, K in enumerate(conv_kernel_sizes):
            w_ref, b_ref = p[idx], p[idx + 1]
            g_ref, bt_ref = p[idx + 2], p[idx + 3]
            idx += 4
            L_out = conv_out_lengths[j]
            h = conv_matmul(h, w_ref, K) + b_ref[...]
            valid = (row_t < float(L_out)).astype(jnp.float32)
            h = batchnorm(h, valid, batch * L_out, g_ref[...], bt_ref[...])
            h = jnp.maximum(h, 0.0)

        # --- flatten + first MLP Linear (a "conv" of kernel size L_last) ----
        w_ref, b_ref = p[idx], p[idx + 1]
        idx += 2
        h = conv_matmul(h, w_ref, L_last) + b_ref[...]
        valid = (row_t < 1.0).astype(jnp.float32)   # one valid row per sample

        # --- remaining MLP layers: [BatchNorm1d] -> ReLU -> Linear ----------
        for _ in range(n_mlp_linear - 1):
            if normalization:
                g_ref, bt_ref = p[idx], p[idx + 1]
                idx += 2
                h = batchnorm(h, valid, batch, g_ref[...], bt_ref[...])
            h = jnp.maximum(h, 0.0)
            w_ref, b_ref = p[idx], p[idx + 1]
            idx += 2
            h = jnp.dot(h.astype(jnp.bfloat16), w_ref[...],
                        preferred_element_type=jnp.float32) + b_ref[...]

        o_ref[...] = h.astype(o_ref.dtype)

    return kernel


# ----------------------------------------------------------------------------
# Wrapper
# ----------------------------------------------------------------------------
def cnn_forward(signatures, kernel_params, *, batch, length, in_channels,
                hidden_channels, kernel_sizes, mlp_hidden_channels,
                out_channels, normalization):
    assert len(signatures) == 1                     # CNN.forward contract
    sig_group = signatures[0]
    assert len(sig_group) == length

    C_pad = _pad128(max([in_channels] + list(hidden_channels)))
    out_pad = _pad128(out_channels)
    R = batch * length

    # Host-side layout glue (mirrors torch.stack(..., dim=2)): row r = b*L + t.
    x = jnp.stack(sig_group, axis=1).reshape(R, in_channels)
    x0 = jnp.zeros((R, C_pad), jnp.float32).at[:, :in_channels].set(x)
    row_t = jnp.tile(jnp.arange(length, dtype=jnp.float32), batch).reshape(R, 1)

    kernel = make_cnn_kernel(
        batch=batch, length=length, conv_kernel_sizes=tuple(kernel_sizes),
        n_mlp_linear=len(mlp_hidden_channels) + 1, normalization=normalization)

    inputs = (x0, row_t) + tuple(kernel_params)

    def full_spec(a):
        nd = a.ndim
        return pl.BlockSpec(a.shape, lambda i, _n=nd: (0,) * _n)

    # VMEM budget from the actual operand footprint (x2 for pipeline buffers),
    # capped well under v7x's 64 MiB physical VMEM.
    total_bytes = sum(int(a.size) * a.dtype.itemsize for a in inputs)
    total_bytes += R * out_pad * 4
    vmem_limit = int(min(32 * 1024 * 1024, 2 * total_bytes + 4 * 1024 * 1024))

    out_full = pl.pallas_call(
        kernel,
        out_shape=jax.ShapeDtypeStruct((R, out_pad), jnp.float32),
        grid=(1,),
        in_specs=[full_spec(a) for a in inputs],
        out_specs=pl.BlockSpec((R, out_pad), lambda i: (0, 0)),
        compiler_params=pltpu.CompilerParams(
            dimension_semantics=("arbitrary",),
            vmem_limit_bytes=vmem_limit,
        ),
    )(*inputs)

    # Valid MLP rows sit at t == 0; strip lane padding.
    return out_full[::length, :out_channels]


# ----------------------------------------------------------------------------
# Deterministic parameters (PyTorch default init shapes/ranges)
# ----------------------------------------------------------------------------
def init_cnn_params(key, *, length, in_channels, out_channels, hidden_channels,
                    kernel_sizes, mlp_hidden_channels, normalization):
    """Returns (kernel_params, torch_params).

    kernel_params: flat list in exact kernel ref order, feature dims zero
      padded to multiples of 128; matmul weights in bf16, the rest in f32.
    torch_params: PyTorch-layout f32 params for the pure-JAX reference.
    """
    f32 = jnp.float32
    L_last = length - sum(kernel_sizes) + len(kernel_sizes)
    C_pad = _pad128(max([in_channels] + list(hidden_channels)))

    kparams = []
    tconv = []
    prev_c = in_channels
    for c_out, K in zip(hidden_channels, kernel_sizes):
        key, kw, kb = jax.random.split(key, 3)
        bound = 1.0 / math.sqrt(prev_c * K)
        w = jax.random.uniform(kw, (c_out, prev_c, K), f32, -bound, bound)
        b = jax.random.uniform(kb, (c_out,), f32, -bound, bound)
        g = jnp.ones((c_out,), f32)
        bt = jnp.zeros((c_out,), f32)
        tconv.append((w, b, g, bt))
        wk = jnp.zeros((K, C_pad, C_pad), f32).at[:, :prev_c, :c_out].set(
            jnp.transpose(w, (2, 1, 0)))
        kparams += [
            wk.astype(jnp.bfloat16),
            jnp.zeros((1, C_pad), f32).at[0, :c_out].set(b),
            jnp.zeros((1, C_pad), f32).at[0, :c_out].set(g),
            jnp.zeros((1, C_pad), f32).at[0, :c_out].set(bt),
        ]
        prev_c = c_out

    mlp_in = L_last * hidden_channels[-1]
    layer_sizes = [mlp_in] + list(mlp_hidden_channels) + [out_channels]
    tmlp_lin, tmlp_bn = [], []
    for i in range(len(layer_sizes) - 1):
        fin, fout = layer_sizes[i], layer_sizes[i + 1]
        key, kw, kb = jax.random.split(key, 3)
        bound = 1.0 / math.sqrt(fin)
        w = jax.random.uniform(kw, (fout, fin), f32, -bound, bound)
        b = jax.random.uniform(kb, (fout,), f32, -bound, bound)
        tmlp_lin.append((w, b))
        fout_pad = _pad128(fout)
        if i == 0:
            # Fused flatten: W1[l, c, h] = torch_W1[h, c * L_last + l].
            c_last = hidden_channels[-1]
            w_r = w.reshape(fout, c_last, L_last)                # [h, c, l]
            wk = jnp.zeros((L_last, C_pad, fout_pad), f32).at[
                :, :c_last, :fout].set(jnp.transpose(w_r, (2, 1, 0)))
        else:
            fin_pad = _pad128(fin)
            if normalization:
                g = jnp.ones((fin,), f32)
                bt = jnp.zeros((fin,), f32)
                tmlp_bn.append((g, bt))
                kparams += [
                    jnp.zeros((1, fin_pad), f32).at[0, :fin].set(g),
                    jnp.zeros((1, fin_pad), f32).at[0, :fin].set(bt),
                ]
            wk = jnp.zeros((fin_pad, fout_pad), f32).at[:fin, :fout].set(w.T)
        kparams += [
            wk.astype(jnp.bfloat16),
            jnp.zeros((1, fout_pad), f32).at[0, :fout].set(b),
        ]

    return kparams, {"conv": tconv, "mlp_linear": tmlp_lin, "mlp_bn": tmlp_bn}


# ----------------------------------------------------------------------------
# Pure-JAX reference (mirrors the PyTorch CNN.forward; matmul inputs cast to
# `mxu_dtype` to reflect the kernel's documented bf16-MXU / f32-accumulate
# precision.  Pass mxu_dtype=jnp.float32 for a pure-f32 reference.)
# ----------------------------------------------------------------------------
def cnn_reference(signatures, tparams, *, kernel_sizes, normalization,
                  eps=1e-5, mxu_dtype=jnp.bfloat16):
    assert len(signatures) == 1
    x = jnp.stack(signatures[0], axis=2)            # (B, C_in, L)
    for (w, b, g, bt), K in zip(tparams["conv"], kernel_sizes):
        Lo = x.shape[2] - K + 1
        out = jnp.zeros((x.shape[0], w.shape[0], Lo), jnp.float32)
        for k in range(K):
            out = out + jnp.einsum(
                "bcl,oc->bol",
                x[:, :, k:k + Lo].astype(mxu_dtype),
                w[:, :, k].astype(mxu_dtype),
                preferred_element_type=jnp.float32)
        x = out + b[None, :, None]
        mu = jnp.mean(x, axis=(0, 2), keepdims=True)
        var = jnp.mean((x - mu) ** 2, axis=(0, 2), keepdims=True)
        x = g[None, :, None] * (x - mu) / jnp.sqrt(var + eps) + bt[None, :, None]
        x = jnp.maximum(x, 0.0)

    h = x.reshape(x.shape[0], -1)                   # torch .view(B, C*L) order

    def mm(a, bmat):
        return jnp.dot(a.astype(mxu_dtype), bmat.astype(mxu_dtype),
                       preferred_element_type=jnp.float32)

    w, b = tparams["mlp_linear"][0]
    h = mm(h, w.T) + b
    for i in range(1, len(tparams["mlp_linear"])):
        if normalization:
            g, bt = tparams["mlp_bn"][i - 1]
            mu = jnp.mean(h, axis=0, keepdims=True)
            var = jnp.mean((h - mu) ** 2, axis=0, keepdims=True)
            h = g * (h - mu) / jnp.sqrt(var + eps) + bt
        h = jnp.maximum(h, 0.0)
        w, b = tparams["mlp_linear"][i]
        h = mm(h, w.T) + b
    return h


# ----------------------------------------------------------------------------
# Main
# ----------------------------------------------------------------------------
if __name__ == "__main__":
    key = jax.random.PRNGKey(0)

    # Small shapes consistent with CNN.forward.  Consecutive conv channel
    # counts must be equal for the reference module to be runnable (it builds
    # BatchNorm1d(prev_channels) but applies it to the conv output).
    B = 8
    length = 16
    in_channels = 4
    hidden_channels = (4, 4)
    kernel_sizes = (3, 3)
    mlp_hidden_channels = (32, 32)
    out_channels = 8
    normalization = True

    # signatures: a single group (CNN.forward asserts this) of `length`
    # tensors, each (B, in_channels); torch.stack(..., dim=2) -> (B, C, L).
    key, *skeys = jax.random.split(key, length + 1)
    sig_group = [jax.random.normal(k, (B, in_channels), jnp.float32)
                 for k in skeys]
    signatures = [sig_group]

    key, pkey = jax.random.split(key)
    kparams, tparams = init_cnn_params(
        pkey, length=length, in_channels=in_channels,
        out_channels=out_channels, hidden_channels=hidden_channels,
        kernel_sizes=kernel_sizes, mlp_hidden_channels=mlp_hidden_channels,
        normalization=normalization)

    out = cnn_forward(
        signatures, kparams, batch=B, length=length, in_channels=in_channels,
        hidden_channels=hidden_channels, kernel_sizes=kernel_sizes,
        mlp_hidden_channels=mlp_hidden_channels, out_channels=out_channels,
        normalization=normalization)
    out = jax.block_until_ready(out)

    ref = cnn_reference(signatures, tparams, kernel_sizes=kernel_sizes,
                        normalization=normalization)

    assert out.shape == (B, out_channels)
    max_diff = float(jnp.max(jnp.abs(out - ref)))
    assert jnp.allclose(out, ref, atol=1e-2, rtol=1e-2), (
        f"max abs diff: {max_diff}")

    print("KERNEL_OK")
</pallas_src>

<mosaic_0001>
module attributes {stable_mosaic.version = 11 : i64} {
  func.func @kernel(%arg0: i32, %arg1: memref<128x128xf32, #tpu.memory_space<vmem>>, %arg2: memref<128x1xf32, #tpu.memory_space<vmem>>, %arg3: memref<3x128x128xbf16, #tpu.memory_space<vmem>>, %arg4: memref<1x128xf32, #tpu.memory_space<vmem>>, %arg5: memref<1x128xf32, #tpu.memory_space<vmem>>, %arg6: memref<1x128xf32, #tpu.memory_space<vmem>>, %arg7: memref<3x128x128xbf16, #tpu.memory_space<vmem>>, %arg8: memref<1x128xf32, #tpu.memory_space<vmem>>, %arg9: memref<1x128xf32, #tpu.memory_space<vmem>>, %arg10: memref<1x128xf32, #tpu.memory_space<vmem>>, %arg11: memref<12x128x128xbf16, #tpu.memory_space<vmem>>, %arg12: memref<1x128xf32, #tpu.memory_space<vmem>>, %arg13: memref<1x128xf32, #tpu.memory_space<vmem>>, %arg14: memref<1x128xf32, #tpu.memory_space<vmem>>, %arg15: memref<128x128xbf16, #tpu.memory_space<vmem>>, %arg16: memref<1x128xf32, #tpu.memory_space<vmem>>, %arg17: memref<1x128xf32, #tpu.memory_space<vmem>>, %arg18: memref<1x128xf32, #tpu.memory_space<vmem>>, %arg19: memref<128x128xbf16, #tpu.memory_space<vmem>>, %arg20: memref<1x128xf32, #tpu.memory_space<vmem>>, %arg21: memref<128x128xf32, #tpu.memory_space<vmem>>) attributes {dimension_semantics = [#tpu.dimension_semantics<arbitrary>], iteration_bounds = array<i64: 1>, scalar_prefetch = 0 : i64, scratch_operands = 0 : i64, tpu.core_type = #tpu.core_type<tc>, window_params = [{pipeline_mode = #tpu.pipeline_mode<synchronous>, transform_indices = @transform_0, window_bounds = array<i64: 128, 128>}, {pipeline_mode = #tpu.pipeline_mode<synchronous>, transform_indices = @transform_1, window_bounds = array<i64: 128, 1>}, {pipeline_mode = #tpu.pipeline_mode<synchronous>, transform_indices = @transform_2, window_bounds = array<i64: 3, 128, 128>}, {pipeline_mode = #tpu.pipeline_mode<synchronous>, transform_indices = @transform_3, window_bounds = array<i64: 1, 128>}, {pipeline_mode = #tpu.pipeline_mode<synchronous>, transform_indices = @transform_4, window_bounds = array<i64: 1, 128>}, {pipeline_mode = #tpu.pipeline_mode<synchronous>, transform_indices = @transform_5, window_bounds = array<i64: 1, 128>}, {pipeline_mode = #tpu.pipeline_mode<synchronous>, transform_indices = @transform_6, window_bounds = array<i64: 3, 128, 128>}, {pipeline_mode = #tpu.pipeline_mode<synchronous>, transform_indices = @transform_7, window_bounds = array<i64: 1, 128>}, {pipeline_mode = #tpu.pipeline_mode<synchronous>, transform_indices = @transform_8, window_bounds = array<i64: 1, 128>}, {pipeline_mode = #tpu.pipeline_mode<synchronous>, transform_indices = @transform_9, window_bounds = array<i64: 1, 128>}, {pipeline_mode = #tpu.pipeline_mode<synchronous>, transform_indices = @transform_10, window_bounds = array<i64: 12, 128, 128>}, {pipeline_mode = #tpu.pipeline_mode<synchronous>, transform_indices = @transform_11, window_bounds = array<i64: 1, 128>}, {pipeline_mode = #tpu.pipeline_mode<synchronous>, transform_indices = @transform_12, window_bounds = array<i64: 1, 128>}, {pipeline_mode = #tpu.pipeline_mode<synchronous>, transform_indices = @transform_13, window_bounds = array<i64: 1, 128>}, {pipeline_mode = #tpu.pipeline_mode<synchronous>, transform_indices = @transform_14, window_bounds = array<i64: 128, 128>}, {pipeline_mode = #tpu.pipeline_mode<synchronous>, transform_indices = @transform_15, window_bounds = array<i64: 1, 128>}, {pipeline_mode = #tpu.pipeline_mode<synchronous>, transform_indices = @transform_16, window_bounds = array<i64: 1, 128>}, {pipeline_mode = #tpu.pipeline_mode<synchronous>, transform_indices = @transform_17, window_bounds = array<i64: 1, 128>}, {pipeline_mode = #tpu.pipeline_mode<synchronous>, transform_indices = @transform_18, window_bounds = array<i64: 128, 128>}, {pipeline_mode = #tpu.pipeline_mode<synchronous>, transform_indices = @transform_19, window_bounds = array<i64: 1, 128>}, {pipeline_mode = #tpu.pipeline_mode<synchronous>, transform_indices = @transform_20, window_bounds = array<i64: 128, 128>}]} {
    %c0 = arith.constant 0 : index
    %c0_0 = arith.constant 0 : index
    %0 = vector.load %arg2[%c0, %c0_0] : memref<128x1xf32, #tpu.memory_space<vmem>>, vector<128x1xf32>
    %c0_1 = arith.constant 0 : index
    %c0_2 = arith.constant 0 : index
    %1 = vector.load %arg1[%c0_1, %c0_2] : memref<128x128xf32, #tpu.memory_space<vmem>>, vector<128x128xf32>
    %cst = arith.constant 0.000000e+00 : f32
    %2 = vector.broadcast %cst : f32 to vector<128x128xf32>
    %3 = arith.truncf %1 : vector<128x128xf32> to vector<128x128xbf16>
    %c0_3 = arith.constant 0 : index
    %c0_4 = arith.constant 0 : index
    %c0_5 = arith.constant 0 : index
    %4 = vector.load %arg3[%c0_3, %c0_4, %c0_5] : memref<3x128x128xbf16, #tpu.memory_space<vmem>>, vector<1x128x128xbf16>
    %5 = vector.shape_cast %4 : vector<1x128x128xbf16> to vector<128x128xbf16>
    %cst_6 = arith.constant dense<0.000000e+00> : vector<128x128xf32>
    %6 = tpu.matmul %3, %5, %cst_6 {dimension_numbers = #tpu.dot_dimension_numbers<[1], [0], [0], [1], [0, 0, 1, 1], [], []>} : vector<128x128xbf16>, vector<128x128xbf16>, vector<128x128xf32> -> vector<128x128xf32>
    %7 = arith.addf %2, %6 : vector<128x128xf32>
    %cst_7 = arith.constant 0.000000e+00 : f32
    %8 = vector.broadcast %cst_7 : f32 to vector<1x128xf32>
    %9 = vector.extract_strided_slice %1 {offsets = [1, 0], sizes = [127, 128], strides = [1, 1]} : vector<128x128xf32> to vector<127x128xf32>
    %10 = tpu.concatenate %9, %8 in 0 : vector<127x128xf32>, vector<1x128xf32> -> vector<128x128xf32>
    %11 = arith.truncf %10 : vector<128x128xf32> to vector<128x128xbf16>
    %c1 = arith.constant 1 : index
    %c0_8 = arith.constant 0 : index
    %c0_9 = arith.constant 0 : index
    %12 = vector.load %arg3[%c1, %c0_8, %c0_9] : memref<3x128x128xbf16, #tpu.memory_space<vmem>>, vector<1x128x128xbf16>
    %13 = vector.shape_cast %12 : vector<1x128x128xbf16> to vector<128x128xbf16>
    %cst_10 = arith.constant dense<0.000000e+00> : vector<128x128xf32>
    %14 = tpu.matmul %11, %13, %cst_10 {dimension_numbers = #tpu.dot_dimension_numbers<[1], [0], [0], [1], [0, 0, 1, 1], [], []>} : vector<128x128xbf16>, vector<128x128xbf16>, vector<128x128xf32> -> vector<128x128xf32>
    %15 = arith.addf %7, %14 : vector<128x128xf32>
    %cst_11 = arith.constant 0.000000e+00 : f32
    %16 = vector.broadcast %cst_11 : f32 to vector<2x128xf32>
    %17 = vector.extract_strided_slice %1 {offsets = [2, 0], sizes = [126, 128], strides = [1, 1]} : vector<128x128xf32> to vector<126x128xf32>
    %18 = tpu.concatenate %17, %16 in 0 : vector<126x128xf32>, vector<2x128xf32> -> vector<128x128xf32>
    %19 = arith.truncf %18 : vector<128x128xf32> to vector<128x128xbf16>
    %c2 = arith.constant 2 : index
    %c0_12 = arith.constant 0 : index
    %c0_13 = arith.constant 0 : index
    %20 = vector.load %arg3[%c2, %c0_12, %c0_13] : memref<3x128x128xbf16, #tpu.memory_space<vmem>>, vector<1x128x128xbf16>
    %21 = vector.shape_cast %20 : vector<1x128x128xbf16> to vector<128x128xbf16>
    %cst_14 = arith.constant dense<0.000000e+00> : vector<128x128xf32>
    %22 = tpu.matmul %19, %21, %cst_14 {dimension_numbers = #tpu.dot_dimension_numbers<[1], [0], [0], [1], [0, 0, 1, 1], [], []>} : vector<128x128xbf16>, vector<128x128xbf16>, vector<128x128xf32> -> vector<128x128xf32>
    %23 = arith.addf %15, %22 : vector<128x128xf32>
    %c0_15 = arith.constant 0 : index
    %c0_16 = arith.constant 0 : index
    %24 = vector.load %arg4[%c0_15, %c0_16] : memref<1x128xf32, #tpu.memory_space<vmem>>, vector<1x128xf32>
    %25 = vector.broadcast %24 : vector<1x128xf32> to vector<128x128xf32>
    %26 = arith.addf %23, %25 : vector<128x128xf32>
    %cst_17 = arith.constant 1.400000e+01 : f32
    %27 = vector.broadcast %cst_17 : f32 to vector<128x1xf32>
    %28 = arith.cmpf olt, %0, %27 : vector<128x1xf32>
    %29 = arith.extui %28 : vector<128x1xi1> to vector<128x1xi32>
    %30 = arith.sitofp %29 : vector<128x1xi32> to vector<128x1xf32>
    %c0_18 = arith.constant 0 : index
    %c0_19 = arith.constant 0 : index
    %31 = vector.load %arg5[%c0_18, %c0_19] : memref<1x128xf32, #tpu.memory_space<vmem>>, vector<1x128xf32>
    %c0_20 = arith.constant 0 : index
    %c0_21 = arith.constant 0 : index
    %32 = vector.load %arg6[%c0_20, %c0_21] : memref<1x128xf32, #tpu.memory_space<vmem>>, vector<1x128xf32>
    %33 = vector.broadcast %30 : vector<128x1xf32> to vector<128x128xf32>
    %34 = arith.mulf %26, %33 : vector<128x128xf32>
    %cst_22 = arith.constant dense<0.000000e+00> : vector<128xf32>
    %35 = vector.multi_reduction <add>, %34, %cst_22 [0] : vector<128x128xf32> to vector<128xf32>
    %36 = vector.shape_cast %35 : vector<128xf32> to vector<1x128xf32>
    %cst_23 = arith.constant 0.00892857183 : f32
    %37 = vector.broadcast %cst_23 : f32 to vector<1x128xf32>
    %38 = arith.mulf %36, %37 : vector<1x128xf32>
    %39 = arith.mulf %34, %26 : vector<128x128xf32>
    %cst_24 = arith.constant dense<0.000000e+00> : vector<128xf32>
    %40 = vector.multi_reduction <add>, %39, %cst_24 [0] : vector<128x128xf32> to vector<128xf32>
    %41 = vector.shape_cast %40 : vector<128xf32> to vector<1x128xf32>
    %cst_25 = arith.constant 0.00892857183 : f32
    %42 = vector.broadcast %cst_25 : f32 to vector<1x128xf32>
    %43 = arith.mulf %41, %42 : vector<1x128xf32>
    %44 = arith.mulf %38, %38 : vector<1x128xf32>
    %45 = arith.subf %43, %44 : vector<1x128xf32>
    %46 = vector.broadcast %38 : vector<1x128xf32> to vector<128x128xf32>
    %47 = arith.subf %26, %46 : vector<128x128xf32>
    %48 = vector.broadcast %31 : vector<1x128xf32> to vector<128x128xf32>
    %49 = arith.mulf %48, %47 : vector<128x128xf32>
    %cst_26 = arith.constant 9.99999974E-6 : f32
    %50 = vector.broadcast %cst_26 : f32 to vector<1x128xf32>
    %51 = arith.addf %45, %50 : vector<1x128xf32>
    %52 = math.rsqrt %51 : vector<1x128xf32>
    %53 = vector.broadcast %52 : vector<1x128xf32> to vector<128x128xf32>
    %54 = arith.mulf %49, %53 : vector<128x128xf32>
    %55 = vector.broadcast %32 : vector<1x128xf32> to vector<128x128xf32>
    %56 = arith.addf %54, %55 : vector<128x128xf32>
    %cst_27 = arith.constant 0.000000e+00 : f32
    %57 = vector.broadcast %cst_27 : f32 to vector<128x128xf32>
    %58 = arith.maximumf %56, %57 : vector<128x128xf32>
    %cst_28 = arith.constant 0.000000e+00 : f32
    %59 = vector.broadcast %cst_28 : f32 to vector<128x128xf32>
    %60 = arith.truncf %58 : vector<128x128xf32> to vector<128x128xbf16>
    %c0_29 = arith.constant 0 : index
    %c0_30 = arith.constant 0 : index
    %c0_31 = arith.constant 0 : index
    %61 = vector.load %arg7[%c0_29, %c0_30, %c0_31] : memref<3x128x128xbf16, #tpu.memory_space<vmem>>, vector<1x128x128xbf16>
    %62 = vector.shape_cast %61 : vector<1x128x128xbf16> to vector<128x128xbf16>
    %cst_32 = arith.constant dense<0.000000e+00> : vector<128x128xf32>
    %63 = tpu.matmul %60, %62, %cst_32 {dimension_numbers = #tpu.dot_dimension_numbers<[1], [0], [0], [1], [0, 0, 1, 1], [], []>} : vector<128x128xbf16>, vector<128x128xbf16>, vector<128x128xf32> -> vector<128x128xf32>
    %64 = arith.addf %59, %63 : vector<128x128xf32>
    %cst_33 = arith.constant 0.000000e+00 : f32
    %65 = vector.broadcast %cst_33 : f32 to vector<1x128xf32>
    %66 = vector.extract_strided_slice %58 {offsets = [1, 0], sizes = [127, 128], strides = [1, 1]} : vector<128x128xf32> to vector<127x128xf32>
    %67 = tpu.concatenate %66, %65 in 0 : vector<127x128xf32>, vector<1x128xf32> -> vector<128x128xf32>
    %68 = arith.truncf %67 : vector<128x128xf32> to vector<128x128xbf16>
    %c1_34 = arith.constant 1 : index
    %c0_35 = arith.constant 0 : index
    %c0_36 = arith.constant 0 : index
    %69 = vector.load %arg7[%c1_34, %c0_35, %c0_36] : memref<3x128x128xbf16, #tpu.memory_space<vmem>>, vector<1x128x128xbf16>
    %70 = vector.shape_cast %69 : vector<1x128x128xbf16> to vector<128x128xbf16>
    %cst_37 = arith.constant dense<0.000000e+00> : vector<128x128xf32>
    %71 = tpu.matmul %68, %70, %cst_37 {dimension_numbers = #tpu.dot_dimension_numbers<[1], [0], [0], [1], [0, 0, 1, 1], [], []>} : vector<128x128xbf16>, vector<128x128xbf16>, vector<128x128xf32> -> vector<128x128xf32>
    %72 = arith.addf %64, %71 : vector<128x128xf32>
    %cst_38 = arith.constant 0.000000e+00 : f32
    %73 = vector.broadcast %cst_38 : f32 to vector<2x128xf32>
    %74 = vector.extract_strided_slice %58 {offsets = [2, 0], sizes = [126, 128], strides = [1, 1]} : vector<128x128xf32> to vector<126x128xf32>
    %75 = tpu.concatenate %74, %73 in 0 : vector<126x128xf32>, vector<2x128xf32> -> vector<128x128xf32>
    %76 = arith.truncf %75 : vector<128x128xf32> to vector<128x128xbf16>
    %c2_39 = arith.constant 2 : index
    %c0_40 = arith.constant 0 : index
    %c0_41 = arith.constant 0 : index
    %77 = vector.load %arg7[%c2_39, %c0_40, %c0_41] : memref<3x128x128xbf16, #tpu.memory_space<vmem>>, vector<1x128x128xbf16>
    %78 = vector.shape_cast %77 : vector<1x128x128xbf16> to vector<128x128xbf16>
    %cst_42 = arith.constant dense<0.000000e+00> : vector<128x128xf32>
    %79 = tpu.matmul %76, %78, %cst_42 {dimension_numbers = #tpu.dot_dimension_numbers<[1], [0], [0], [1], [0, 0, 1, 1], [], []>} : vector<128x128xbf16>, vector<128x128xbf16>, vector<128x128xf32> -> vector<128x128xf32>
    %80 = arith.addf %72, %79 : vector<128x128xf32>
    %c0_43 = arith.constant 0 : index
    %c0_44 = arith.constant 0 : index
    %81 = vector.load %arg8[%c0_43, %c0_44] : memref<1x128xf32, #tpu.memory_space<vmem>>, vector<1x128xf32>
    %82 = vector.broadcast %81 : vector<1x128xf32> to vector<128x128xf32>
    %83 = arith.addf %80, %82 : vector<128x128xf32>
    %cst_45 = arith.constant 1.200000e+01 : f32
    %84 = vector.broadcast %cst_45 : f32 to vector<128x1xf32>
    %85 = arith.cmpf olt, %0, %84 : vector<128x1xf32>
    %86 = arith.extui %85 : vector<128x1xi1> to vector<128x1xi32>
    %87 = arith.sitofp %86 : vector<128x1xi32> to vector<128x1xf32>
    %c0_46 = arith.constant 0 : index
    %c0_47 = arith.constant 0 : index
    %88 = vector.load %arg9[%c0_46, %c0_47] : memref<1x128xf32, #tpu.memory_space<vmem>>, vector<1x128xf32>
    %c0_48 = arith.constant 0 : index
    %c0_49 = arith.constant 0 : index
    %89 = vector.load %arg10[%c0_48, %c0_49] : memref<1x128xf32, #tpu.memory_space<vmem>>, vector<1x128xf32>
    %90 = vector.broadcast %87 : vector<128x1xf32> to vector<128x128xf32>
    %91 = arith.mulf %83, %90 : vector<128x128xf32>
    %cst_50 = arith.constant dense<0.000000e+00> : vector<128xf32>
    %92 = vector.multi_reduction <add>, %91, %cst_50 [0] : vector<128x128xf32> to vector<128xf32>
    %93 = vector.shape_cast %92 : vector<128xf32> to vector<1x128xf32>
    %cst_51 = arith.constant 0.010416667 : f32
    %94 = vector.broadcast %cst_51 : f32 to vector<1x128xf32>
    %95 = arith.mulf %93, %94 : vector<1x128xf32>
    %96 = arith.mulf %91, %83 : vector<128x128xf32>
    %cst_52 = arith.constant dense<0.000000e+00> : vector<128xf32>
    %97 = vector.multi_reduction <add>, %96, %cst_52 [0] : vector<128x128xf32> to vector<128xf32>
    %98 = vector.shape_cast %97 : vector<128xf32> to vector<1x128xf32>
    %cst_53 = arith.constant 0.010416667 : f32
    %99 = vector.broadcast %cst_53 : f32 to vector<1x128xf32>
    %100 = arith.mulf %98, %99 : vector<1x128xf32>
    %101 = arith.mulf %95, %95 : vector<1x128xf32>
    %102 = arith.subf %100, %101 : vector<1x128xf32>
    %103 = vector.broadcast %95 : vector<1x128xf32> to vector<128x128xf32>
    %104 = arith.subf %83, %103 : vector<128x128xf32>
    %105 = vector.broadcast %88 : vector<1x128xf32> to vector<128x128xf32>
    %106 = arith.mulf %105, %104 : vector<128x128xf32>
    %cst_54 = arith.constant 9.99999974E-6 : f32
    %107 = vector.broadcast %cst_54 : f32 to vector<1x128xf32>
    %108 = arith.addf %102, %107 : vector<1x128xf32>
    %109 = math.rsqrt %108 : vector<1x128xf32>
    %110 = vector.broadcast %109 : vector<1x128xf32> to vector<128x128xf32>
    %111 = arith.mulf %106, %110 : vector<128x128xf32>
    %112 = vector.broadcast %89 : vector<1x128xf32> to vector<128x128xf32>
    %113 = arith.addf %111, %112 : vector<128x128xf32>
    %cst_55 = arith.constant 0.000000e+00 : f32
    %114 = vector.broadcast %cst_55 : f32 to vector<128x128xf32>
    %115 = arith.maximumf %113, %114 : vector<128x128xf32>
    %cst_56 = arith.constant 0.000000e+00 : f32
    %116 = vector.broadcast %cst_56 : f32 to vector<128x128xf32>
    %117 = arith.truncf %115 : vector<128x128xf32> to vector<128x128xbf16>
    %c0_57 = arith.constant 0 : index
    %c0_58 = arith.constant 0 : index
    %c0_59 = arith.constant 0 : index
    %118 = vector.load %arg11[%c0_57, %c0_58, %c0_59] : memref<12x128x128xbf16, #tpu.memory_space<vmem>>, vector<1x128x128xbf16>
    %119 = vector.shape_cast %118 : vector<1x128x128xbf16> to vector<128x128xbf16>
    %cst_60 = arith.constant dense<0.000000e+00> : vector<128x128xf32>
    %120 = tpu.matmul %117, %119, %cst_60 {dimension_numbers = #tpu.dot_dimension_numbers<[1], [0], [0], [1], [0, 0, 1, 1], [], []>} : vector<128x128xbf16>, vector<128x128xbf16>, vector<128x128xf32> -> vector<128x128xf32>
    %121 = arith.addf %116, %120 : vector<128x128xf32>
    %cst_61 = arith.constant 0.000000e+00 : f32
    %122 = vector.broadcast %cst_61 : f32 to vector<1x128xf32>
    %123 = vector.extract_strided_slice %115 {offsets = [1, 0], sizes = [127, 128], strides = [1, 1]} : vector<128x128xf32> to vector<127x128xf32>
    %124 = tpu.concatenate %123, %122 in 0 : vector<127x128xf32>, vector<1x128xf32> -> vector<128x128xf32>
    %125 = arith.truncf %124 : vector<128x128xf32> to vector<128x128xbf16>
    %c1_62 = arith.constant 1 : index
    %c0_63 = arith.constant 0 : index
    %c0_64 = arith.constant 0 : index
    %126 = vector.load %arg11[%c1_62, %c0_63, %c0_64] : memref<12x128x128xbf16, #tpu.memory_space<vmem>>, vector<1x128x128xbf16>
    %127 = vector.shape_cast %126 : vector<1x128x128xbf16> to vector<128x128xbf16>
    %cst_65 = arith.constant dense<0.000000e+00> : vector<128x128xf32>
    %128 = tpu.matmul %125, %127, %cst_65 {dimension_numbers = #tpu.dot_dimension_numbers<[1], [0], [0], [1], [0, 0, 1, 1], [], []>} : vector<128x128xbf16>, vector<128x128xbf16>, vector<128x128xf32> -> vector<128x128xf32>
    %129 = arith.addf %121, %128 : vector<128x128xf32>
    %cst_66 = arith.constant 0.000000e+00 : f32
    %130 = vector.broadcast %cst_66 : f32 to vector<2x128xf32>
    %131 = vector.extract_strided_slice %115 {offsets = [2, 0], sizes = [126, 128], strides = [1, 1]} : vector<128x128xf32> to vector<126x128xf32>
    %132 = tpu.concatenate %131, %130 in 0 : vector<126x128xf32>, vector<2x128xf32> -> vector<128x128xf32>
    %133 = arith.truncf %132 : vector<128x128xf32> to vector<128x128xbf16>
    %c2_67 = arith.constant 2 : index
    %c0_68 = arith.constant 0 : index
    %c0_69 = arith.constant 0 : index
    %134 = vector.load %arg11[%c2_67, %c0_68, %c0_69] : memref<12x128x128xbf16, #tpu.memory_space<vmem>>, vector<1x128x128xbf16>
    %135 = vector.shape_cast %134 : vector<1x128x128xbf16> to vector<128x128xbf16>
    %cst_70 = arith.constant dense<0.000000e+00> : vector<128x128xf32>
    %136 = tpu.matmul %133, %135, %cst_70 {dimension_numbers = #tpu.dot_dimension_numbers<[1], [0], [0], [1], [0, 0, 1, 1], [], []>} : vector<128x128xbf16>, vector<128x128xbf16>, vector<128x128xf32> -> vector<128x128xf32>
    %137 = arith.addf %129, %136 : vector<128x128xf32>
    %cst_71 = arith.constant 0.000000e+00 : f32
    %138 = vector.broadcast %cst_71 : f32 to vector<3x128xf32>
    %139 = vector.extract_strided_slice %115 {offsets = [3, 0], sizes = [125, 128], strides = [1, 1]} : vector<128x128xf32> to vector<125x128xf32>
    %140 = tpu.concatenate %139, %138 in 0 : vector<125x128xf32>, vector<3x128xf32> -> vector<128x128xf32>
    %141 = arith.truncf %140 : vector<128x128xf32> to vector<128x128xbf16>
    %c3 = arith.constant 3 : index
    %c0_72 = arith.constant 0 : index
    %c0_73 = arith.constant 0 : index
    %142 = vector.load %arg11[%c3, %c0_72, %c0_73] : memref<12x128x128xbf16, #tpu.memory_space<vmem>>, vector<1x128x128xbf16>
    %143 = vector.shape_cast %142 : vector<1x128x128xbf16> to vector<128x128xbf16>
    %cst_74 = arith.constant dense<0.000000e+00> : vector<128x128xf32>
    %144 = tpu.matmul %141, %143, %cst_74 {dimension_numbers = #tpu.dot_dimension_numbers<[1], [0], [0], [1], [0, 0, 1, 1], [], []>} : vector<128x128xbf16>, vector<128x128xbf16>, vector<128x128xf32> -> vector<128x128xf32>
    %145 = arith.addf %137, %144 : vector<128x128xf32>
    %cst_75 = arith.constant 0.000000e+00 : f32
    %146 = vector.broadcast %cst_75 : f32 to vector<4x128xf32>
    %147 = vector.extract_strided_slice %115 {offsets = [4, 0], sizes = [124, 128], strides = [1, 1]} : vector<128x128xf32> to vector<124x128xf32>
    %148 = tpu.concatenate %147, %146 in 0 : vector<124x128xf32>, vector<4x128xf32> -> vector<128x128xf32>
    %149 = arith.truncf %148 : vector<128x128xf32> to vector<128x128xbf16>
    %c4 = arith.constant 4 : index
    %c0_76 = arith.constant 0 : index
    %c0_77 = arith.constant 0 : index
    %150 = vector.load %arg11[%c4, %c0_76, %c0_77] : memref<12x128x128xbf16, #tpu.memory_space<vmem>>, vector<1x128x128xbf16>
    %151 = vector.shape_cast %150 : vector<1x128x128xbf16> to vector<128x128xbf16>
    %cst_78 = arith.constant dense<0.000000e+00> : vector<128x128xf32>
    %152 = tpu.matmul %149, %151, %cst_78 {dimension_numbers = #tpu.dot_dimension_numbers<[1], [0], [0], [1], [0, 0, 1, 1], [], []>} : vector<128x128xbf16>, vector<128x128xbf16>, vector<128x128xf32> -> vector<128x128xf32>
    %153 = arith.addf %145, %152 : vector<128x128xf32>
    %cst_79 = arith.constant 0.000000e+00 : f32
    %154 = vector.broadcast %cst_79 : f32 to vector<5x128xf32>
    %155 = vector.extract_strided_slice %115 {offsets = [5, 0], sizes = [123, 128], strides = [1, 1]} : vector<128x128xf32> to vector<123x128xf32>
    %156 = tpu.concatenate %155, %154 in 0 : vector<123x128xf32>, vector<5x128xf32> -> vector<128x128xf32>
    %157 = arith.truncf %156 : vector<128x128xf32> to vector<128x128xbf16>
    %c5 = arith.constant 5 : index
    %c0_80 = arith.constant 0 : index
    %c0_81 = arith.constant 0 : index
    %158 = vector.load %arg11[%c5, %c0_80, %c0_81] : memref<12x128x128xbf16, #tpu.memory_space<vmem>>, vector<1x128x128xbf16>
    %159 = vector.shape_cast %158 : vector<1x128x128xbf16> to vector<128x128xbf16>
    %cst_82 = arith.constant dense<0.000000e+00> : vector<128x128xf32>
    %160 = tpu.matmul %157, %159, %cst_82 {dimension_numbers = #tpu.dot_dimension_numbers<[1], [0], [0], [1], [0, 0, 1, 1], [], []>} : vector<128x128xbf16>, vector<128x128xbf16>, vector<128x128xf32> -> vector<128x128xf32>
    %161 = arith.addf %153, %160 : vector<128x128xf32>
    %cst_83 = arith.constant 0.000000e+00 : f32
    %162 = vector.broadcast %cst_83 : f32 to vector<6x128xf32>
    %163 = vector.extract_strided_slice %115 {offsets = [6, 0], sizes = [122, 128], strides = [1, 1]} : vector<128x128xf32> to vector<122x128xf32>
    %164 = tpu.concatenate %163, %162 in 0 : vector<122x128xf32>, vector<6x128xf32> -> vector<128x128xf32>
    %165 = arith.truncf %164 : vector<128x128xf32> to vector<128x128xbf16>
    %c6 = arith.constant 6 : index
    %c0_84 = arith.constant 0 : index
    %c0_85 = arith.constant 0 : index
    %166 = vector.load %arg11[%c6, %c0_84, %c0_85] : memref<12x128x128xbf16, #tpu.memory_space<vmem>>, vector<1x128x128xbf16>
    %167 = vector.shape_cast %166 : vector<1x128x128xbf16> to vector<128x128xbf16>
    %cst_86 = arith.constant dense<0.000000e+00> : vector<128x128xf32>
    %168 = tpu.matmul %165, %167, %cst_86 {dimension_numbers = #tpu.dot_dimension_numbers<[1], [0], [0], [1], [0, 0, 1, 1], [], []>} : vector<128x128xbf16>, vector<128x128xbf16>, vector<128x128xf32> -> vector<128x128xf32>
    %169 = arith.addf %161, %168 : vector<128x128xf32>
    %cst_87 = arith.constant 0.000000e+00 : f32
    %170 = vector.broadcast %cst_87 : f32 to vector<7x128xf32>
    %171 = vector.extract_strided_slice %115 {offsets = [7, 0], sizes = [121, 128], strides = [1, 1]} : vector<128x128xf32> to vector<121x128xf32>
    %172 = tpu.concatenate %171, %170 in 0 : vector<121x128xf32>, vector<7x128xf32> -> vector<128x128xf32>
    %173 = arith.truncf %172 : vector<128x128xf32> to vector<128x128xbf16>
    %c7 = arith.constant 7 : index
    %c0_88 = arith.constant 0 : index
    %c0_89 = arith.constant 0 : index
    %174 = vector.load %arg11[%c7, %c0_88, %c0_89] : memref<12x128x128xbf16, #tpu.memory_space<vmem>>, vector<1x128x128xbf16>
    %175 = vector.shape_cast %174 : vector<1x128x128xbf16> to vector<128x128xbf16>
    %cst_90 = arith.constant dense<0.000000e+00> : vector<128x128xf32>
    %176 = tpu.matmul %173, %175, %cst_90 {dimension_numbers = #tpu.dot_dimension_numbers<[1], [0], [0], [1], [0, 0, 1, 1], [], []>} : vector<128x128xbf16>, vector<128x128xbf16>, vector<128x128xf32> -> vector<128x128xf32>
    %177 = arith.addf %169, %176 : vector<128x128xf32>
    %cst_91 = arith.constant 0.000000e+00 : f32
    %178 = vector.broadcast %cst_91 : f32 to vector<8x128xf32>
    %179 = vector.extract_strided_slice %115 {offsets = [8, 0], sizes = [120, 128], strides = [1, 1]} : vector<128x128xf32> to vector<120x128xf32>
    %180 = tpu.concatenate %179, %178 in 0 : vector<120x128xf32>, vector<8x128xf32> -> vector<128x128xf32>
    %181 = arith.truncf %180 : vector<128x128xf32> to vector<128x128xbf16>
    %c8 = arith.constant 8 : index
    %c0_92 = arith.constant 0 : index
    %c0_93 = arith.constant 0 : index
    %182 = vector.load %arg11[%c8, %c0_92, %c0_93] : memref<12x128x128xbf16, #tpu.memory_space<vmem>>, vector<1x128x128xbf16>
    %183 = vector.shape_cast %182 : vector<1x128x128xbf16> to vector<128x128xbf16>
    %cst_94 = arith.constant dense<0.000000e+00> : vector<128x128xf32>
    %184 = tpu.matmul %181, %183, %cst_94 {dimension_numbers = #tpu.dot_dimension_numbers<[1], [0], [0], [1], [0, 0, 1, 1], [], []>} : vector<128x128xbf16>, vector<128x128xbf16>, vector<128x128xf32> -> vector<128x128xf32>
    %185 = arith.addf %177, %184 : vector<128x128xf32>
    %cst_95 = arith.constant 0.000000e+00 : f32
    %186 = vector.broadcast %cst_95 : f32 to vector<9x128xf32>
    %187 = vector.extract_strided_slice %115 {offsets = [9, 0], sizes = [119, 128], strides = [1, 1]} : vector<128x128xf32> to vector<119x128xf32>
    %188 = tpu.concatenate %187, %186 in 0 : vector<119x128xf32>, vector<9x128xf32> -> vector<128x128xf32>
    %189 = arith.truncf %188 : vector<128x128xf32> to vector<128x128xbf16>
    %c9 = arith.constant 9 : index
    %c0_96 = arith.constant 0 : index
    %c0_97 = arith.constant 0 : index
    %190 = vector.load %arg11[%c9, %c0_96, %c0_97] : memref<12x128x128xbf16, #tpu.memory_space<vmem>>, vector<1x128x128xbf16>
    %191 = vector.shape_cast %190 : vector<1x128x128xbf16> to vector<128x128xbf16>
    %cst_98 = arith.constant dense<0.000000e+00> : vector<128x128xf32>
    %192 = tpu.matmul %189, %191, %cst_98 {dimension_numbers = #tpu.dot_dimension_numbers<[1], [0], [0], [1], [0, 0, 1, 1], [], []>} : vector<128x128xbf16>, vector<128x128xbf16>, vector<128x128xf32> -> vector<128x128xf32>
    %193 = arith.addf %185, %192 : vector<128x128xf32>
    %cst_99 = arith.constant 0.000000e+00 : f32
    %194 = vector.broadcast %cst_99 : f32 to vector<10x128xf32>
    %195 = vector.extract_strided_slice %115 {offsets = [10, 0], sizes = [118, 128], strides = [1, 1]} : vector<128x128xf32> to vector<118x128xf32>
    %196 = tpu.concatenate %195, %194 in 0 : vector<118x128xf32>, vector<10x128xf32> -> vector<128x128xf32>
    %197 = arith.truncf %196 : vector<128x128xf32> to vector<128x128xbf16>
    %c10 = arith.constant 10 : index
    %c0_100 = arith.constant 0 : index
    %c0_101 = arith.constant 0 : index
    %198 = vector.load %arg11[%c10, %c0_100, %c0_101] : memref<12x128x128xbf16, #tpu.memory_space<vmem>>, vector<1x128x128xbf16>
    %199 = vector.shape_cast %198 : vector<1x128x128xbf16> to vector<128x128xbf16>
    %cst_102 = arith.constant dense<0.000000e+00> : vector<128x128xf32>
    %200 = tpu.matmul %197, %199, %cst_102 {dimension_numbers = #tpu.dot_dimension_numbers<[1], [0], [0], [1], [0, 0, 1, 1], [], []>} : vector<128x128xbf16>, vector<128x128xbf16>, vector<128x128xf32> -> vector<128x128xf32>
    %201 = arith.addf %193, %200 : vector<128x128xf32>
    %cst_103 = arith.constant 0.000000e+00 : f32
    %202 = vector.broadcast %cst_103 : f32 to vector<11x128xf32>
    %203 = vector.extract_strided_slice %115 {offsets = [11, 0], sizes = [117, 128], strides = [1, 1]} : vector<128x128xf32> to vector<117x128xf32>
    %204 = tpu.concatenate %203, %202 in 0 : vector<117x128xf32>, vector<11x128xf32> -> vector<128x128xf32>
    %205 = arith.truncf %204 : vector<128x128xf32> to vector<128x128xbf16>
    %c11 = arith.constant 11 : index
    %c0_104 = arith.constant 0 : index
    %c0_105 = arith.constant 0 : index
    %206 = vector.load %arg11[%c11, %c0_104, %c0_105] : memref<12x128x128xbf16, #tpu.memory_space<vmem>>, vector<1x128x128xbf16>
    %207 = vector.shape_cast %206 : vector<1x128x128xbf16> to vector<128x128xbf16>
    %cst_106 = arith.constant dense<0.000000e+00> : vector<128x128xf32>
    %208 = tpu.matmul %205, %207, %cst_106 {dimension_numbers = #tpu.dot_dimension_numbers<[1], [0], [0], [1], [0, 0, 1, 1], [], []>} : vector<128x128xbf16>, vector<128x128xbf16>, vector<128x128xf32> -> vector<128x128xf32>
    %209 = arith.addf %201, %208 : vector<128x128xf32>
    %c0_107 = arith.constant 0 : index
    %c0_108 = arith.constant 0 : index
    %210 = vector.load %arg12[%c0_107, %c0_108] : memref<1x128xf32, #tpu.memory_space<vmem>>, vector<1x128xf32>
    %211 = vector.broadcast %210 : vector<1x128xf32> to vector<128x128xf32>
    %212 = arith.addf %209, %211 : vector<128x128xf32>
    %cst_109 = arith.constant 1.000000e+00 : f32
    %213 = vector.broadcast %cst_109 : f32 to vector<128x1xf32>
    %214 = arith.cmpf olt, %0, %213 : vector<128x1xf32>
    %215 = arith.extui %214 : vector<128x1xi1> to vector<128x1xi32>
    %216 = arith.sitofp %215 : vector<128x1xi32> to vector<128x1xf32>
    %c0_110 = arith.constant 0 : index
    %c0_111 = arith.constant 0 : index
    %217 = vector.load %arg13[%c0_110, %c0_111] : memref<1x128xf32, #tpu.memory_space<vmem>>, vector<1x128xf32>
    %c0_112 = arith.constant 0 : index
    %c0_113 = arith.constant 0 : index
    %218 = vector.load %arg14[%c0_112, %c0_113] : memref<1x128xf32, #tpu.memory_space<vmem>>, vector<1x128xf32>
    %219 = vector.broadcast %216 : vector<128x1xf32> to vector<128x128xf32>
    %220 = arith.mulf %212, %219 : vector<128x128xf32>
    %cst_114 = arith.constant dense<0.000000e+00> : vector<128xf32>
    %221 = vector.multi_reduction <add>, %220, %cst_114 [0] : vector<128x128xf32> to vector<128xf32>
    %222 = vector.shape_cast %221 : vector<128xf32> to vector<1x128xf32>
    %cst_115 = arith.constant 1.250000e-01 : f32
    %223 = vector.broadcast %cst_115 : f32 to vector<1x128xf32>
    %224 = arith.mulf %222, %223 : vector<1x128xf32>
    %225 = arith.mulf %220, %212 : vector<128x128xf32>
    %cst_116 = arith.constant dense<0.000000e+00> : vector<128xf32>
    %226 = vector.multi_reduction <add>, %225, %cst_116 [0] : vector<128x128xf32> to vector<128xf32>
    %227 = vector.shape_cast %226 : vector<128xf32> to vector<1x128xf32>
    %cst_117 = arith.constant 1.250000e-01 : f32
    %228 = vector.broadcast %cst_117 : f32 to vector<1x128xf32>
    %229 = arith.mulf %227, %228 : vector<1x128xf32>
    %230 = arith.mulf %224, %224 : vector<1x128xf32>
    %231 = arith.subf %229, %230 : vector<1x128xf32>
    %232 = vector.broadcast %224 : vector<1x128xf32> to vector<128x128xf32>
    %233 = arith.subf %212, %232 : vector<128x128xf32>
    %234 = vector.broadcast %217 : vector<1x128xf32> to vector<128x128xf32>
    %235 = arith.mulf %234, %233 : vector<128x128xf32>
    %cst_118 = arith.constant 9.99999974E-6 : f32
    %236 = vector.broadcast %cst_118 : f32 to vector<1x128xf32>
    %237 = arith.addf %231, %236 : vector<1x128xf32>
    %238 = math.rsqrt %237 : vector<1x128xf32>
    %239 = vector.broadcast %238 : vector<1x128xf32> to vector<128x128xf32>
    %240 = arith.mulf %235, %239 : vector<128x128xf32>
    %241 = vector.broadcast %218 : vector<1x128xf32> to vector<128x128xf32>
    %242 = arith.addf %240, %241 : vector<128x128xf32>
    %cst_119 = arith.constant 0.000000e+00 : f32
    %243 = vector.broadcast %cst_119 : f32 to vector<128x128xf32>
    %244 = arith.maximumf %242, %243 : vector<128x128xf32>
    %245 = arith.truncf %244 : vector<128x128xf32> to vector<128x128xbf16>
    %c0_120 = arith.constant 0 : index
    %c0_121 = arith.constant 0 : index
    %246 = vector.load %arg15[%c0_120, %c0_121] : memref<128x128xbf16, #tpu.memory_space<vmem>>, vector<128x128xbf16>
    %cst_122 = arith.constant dense<0.000000e+00> : vector<128x128xf32>
    %247 = tpu.matmul %245, %246, %cst_122 {dimension_numbers = #tpu.dot_dimension_numbers<[1], [0], [0], [1], [0, 0, 1, 1], [], []>} : vector<128x128xbf16>, vector<128x128xbf16>, vector<128x128xf32> -> vector<128x128xf32>
    %c0_123 = arith.constant 0 : index
    %c0_124 = arith.constant 0 : index
    %248 = vector.load %arg16[%c0_123, %c0_124] : memref<1x128xf32, #tpu.memory_space<vmem>>, vector<1x128xf32>
    %249 = vector.broadcast %248 : vector<1x128xf32> to vector<128x128xf32>
    %250 = arith.addf %247, %249 : vector<128x128xf32>
    %c0_125 = arith.constant 0 : index
    %c0_126 = arith.constant 0 : index
    %251 = vector.load %arg17[%c0_125, %c0_126] : memref<1x128xf32, #tpu.memory_space<vmem>>, vector<1x128xf32>
    %c0_127 = arith.constant 0 : index
    %c0_128 = arith.constant 0 : index
    %252 = vector.load %arg18[%c0_127, %c0_128] : memref<1x128xf32, #tpu.memory_space<vmem>>, vector<1x128xf32>
    %253 = vector.broadcast %216 : vector<128x1xf32> to vector<128x128xf32>
    %254 = arith.mulf %250, %253 : vector<128x128xf32>
    %cst_129 = arith.constant dense<0.000000e+00> : vector<128xf32>
    %255 = vector.multi_reduction <add>, %254, %cst_129 [0] : vector<128x128xf32> to vector<128xf32>
    %256 = vector.shape_cast %255 : vector<128xf32> to vector<1x128xf32>
    %cst_130 = arith.constant 1.250000e-01 : f32
    %257 = vector.broadcast %cst_130 : f32 to vector<1x128xf32>
    %258 = arith.mulf %256, %257 : vector<1x128xf32>
    %259 = arith.mulf %254, %250 : vector<128x128xf32>
    %cst_131 = arith.constant dense<0.000000e+00> : vector<128xf32>
    %260 = vector.multi_reduction <add>, %259, %cst_131 [0] : vector<128x128xf32> to vector<128xf32>
    %261 = vector.shape_cast %260 : vector<128xf32> to vector<1x128xf32>
    %cst_132 = arith.constant 1.250000e-01 : f32
    %262 = vector.broadcast %cst_132 : f32 to vector<1x128xf32>
    %263 = arith.mulf %261, %262 : vector<1x128xf32>
    %264 = arith.mulf %258, %258 : vector<1x128xf32>
    %265 = arith.subf %263, %264 : vector<1x128xf32>
    %266 = vector.broadcast %258 : vector<1x128xf32> to vector<128x128xf32>
    %267 = arith.subf %250, %266 : vector<128x128xf32>
    %268 = vector.broadcast %251 : vector<1x128xf32> to vector<128x128xf32>
    %269 = arith.mulf %268, %267 : vector<128x128xf32>
    %cst_133 = arith.constant 9.99999974E-6 : f32
    %270 = vector.broadcast %cst_133 : f32 to vector<1x128xf32>
    %271 = arith.addf %265, %270 : vector<1x128xf32>
    %272 = math.rsqrt %271 : vector<1x128xf32>
    %273 = vector.broadcast %272 : vector<1x128xf32> to vector<128x128xf32>
    %274 = arith.mulf %269, %273 : vector<128x128xf32>
    %275 = vector.broadcast %252 : vector<1x128xf32> to vector<128x128xf32>
    %276 = arith.addf %274, %275 : vector<128x128xf32>
    %cst_134 = arith.constant 0.000000e+00 : f32
    %277 = vector.broadcast %cst_134 : f32 to vector<128x128xf32>
    %278 = arith.maximumf %276, %277 : vector<128x128xf32>
    %279 = arith.truncf %278 : vector<128x128xf32> to vector<128x128xbf16>
    %c0_135 = arith.constant 0 : index
    %c0_136 = arith.constant 0 : index
    %280 = vector.load %arg19[%c0_135, %c0_136] : memref<128x128xbf16, #tpu.memory_space<vmem>>, vector<128x128xbf16>
    %cst_137 = arith.constant dense<0.000000e+00> : vector<128x128xf32>
    %281 = tpu.matmul %279, %280, %cst_137 {dimension_numbers = #tpu.dot_dimension_numbers<[1], [0], [0], [1], [0, 0, 1, 1], [], []>} : vector<128x128xbf16>, vector<128x128xbf16>, vector<128x128xf32> -> vector<128x128xf32>
    %c0_138 = arith.constant 0 : index
    %c0_139 = arith.constant 0 : index
    %282 = vector.load %arg20[%c0_138, %c0_139] : memref<1x128xf32, #tpu.memory_space<vmem>>, vector<1x128xf32>
    %283 = vector.broadcast %282 : vector<1x128xf32> to vector<128x128xf32>
    %284 = arith.addf %281, %283 : vector<128x128xf32>
    %c0_140 = arith.constant 0 : index
    %c0_141 = arith.constant 0 : index
    %285 = vector.load %arg21[%c0_140, %c0_141] : memref<128x128xf32, #tpu.memory_space<vmem>>, vector<128x128xf32>
    tpu.vector_store %arg21[%c0_140, %c0_141], %284 {strides = array<i32>} : memref<128x128xf32, #tpu.memory_space<vmem>>, vector<128x128xf32>,
    return
  }
  func.func @transform_0(%arg0: i32) -> (i32, i32) {
    %c0_i32 = arith.constant 0 : i32
    %c0_i32_0 = arith.constant 0 : i32
    %c0_i32_1 = arith.constant 0 : i32
    return %c0_i32, %c0_i32_0 : i32, i32
  }
  func.func @transform_1(%arg0: i32) -> (i32, i32) {
    %c0_i32 = arith.constant 0 : i32
    %c0_i32_0 = arith.constant 0 : i32
    %c0_i32_1 = arith.constant 0 : i32
    return %c0_i32, %c0_i32_0 : i32, i32
  }
  func.func @transform_2(%arg0: i32) -> (i32, i32, i32) {
    %c0_i32 = arith.constant 0 : i32
    %c0_i32_0 = arith.constant 0 : i32
    %c0_i32_1 = arith.constant 0 : i32
    %c0_i32_2 = arith.constant 0 : i32
    return %c0_i32, %c0_i32_0, %c0_i32_1 : i32, i32, i32
  }
  func.func @transform_3(%arg0: i32) -> (i32, i32) {
    %c0_i32 = arith.constant 0 : i32
    %c0_i32_0 = arith.constant 0 : i32
    %c0_i32_1 = arith.constant 0 : i32
    return %c0_i32, %c0_i32_0 : i32, i32
  }
  func.func @transform_4(%arg0: i32) -> (i32, i32) {
    %c0_i32 = arith.constant 0 : i32
    %c0_i32_0 = arith.constant 0 : i32
    %c0_i32_1 = arith.constant 0 : i32
    return %c0_i32, %c0_i32_0 : i32, i32
  }
  func.func @transform_5(%arg0: i32) -> (i32, i32) {
    %c0_i32 = arith.constant 0 : i32
    %c0_i32_0 = arith.constant 0 : i32
    %c0_i32_1 = arith.constant 0 : i32
    return %c0_i32, %c0_i32_0 : i32, i32
  }
  func.func @transform_6(%arg0: i32) -> (i32, i32, i32) {
    %c0_i32 = arith.constant 0 : i32
    %c0_i32_0 = arith.constant 0 : i32
    %c0_i32_1 = arith.constant 0 : i32
    %c0_i32_2 = arith.constant 0 : i32
    return %c0_i32, %c0_i32_0, %c0_i32_1 : i32, i32, i32
  }
  func.func @transform_7(%arg0: i32) -> (i32, i32) {
    %c0_i32 = arith.constant 0 : i32
    %c0_i32_0 = arith.constant 0 : i32
    %c0_i32_1 = arith.constant 0 : i32
    return %c0_i32, %c0_i32_0 : i32, i32
  }
  func.func @transform_8(%arg0: i32) -> (i32, i32) {
    %c0_i32 = arith.constant 0 : i32
    %c0_i32_0 = arith.constant 0 : i32
    %c0_i32_1 = arith.constant 0 : i32
    return %c0_i32, %c0_i32_0 : i32, i32
  }
  func.func @transform_9(%arg0: i32) -> (i32, i32) {
    %c0_i32 = arith.constant 0 : i32
    %c0_i32_0 = arith.constant 0 : i32
    %c0_i32_1 = arith.constant 0 : i32
    return %c0_i32, %c0_i32_0 : i32, i32
  }
  func.func @transform_10(%arg0: i32) -> (i32, i32, i32) {
    %c0_i32 = arith.constant 0 : i32
    %c0_i32_0 = arith.constant 0 : i32
    %c0_i32_1 = arith.constant 0 : i32
    %c0_i32_2 = arith.constant 0 : i32
    return %c0_i32, %c0_i32_0, %c0_i32_1 : i32, i32, i32
  }
  func.func @transform_11(%arg0: i32) -> (i32, i32) {
    %c0_i32 = arith.constant 0 : i32
    %c0_i32_0 = arith.constant 0 : i32
    %c0_i32_1 = arith.constant 0 : i32
    return %c0_i32, %c0_i32_0 : i32, i32
  }
  func.func @transform_12(%arg0: i32) -> (i32, i32) {
    %c0_i32 = arith.constant 0 : i32
    %c0_i32_0 = arith.constant 0 : i32
    %c0_i32_1 = arith.constant 0 : i32
    return %c0_i32, %c0_i32_0 : i32, i32
  }
  func.func @transform_13(%arg0: i32) -> (i32, i32) {
    %c0_i32 = arith.constant 0 : i32
    %c0_i32_0 = arith.constant 0 : i32
    %c0_i32_1 = arith.constant 0 : i32
    return %c0_i32, %c0_i32_0 : i32, i32
  }
  func.func @transform_14(%arg0: i32) -> (i32, i32) {
    %c0_i32 = arith.constant 0 : i32
    %c0_i32_0 = arith.constant 0 : i32
    %c0_i32_1 = arith.constant 0 : i32
    return %c0_i32, %c0_i32_0 : i32, i32
  }
  func.func @transform_15(%arg0: i32) -> (i32, i32) {
    %c0_i32 = arith.constant 0 : i32
    %c0_i32_0 = arith.constant 0 : i32
    %c0_i32_1 = arith.constant 0 : i32
    return %c0_i32, %c0_i32_0 : i32, i32
  }
  func.func @transform_16(%arg0: i32) -> (i32, i32) {
    %c0_i32 = arith.constant 0 : i32
    %c0_i32_0 = arith.constant 0 : i32
    %c0_i32_1 = arith.constant 0 : i32
    return %c0_i32, %c0_i32_0 : i32, i32
  }
  func.func @transform_17(%arg0: i32) -> (i32, i32) {
    %c0_i32 = arith.constant 0 : i32
    %c0_i32_0 = arith.constant 0 : i32
    %c0_i32_1 = arith.constant 0 : i32
    return %c0_i32, %c0_i32_0 : i32, i32
  }
  func.func @transform_18(%arg0: i32) -> (i32, i32) {
    %c0_i32 = arith.constant 0 : i32
    %c0_i32_0 = arith.constant 0 : i32
    %c0_i32_1 = arith.constant 0 : i32
    return %c0_i32, %c0_i32_0 : i32, i32
  }
  func.func @transform_19(%arg0: i32) -> (i32, i32) {
    %c0_i32 = arith.constant 0 : i32
    %c0_i32_0 = arith.constant 0 : i32
    %c0_i32_1 = arith.constant 0 : i32
    return %c0_i32, %c0_i32_0 : i32, i32
  }
  func.func @transform_20(%arg0: i32) -> (i32, i32) {
    %c0_i32 = arith.constant 0 : i32
    %c0_i32_0 = arith.constant 0 : i32
    %c0_i32_1 = arith.constant 0 : i32
    return %c0_i32, %c0_i32_0 : i32, i32
  }
}

</mosaic_0001>

<llo_original>
// kernel: tpu_custom_call.1
$region0: #{tpu_custom_call.1}
  #allocation0 [shape = 'u32[]', space=smem, size = 0x4, offset = 0x4, fixed_abs, tag = 'smem constant byte address 0x4 - core index']
  #allocation1 [shape = 'u32[144,128]{1,0:T(1,128)}', space=vmem, size = 0x12000, scoped, tag = 'internal scratch']
  %s0 = inlined_call_operand.vmem [shape: f32[128,128], index: 0, kind: input, shape index: {}]
  %s1 = inlined_call_operand.vmem [shape: f32[128,1], index: 1, kind: input, shape index: {}]
  %s2 = inlined_call_operand.hbm [shape: bf16[3,128,128], index: 2, kind: input, shape index: {}]
  %s3 = inlined_call_operand.vmem [shape: f32[1,128], index: 3, kind: input, shape index: {}]
  %s4 = inlined_call_operand.vmem [shape: f32[1,128], index: 4, kind: input, shape index: {}]
  %s5 = inlined_call_operand.vmem [shape: f32[1,128], index: 5, kind: input, shape index: {}]
  %s6 = inlined_call_operand.hbm [shape: bf16[3,128,128], index: 6, kind: input, shape index: {}]
  %s7 = inlined_call_operand.vmem [shape: f32[1,128], index: 7, kind: input, shape index: {}]
  %s8 = inlined_call_operand.vmem [shape: f32[1,128], index: 8, kind: input, shape index: {}]
  %s9 = inlined_call_operand.vmem [shape: f32[1,128], index: 9, kind: input, shape index: {}]
  %s10 = inlined_call_operand.hbm [shape: bf16[12,128,128], index: 10, kind: input, shape index: {}]
  %s11 = inlined_call_operand.vmem [shape: f32[1,128], index: 11, kind: input, shape index: {}]
  %s12 = inlined_call_operand.vmem [shape: f32[1,128], index: 12, kind: input, shape index: {}]
  %s13 = inlined_call_operand.vmem [shape: f32[1,128], index: 13, kind: input, shape index: {}]
  %s14 = inlined_call_operand.hbm [shape: bf16[128,128], index: 14, kind: input, shape index: {}]
  %s15 = inlined_call_operand.vmem [shape: f32[1,128], index: 15, kind: input, shape index: {}]
  %s16 = inlined_call_operand.vmem [shape: f32[1,128], index: 16, kind: input, shape index: {}]
  %s17 = inlined_call_operand.vmem [shape: f32[1,128], index: 17, kind: input, shape index: {}]
  %s18 = inlined_call_operand.hbm [shape: bf16[128,128], index: 18, kind: input, shape index: {}]
  %s19 = inlined_call_operand.vmem [shape: f32[1,128], index: 19, kind: input, shape index: {}]
  %s20 = inlined_call_operand.hbm [shape: f32[128,128], index: 20, kind: output, shape index: {}]
  %s21 = sld [smem:[#allocation0]]
  $region110: #{tpu_custom_call.1} parent=0
    _
  %s23 = ssub.s32 1, %s21
  %s24 = scalar_select 0, %s23, %s21
  $region1: #{tpu_custom_call.1} parent=0
    #allocation2 [shape = 'u8[98304]{0}', space=vmem, size = 0x18000, scoped, tag = 'input window, operand 2, single buffered']
    #allocation3 [shape = 's32[1]{0}', space=sflag, size = 0x4, scoped, tag = 'scoped memory for tpu_custom_call.1']
    #allocation4 [shape = 's32[1]{0}', space=sflag, size = 0x4, scoped, tag = 'scoped memory for tpu_custom_call.1']
    #allocation5 [shape = 'u8[98304]{0}', space=vmem, size = 0x18000, scoped, tag = 'input window, operand 6, single buffered']
    #allocation6 [shape = 's32[1]{0}', space=sflag, size = 0x4, scoped, tag = 'scoped memory for tpu_custom_call.1']
    #allocation7 [shape = 'u8[393216]{0}', space=vmem, size = 0x60000, scoped, tag = 'input window, operand 10, single buffered']
    #allocation8 [shape = 'u8[32768]{0}', space=vmem, size = 0x8000, scoped, tag = 'input window, operand 14, single buffered']
    #allocation9 [shape = 's32[1]{0}', space=sflag, size = 0x4, scoped, tag = 'scoped memory for tpu_custom_call.1']
    #allocation10 [shape = 'u8[32768]{0}', space=vmem, size = 0x8000, scoped, tag = 'input window, operand 18, single buffered']
    #allocation11 [shape = 'u8[65536]{0}', space=vmem, size = 0x10000, scoped, tag = 'output window, operand 0, single buffered']
    %25 = vsyncpa [#allocation3], 0
    %26 = vsyncpa [#allocation6], 0
    %27 = vsyncpa [#allocation9], 0
    %28 = vsyncpa [#allocation4], 0
    // Predicated region
    $region2: #{tpu_custom_call.1} parent=1 // pred_check
      _
    $region3: #{tpu_custom_call.1} parent=1 // pred_check_branch
      %30 = sbr.rel (0) target = $region5
    $region4: #{tpu_custom_call.1} parent=1 // pred_region
      _
    $region5: #{tpu_custom_call.1} parent=1 // pred_fallthru
      _
    // Predicated region
    $region6: #{tpu_custom_call.1} parent=1 // pred_check
      _
    $region7: #{tpu_custom_call.1} parent=1 // pred_check_branch
      %32 = sbr.rel (0) target = $region9
    $region8: #{tpu_custom_call.1} parent=1 // pred_region
      _
    $region9: #{tpu_custom_call.1} parent=1 // pred_fallthru
      _
    // Predicated region
    $region10: #{tpu_custom_call.1} parent=1 // pred_check
      _
    $region11: #{tpu_custom_call.1} parent=1 // pred_check_branch
      %34 = sbr.rel (0) target = $region13
    $region12: #{tpu_custom_call.1} parent=1 // pred_region
      %s36 = ssub.s32 3072, 3072
      %37 = vsyncadd [#allocation3], %s36
      %s38 = sshll.u32 [#allocation2], 4
      %s39 = int_to_ptr.vmem [resolvable:$true] %s38
      %44 = dma.hbm_to_vmem [thread:$0]  %s2, 3072, %s39, [#allocation3], 64, 64, 4
    $region13: #{tpu_custom_call.1} parent=1 // pred_fallthru
      _
    // Predicated region
    $region14: #{tpu_custom_call.1} parent=1 // pred_check
      _
    $region15: #{tpu_custom_call.1} parent=1 // pred_check_branch
      %46 = sbr.rel (0) target = $region17
    $region16: #{tpu_custom_call.1} parent=1 // pred_region
      _
    $region17: #{tpu_custom_call.1} parent=1 // pred_fallthru
      _
    // Predicated region
    $region18: #{tpu_custom_call.1} parent=1 // pred_check
      _
    $region19: #{tpu_custom_call.1} parent=1 // pred_check_branch
      %48 = sbr.rel (0) target = $region21
    $region20: #{tpu_custom_call.1} parent=1 // pred_region
      _
    $region21: #{tpu_custom_call.1} parent=1 // pred_fallthru
      _
    // Predicated region
    $region22: #{tpu_custom_call.1} parent=1 // pred_check
      _
    $region23: #{tpu_custom_call.1} parent=1 // pred_check_branch
      %50 = sbr.rel (0) target = $region25
    $region24: #{tpu_custom_call.1} parent=1 // pred_region
      _
    $region25: #{tpu_custom_call.1} parent=1 // pred_fallthru
      _
    // Predicated region
    $region26: #{tpu_custom_call.1} parent=1 // pred_check
      _
    $region27: #{tpu_custom_call.1} parent=1 // pred_check_branch
      %52 = sbr.rel (0) target = $region29
    $region28: #{tpu_custom_call.1} parent=1 // pred_region
      %s54 = ssub.s32 3072, 3072
      %55 = vsyncadd [#allocation6], %s54
      %s56 = sshll.u32 [#allocation5], 4
      %s57 = int_to_ptr.vmem [resolvable:$true] %s56
      %62 = dma.hbm_to_vmem [thread:$0]  %s6, 3072, %s57, [#allocation6], 64, 64, 4
    $region29: #{tpu_custom_call.1} parent=1 // pred_fallthru
      _
    // Predicated region
    $region30: #{tpu_custom_call.1} parent=1 // pred_check
      _
    $region31: #{tpu_custom_call.1} parent=1 // pred_check_branch
      %64 = sbr.rel (0) target = $region33
    $region32: #{tpu_custom_call.1} parent=1 // pred_region
      _
    $region33: #{tpu_custom_call.1} parent=1 // pred_fallthru
      _
    // Predicated region
    $region34: #{tpu_custom_call.1} parent=1 // pred_check
      _
    $region35: #{tpu_custom_call.1} parent=1 // pred_check_branch
      %66 = sbr.rel (0) target = $region37
    $region36: #{tpu_custom_call.1} parent=1 // pred_region
      _
    $region37: #{tpu_custom_call.1} parent=1 // pred_fallthru
      _
    // Predicated region
    $region38: #{tpu_custom_call.1} parent=1 // pred_check
      _
    $region39: #{tpu_custom_call.1} parent=1 // pred_check_branch
      %68 = sbr.rel (0) target = $region41
    $region40: #{tpu_custom_call.1} parent=1 // pred_region
      _
    $region41: #{tpu_custom_call.1} parent=1 // pred_fallthru
      _
    // Predicated region
    $region42: #{tpu_custom_call.1} parent=1 // pred_check
      _
    $region43: #{tpu_custom_call.1} parent=1 // pred_check_branch
      %70 = sbr.rel (0) target = $region45
    $region44: #{tpu_custom_call.1} parent=1 // pred_region
      %s72 = ssub.s32 12288, 12288
      %73 = vsyncadd [#allocation6], %s72
      %s74 = sshll.u32 [#allocation7], 4
      %s75 = int_to_ptr.vmem [resolvable:$true] %s74
      %80 = dma.hbm_to_vmem [thread:$0]  %s10, 12288, %s75, [#allocation6], 64, 64, 4
    $region45: #{tpu_custom_call.1} parent=1 // pred_fallthru
      _
    // Predicated region
    $region46: #{tpu_custom_call.1} parent=1 // pred_check
      _
    $region47: #{tpu_custom_call.1} parent=1 // pred_check_branch
      %82 = sbr.rel (0) target = $region49
    $region48: #{tpu_custom_call.1} parent=1 // pred_region
      _
    $region49: #{tpu_custom_call.1} parent=1 // pred_fallthru
      _
    // Predicated region
    $region50: #{tpu_custom_call.1} parent=1 // pred_check
      _
    $region51: #{tpu_custom_call.1} parent=1 // pred_check_branch
      %84 = sbr.rel (0) target = $region53
    $region52: #{tpu_custom_call.1} parent=1 // pred_region
      _
    $region53: #{tpu_custom_call.1} parent=1 // pred_fallthru
      _
    // Predicated region
    $region54: #{tpu_custom_call.1} parent=1 // pred_check
      _
    $region55: #{tpu_custom_call.1} parent=1 // pred_check_branch
      %86 = sbr.rel (0) target = $region57
    $region56: #{tpu_custom_call.1} parent=1 // pred_region
      _
    $region57: #{tpu_custom_call.1} parent=1 // pred_fallthru
      _
    // Predicated region
    $region58: #{tpu_custom_call.1} parent=1 // pred_check
      _
    $region59: #{tpu_custom_call.1} parent=1 // pred_check_branch
      %88 = sbr.rel (0) target = $region61
    $region60: #{tpu_custom_call.1} parent=1 // pred_region
      %s90 = ssub.s32 1024, 1024
      %91 = vsyncadd [#allocation9], %s90
      %s92 = sshll.u32 [#allocation8], 4
      %s93 = int_to_ptr.vmem [resolvable:$true] %s92
      %98 = dma.hbm_to_vmem [thread:$0]  %s14, 1024, %s93, [#allocation9], 64, 64, 4
    $region61: #{tpu_custom_call.1} parent=1 // pred_fallthru
      _
    // Predicated region
    $region62: #{tpu_custom_call.1} parent=1 // pred_check
      _
    $region63: #{tpu_custom_call.1} parent=1 // pred_check_branch
      %100 = sbr.rel (0) target = $region65
    $region64: #{tpu_custom_call.1} parent=1 // pred_region
      _
    $region65: #{tpu_custom_call.1} parent=1 // pred_fallthru
      _
    // Predicated region
    $region66: #{tpu_custom_call.1} parent=1 // pred_check
      _
    $region67: #{tpu_custom_call.1} parent=1 // pred_check_branch
      %102 = sbr.rel (0) target = $region69
    $region68: #{tpu_custom_call.1} parent=1 // pred_region
      _
    $region69: #{tpu_custom_call.1} parent=1 // pred_fallthru
      _
    // Predicated region
    $region70: #{tpu_custom_call.1} parent=1 // pred_check
      _
    $region71: #{tpu_custom_call.1} parent=1 // pred_check_branch
      %104 = sbr.rel (0) target = $region73
    $region72: #{tpu_custom_call.1} parent=1 // pred_region
      _
    $region73: #{tpu_custom_call.1} parent=1 // pred_fallthru
      _
    // Predicated region
    $region74: #{tpu_custom_call.1} parent=1 // pred_check
      _
    $region75: #{tpu_custom_call.1} parent=1 // pred_check_branch
      %106 = sbr.rel (0) target = $region77
    $region76: #{tpu_custom_call.1} parent=1 // pred_region
      %s108 = ssub.s32 1024, 1024
      %109 = vsyncadd [#allocation9], %s108
      %s110 = sshll.u32 [#allocation10], 4
      %s111 = int_to_ptr.vmem [resolvable:$true] %s110
      %116 = dma.hbm_to_vmem [thread:$0]  %s18, 1024, %s111, [#allocation9], 64, 64, 4
    $region77: #{tpu_custom_call.1} parent=1 // pred_fallthru
      _
    // Predicated region
    $region78: #{tpu_custom_call.1} parent=1 // pred_check
      _
    $region79: #{tpu_custom_call.1} parent=1 // pred_check_branch
      %118 = sbr.rel (0) target = $region81
    $region80: #{tpu_custom_call.1} parent=1 // pred_region
      _
    $region81: #{tpu_custom_call.1} parent=1 // pred_fallthru
      _
    // Predicated region
    $region82: #{tpu_custom_call.1} parent=1 // pred_check
      _
    $region83: #{tpu_custom_call.1} parent=1 // pred_check_branch
      %120 = sbr.rel (0) target = $region85
    $region84: #{tpu_custom_call.1} parent=1 // pred_region
      %121 = dma.done [#allocation3], 3072
    $region85: #{tpu_custom_call.1} parent=1 // pred_fallthru
      _
    // Predicated region
    $region86: #{tpu_custom_call.1} parent=1 // pred_check
      _
    $region87: #{tpu_custom_call.1} parent=1 // pred_check_branch
      %123 = sbr.rel (0) target = $region89
    $region88: #{tpu_custom_call.1} parent=1 // pred_region
      %124 = dma.done [#allocation6], 3072
    $region89: #{tpu_custom_call.1} parent=1 // pred_fallthru
      _
    // Predicated region
    $region90: #{tpu_custom_call.1} parent=1 // pred_check
      _
    $region91: #{tpu_custom_call.1} parent=1 // pred_check_branch
      %126 = sbr.rel (0) target = $region93
    $region92: #{tpu_custom_call.1} parent=1 // pred_region
      %127 = dma.done [#allocation6], 12288
    $region93: #{tpu_custom_call.1} parent=1 // pred_fallthru
      _
    // Predicated region
    $region94: #{tpu_custom_call.1} parent=1 // pred_check
      _
    $region95: #{tpu_custom_call.1} parent=1 // pred_check_branch
      %129 = sbr.rel (0) target = $region97
    $region96: #{tpu_custom_call.1} parent=1 // pred_region
      %130 = dma.done [#allocation9], 1024
    $region97: #{tpu_custom_call.1} parent=1 // pred_fallthru
      _
    // Predicated region
    $region98: #{tpu_custom_call.1} parent=1 // pred_check
      _
    $region99: #{tpu_custom_call.1} parent=1 // pred_check_branch
      %132 = sbr.rel (0) target = $region101
    $region100: #{tpu_custom_call.1} parent=1 // pred_region
      %133 = dma.done [#allocation9], 1024
    $region101: #{tpu_custom_call.1} parent=1 // pred_fallthru
      _
    %v135 = vld [vmem:[%s1] sm:$0xff]
    %v136 = vld [vmem:[%s1 + $0x8] sm:$0xff]
    %v137 = vld [vmem:[%s1 + $0x10] sm:$0xff]
    %v138 = vld [vmem:[%s1 + $0x18] sm:$0xff]
    %v139 = vld [vmem:[%s1 + $0x20] sm:$0xff]
    %v140 = vld [vmem:[%s1 + $0x28] sm:$0xff]
    %v141 = vld [vmem:[%s1 + $0x30] sm:$0xff]
    %v142 = vld [vmem:[%s1 + $0x38] sm:$0xff]
    %v143 = vld [vmem:[%s1 + $0x40] sm:$0xff]
    %v144 = vld [vmem:[%s1 + $0x48] sm:$0xff]
    %v145 = vld [vmem:[%s1 + $0x50] sm:$0xff]
    %v146 = vld [vmem:[%s1 + $0x58] sm:$0xff]
    %v147 = vld [vmem:[%s1 + $0x60] sm:$0xff]
    %v148 = vld [vmem:[%s1 + $0x68] sm:$0xff]
    %v149 = vld [vmem:[%s1 + $0x70] sm:$0xff]
    %v150 = vld [vmem:[%s1 + $0x78] sm:$0xff]
    %v151 = vld [vmem:[%s0] sm:$0xff]
    %v152 = vld [vmem:[%s0 + $0x8] sm:$0xff]
    %v153 = vld [vmem:[%s0 + $0x10] sm:$0xff]
    %v154 = vld [vmem:[%s0 + $0x18] sm:$0xff]
    %v155 = vld [vmem:[%s0 + $0x20] sm:$0xff]
    %v156 = vld [vmem:[%s0 + $0x28] sm:$0xff]
    %v157 = vld [vmem:[%s0 + $0x30] sm:$0xff]
    %v158 = vld [vmem:[%s0 + $0x38] sm:$0xff]
    %v159 = vld [vmem:[%s0 + $0x40] sm:$0xff]
    %v160 = vld [vmem:[%s0 + $0x48] sm:$0xff]
    %v161 = vld [vmem:[%s0 + $0x50] sm:$0xff]
    %v162 = vld [vmem:[%s0 + $0x58] sm:$0xff]
    %v163 = vld [vmem:[%s0 + $0x60] sm:$0xff]
    %v164 = vld [vmem:[%s0 + $0x68] sm:$0xff]
    %v165 = vld [vmem:[%s0 + $0x70] sm:$0xff]
    %v166 = vld [vmem:[%s0 + $0x78] sm:$0xff]
    %v167 = vpack.c.bf16 %v152, %v151
    %v168 = vpack.c.bf16 %v154, %v153
    %v169 = vpack.c.bf16 %v156, %v155
    %v170 = vpack.c.bf16 %v158, %v157
    %v171 = vpack.c.bf16 %v160, %v159
    %v172 = vpack.c.bf16 %v162, %v161
    %v173 = vpack.c.bf16 %v164, %v163
    %v174 = vpack.c.bf16 %v166, %v165
    %v175 = vld [vmem:[#allocation2] sm:$0xf]
    %v176 = vld [vmem:[#allocation2 + $0x4] sm:$0xf]
    %v177 = vld [vmem:[#allocation2 + $0x8] sm:$0xf]
    %v178 = vld [vmem:[#allocation2 + $0xc] sm:$0xf]
    %v179 = vld [vmem:[#allocation2 + $0x10] sm:$0xf]
    %v180 = vld [vmem:[#allocation2 + $0x14] sm:$0xf]
    %v181 = vld [vmem:[#allocation2 + $0x18] sm:$0xf]
    %v182 = vld [vmem:[#allocation2 + $0x1c] sm:$0xf]
    %v183 = vld [vmem:[#allocation2 + $0x20] sm:$0xf]
    %v184 = vld [vmem:[#allocation2 + $0x24] sm:$0xf]
    %v185 = vld [vmem:[#allocation2 + $0x28] sm:$0xf]
    %v186 = vld [vmem:[#allocation2 + $0x2c] sm:$0xf]
    %v187 = vld [vmem:[#allocation2 + $0x30] sm:$0xf]
    %v188 = vld [vmem:[#allocation2 + $0x34] sm:$0xf]
    %v189 = vld [vmem:[#allocation2 + $0x38] sm:$0xf]
    %v190 = vld [vmem:[#allocation2 + $0x3c] sm:$0xf]
    %vm207 = vcmask 1046528
    %v208 = vrot.slane %v151, 1
    %v209 = vrot.slane %v152, 1
    %v210 = vsel %vm207, %v208, %v209
    %v211 = vrot.slane %v153, 1
    %v212 = vsel %vm207, %v209, %v211
    %v213 = vrot.slane %v154, 1
    %v214 = vsel %vm207, %v211, %v213
    %v215 = vrot.slane %v155, 1
    %v216 = vsel %vm207, %v213, %v215
    %v217 = vrot.slane %v156, 1
    %v218 = vsel %vm207, %v215, %v217
    %v219 = vrot.slane %v157, 1
    %v220 = vsel %vm207, %v217, %v219
    %v221 = vrot.slane %v158, 1
    %v222 = vsel %vm207, %v219, %v221
    %v223 = vrot.slane %v159, 1
    %v224 = vsel %vm207, %v221, %v223
    %v225 = vrot.slane %v160, 1
    %v226 = vsel %vm207, %v223, %v225
    %v227 = vrot.slane %v161, 1
    %v228 = vsel %vm207, %v225, %v227
    %v229 = vrot.slane %v162, 1
    %v230 = vsel %vm207, %v227, %v229
    %v231 = vrot.slane %v163, 1
    %v232 = vsel %vm207, %v229, %v231
    %v233 = vrot.slane %v164, 1
    %v234 = vsel %vm207, %v231, %v233
    %v235 = vrot.slane %v165, 1
    %v236 = vsel %vm207, %v233, %v235
    %v237 = vrot.slane %v166, 1
    %v238 = vsel %vm207, %v235, %v237
    %v255 = vsel %vm207, %v237, 0.0
    %v256 = vpack.c.bf16 %v212, %v210
    %v257 = vpack.c.bf16 %v216, %v214
    %v258 = vpack.c.bf16 %v220, %v218
    %v259 = vpack.c.bf16 %v224, %v222
    %v260 = vpack.c.bf16 %v228, %v226
    %v261 = vpack.c.bf16 %v232, %v230
    %v262 = vpack.c.bf16 %v236, %v234
    %v263 = vpack.c.bf16 %v255, %v238
    %s264 = scalar_lea.vmem [#allocation2], 64
    %v265 = vld [vmem:[%s264] sm:$0xf]
    %v266 = vld [vmem:[%s264 + $0x4] sm:$0xf]
    %v267 = vld [vmem:[%s264 + $0x8] sm:$0xf]
    %v268 = vld [vmem:[%s264 + $0xc] sm:$0xf]
    %v269 = vld [vmem:[%s264 + $0x10] sm:$0xf]
    %v270 = vld [vmem:[%s264 + $0x14] sm:$0xf]
    %v271 = vld [vmem:[%s264 + $0x18] sm:$0xf]
    %v272 = vld [vmem:[%s264 + $0x1c] sm:$0xf]
    %v273 = vld [vmem:[%s264 + $0x20] sm:$0xf]
    %v274 = vld [vmem:[%s264 + $0x24] sm:$0xf]
    %v275 = vld [vmem:[%s264 + $0x28] sm:$0xf]
    %v276 = vld [vmem:[%s264 + $0x2c] sm:$0xf]
    %v277 = vld [vmem:[%s264 + $0x30] sm:$0xf]
    %v278 = vld [vmem:[%s264 + $0x34] sm:$0xf]
    %v279 = vld [vmem:[%s264 + $0x38] sm:$0xf]
    %v280 = vld [vmem:[%s264 + $0x3c] sm:$0xf]
    %v297 = vunpack.c.l.b16 %v265
    %v298 = vunpack.c.l.b16 %v266
    %v299 = vunpack.c.l.b16 %v267
    %v300 = vunpack.c.l.b16 %v268
    %v301 = vunpack.c.l.b16 %v269
    %v302 = vunpack.c.l.b16 %v270
    %v303 = vunpack.c.l.b16 %v271
    %v304 = vunpack.c.l.b16 %v272
    %v305 = vunpack.c.l.b16 %v273
    %v306 = vunpack.c.l.b16 %v274
    %v307 = vunpack.c.l.b16 %v275
    %v308 = vunpack.c.l.b16 %v276
    %v309 = vunpack.c.l.b16 %v277
    %v310 = vunpack.c.l.b16 %v278
    %v311 = vunpack.c.l.b16 %v279
    %v312 = vunpack.c.l.b16 %v280
    %v313 = vpack.c.b16 %v298, %v297
    %v314 = vpack.c.b16 %v300, %v299
    %v315 = vpack.c.b16 %v302, %v301
    %v316 = vpack.c.b16 %v304, %v303
    %v317 = vpack.c.b16 %v306, %v305
    %v318 = vpack.c.b16 %v308, %v307
    %v319 = vpack.c.b16 %v310, %v309
    %v320 = vpack.c.b16 %v312, %v311
    %329 = vmatprep.subr.bf16.mxu0 0
    %330 = vmatpush1.bf16.msra.mxu0 %v320
    %331 = vmatprep.subr.bf16.mxu0 0
    %332 = vmatpush1.bf16.msra.mxu0 %v319
    %333 = vmatprep.subr.bf16.mxu0 0
    %334 = vmatpush1.bf16.msra.mxu0 %v318
    %335 = vmatprep.subr.bf16.mxu0 0
    %336 = vmatpush1.bf16.msra.mxu0 %v317
    %337 = vmatprep.subr.bf16.mxu0 0
    %338 = vmatpush1.bf16.msra.mxu0 %v316
    %339 = vmatprep.subr.bf16.mxu0 0
    %340 = vmatpush1.bf16.msra.mxu0 %v315
    %341 = vmatprep.subr.bf16.mxu0 0
    %342 = vmatpush1.bf16.msra.mxu0 %v314
    %343 = vmatprep.subr.bf16.mxu0 0
    %344 = vmatpush1.bf16.msra.mxu0 %v313
    %345 = vmatprep.subr.bf16.mxu0 0
    %346 = vmatpush2.bf16.msra.mxu0 0
    %347 = vmatprep.subr.bf16.mxu0 0
    %348 = vmatpush2.bf16.msra.mxu0 0
    %349 = vmatprep.subr.bf16.mxu0 0
    %350 = vmatpush2.bf16.msra.mxu0 0
    %351 = vmatprep.subr.bf16.mxu0 0
    %352 = vmatpush2.bf16.msra.mxu0 0
    %353 = vmatprep.subr.bf16.mxu0 0
    %354 = vmatpush2.bf16.msra.mxu0 0
    %355 = vmatprep.subr.bf16.mxu0 0
    %356 = vmatpush2.bf16.msra.mxu0 0
    %357 = vmatprep.subr.bf16.mxu0 0
    %358 = vmatpush2.bf16.msra.mxu0 0
    %359 = vmatprep.subr.bf16.mxu0 0
    %360 = vmatpush2.bf16.msra.mxu0 0
    %361 = vmatprep.mubr.bf16.mxu0 0
    %362 = vmatmul.mubr.bf16.gmra.mxu0 %v256
    %v363 = vpop.f32.mrf.mxu0
    %v364 = vadd.f32 0.0, %v363
    %v365 = vpop.f32.mrf.mxu0
    %v366 = vpop.f32.mrf.mxu0
    %v367 = vadd.f32 0.0, %v366
    %v368 = vpop.f32.mrf.mxu0
    %369 = vmatprep.mubr.bf16.mxu0 0
    %370 = vmatmul.mubr.bf16.gmra.mxu0 %v257
    %v371 = vpop.f32.mrf.mxu0
    %v372 = vadd.f32 0.0, %v371
    %v373 = vpop.f32.mrf.mxu0
    %v374 = vpop.f32.mrf.mxu0
    %v375 = vadd.f32 0.0, %v374
    %v376 = vpop.f32.mrf.mxu0
    %377 = vmatprep.mubr.bf16.mxu0 0
    %378 = vmatmul.mubr.bf16.gmra.mxu0 %v258
    %v379 = vpop.f32.mrf.mxu0
    %v380 = vadd.f32 0.0, %v379
    %v381 = vpop.f32.mrf.mxu0
    %v382 = vpop.f32.mrf.mxu0
    %v383 = vadd.f32 0.0, %v382
    %v384 = vpop.f32.mrf.mxu0
    %385 = vmatprep.mubr.bf16.mxu0 0
    %386 = vmatmul.mubr.bf16.gmra.mxu0 %v259
    %v387 = vpop.f32.mrf.mxu0
    %v388 = vadd.f32 0.0, %v387
    %v389 = vpop.f32.mrf.mxu0
    %v390 = vpop.f32.mrf.mxu0
    %v391 = vadd.f32 0.0, %v390
    %v392 = vpop.f32.mrf.mxu0
    %393 = vmatprep.mubr.bf16.mxu0 0
    %394 = vmatmul.mubr.bf16.gmra.mxu0 %v260
    %v395 = vpop.f32.mrf.mxu0
    %v396 = vadd.f32 0.0, %v395
    %v397 = vpop.f32.mrf.mxu0
    %v398 = vpop.f32.mrf.mxu0
    %v399 = vadd.f32 0.0, %v398
    %v400 = vpop.f32.mrf.mxu0
    %401 = vmatprep.mubr.bf16.mxu0 0
    %402 = vmatmul.mubr.bf16.gmra.mxu0 %v261
    %v403 = vpop.f32.mrf.mxu0
    %v404 = vadd.f32 0.0, %v403
    %v405 = vpop.f32.mrf.mxu0
    %v406 = vpop.f32.mrf.mxu0
    %v407 = vadd.f32 0.0, %v406
    %v408 = vpop.f32.mrf.mxu0
    %409 = vmatprep.mubr.bf16.mxu0 0
    %410 = vmatmul.mubr.bf16.gmra.mxu0 %v262
    %v411 = vpop.f32.mrf.mxu0
    %v412 = vadd.f32 0.0, %v411
    %v413 = vpop.f32.mrf.mxu0
    %v414 = vpop.f32.mrf.mxu0
    %v415 = vadd.f32 0.0, %v414
    %v416 = vpop.f32.mrf.mxu0
    %417 = vmatprep.mubr.bf16.mxu0 0
    %418 = vmatmul.mubr.bf16.gmra.mxu0 %v263
    %v419 = vpop.f32.mrf.mxu0
    %v420 = vadd.f32 0.0, %v419
    %v421 = vpop.f32.mrf.mxu0
    %v422 = vpop.f32.mrf.mxu0
    %v423 = vadd.f32 0.0, %v422
    %v424 = vpop.f32.mrf.mxu0
    %425 = vdwg.mxu0
    %v442 = vunpack.c.l.b16 %v175
    %v443 = vunpack.c.l.b16 %v176
    %v444 = vunpack.c.l.b16 %v177
    %v445 = vunpack.c.l.b16 %v178
    %v446 = vunpack.c.l.b16 %v179
    %v447 = vunpack.c.l.b16 %v180
    %v448 = vunpack.c.l.b16 %v181
    %v449 = vunpack.c.l.b16 %v182
    %v450 = vunpack.c.l.b16 %v183
    %v451 = vunpack.c.l.b16 %v184
    %v452 = vunpack.c.l.b16 %v185
    %v453 = vunpack.c.l.b16 %v186
    %v454 = vunpack.c.l.b16 %v187
    %v455 = vunpack.c.l.b16 %v188
    %v456 = vunpack.c.l.b16 %v189
    %v457 = vunpack.c.l.b16 %v190
    %v458 = vpack.c.b16 %v443, %v442
    %v459 = vpack.c.b16 %v445, %v444
    %v460 = vpack.c.b16 %v447, %v446
    %v461 = vpack.c.b16 %v449, %v448
    %v462 = vpack.c.b16 %v451, %v450
    %v463 = vpack.c.b16 %v453, %v452
    %v464 = vpack.c.b16 %v455, %v454
    %v465 = vpack.c.b16 %v457, %v456
    %474 = vmatprep.subr.bf16.mxu0 0
    %475 = vmatpush1.bf16.msra.mxu0 %v465
    %476 = vmatprep.subr.bf16.mxu0 0
    %477 = vmatpush1.bf16.msra.mxu0 %v464
    %478 = vmatprep.subr.bf16.mxu0 0
    %479 = vmatpush1.bf16.msra.mxu0 %v463
    %480 = vmatprep.subr.bf16.mxu0 0
    %481 = vmatpush1.bf16.msra.mxu0 %v462
    %482 = vmatprep.subr.bf16.mxu0 0
    %483 = vmatpush1.bf16.msra.mxu0 %v461
    %484 = vmatprep.subr.bf16.mxu0 0
    %485 = vmatpush1.bf16.msra.mxu0 %v460
    %486 = vmatprep.subr.bf16.mxu0 0
    %487 = vmatpush1.bf16.msra.mxu0 %v459
    %488 = vmatprep.subr.bf16.mxu0 0
    %489 = vmatpush1.bf16.msra.mxu0 %v458
    %490 = vmatprep.subr.bf16.mxu0 0
    %491 = vmatpush2.bf16.msra.mxu0 0
    %492 = vmatprep.subr.bf16.mxu0 0
    %493 = vmatpush2.bf16.msra.mxu0 0
    %494 = vmatprep.subr.bf16.mxu0 0
    %495 = vmatpush2.bf16.msra.mxu0 0
    %496 = vmatprep.subr.bf16.mxu0 0
    %497 = vmatpush2.bf16.msra.mxu0 0
    %498 = vmatprep.subr.bf16.mxu0 0
    %499 = vmatpush2.bf16.msra.mxu0 0
    %500 = vmatprep.subr.bf16.mxu0 0
    %501 = vmatpush2.bf16.msra.mxu0 0
    %502 = vmatprep.subr.bf16.mxu0 0
    %503 = vmatpush2.bf16.msra.mxu0 0
    %504 = vmatprep.subr.bf16.mxu0 0
    %505 = vmatpush2.bf16.msra.mxu0 0
    %506 = vmatprep.mubr.bf16.mxu0 0
    %507 = vmatmul.mubr.bf16.gmra.mxu0 %v167
    %v508 = vpop.f32.mrf.mxu0
    %v509 = vadd.f32 %v364, %v508
    %v510 = vpop.f32.mrf.mxu0
    %v511 = vpop.f32.mrf.mxu0
    %v512 = vadd.f32 %v367, %v511
    %v513 = vpop.f32.mrf.mxu0
    %514 = vmatprep.mubr.bf16.mxu0 0
    %515 = vmatmul.mubr.bf16.gmra.mxu0 %v168
    %v516 = vpop.f32.mrf.mxu0
    %v517 = vadd.f32 %v372, %v516
    %v518 = vpop.f32.mrf.mxu0
    %v519 = vpop.f32.mrf.mxu0
    %v520 = vadd.f32 %v375, %v519
    %v521 = vpop.f32.mrf.mxu0
    %522 = vmatprep.mubr.bf16.mxu0 0
    %523 = vmatmul.mubr.bf16.gmra.mxu0 %v169
    %v524 = vpop.f32.mrf.mxu0
    %v525 = vadd.f32 %v380, %v524
    %v526 = vpop.f32.mrf.mxu0
    %v527 = vpop.f32.mrf.mxu0
    %v528 = vadd.f32 %v383, %v527
    %v529 = vpop.f32.mrf.mxu0
    %530 = vmatprep.mubr.bf16.mxu0 0
    %531 = vmatmul.mubr.bf16.gmra.mxu0 %v170
    %v532 = vpop.f32.mrf.mxu0
    %v533 = vadd.f32 %v388, %v532
    %v534 = vpop.f32.mrf.mxu0
    %v535 = vpop.f32.mrf.mxu0
    %v536 = vadd.f32 %v391, %v535
    %v537 = vpop.f32.mrf.mxu0
    %538 = vmatprep.mubr.bf16.mxu0 0
    %539 = vmatmul.mubr.bf16.gmra.mxu0 %v171
    %v540 = vpop.f32.mrf.mxu0
    %v541 = vadd.f32 %v396, %v540
    %v542 = vpop.f32.mrf.mxu0
    %v543 = vpop.f32.mrf.mxu0
    %v544 = vadd.f32 %v399, %v543
    %v545 = vpop.f32.mrf.mxu0
    %546 = vmatprep.mubr.bf16.mxu0 0
    %547 = vmatmul.mubr.bf16.gmra.mxu0 %v172
    %v548 = vpop.f32.mrf.mxu0
    %v549 = vadd.f32 %v404, %v548
    %v550 = vpop.f32.mrf.mxu0
    %v551 = vpop.f32.mrf.mxu0
    %v552 = vadd.f32 %v407, %v551
    %v553 = vpop.f32.mrf.mxu0
    %554 = vmatprep.mubr.bf16.mxu0 0
    %555 = vmatmul.mubr.bf16.gmra.mxu0 %v173
    %v556 = vpop.f32.mrf.mxu0
    %v557 = vadd.f32 %v412, %v556
    %v558 = vpop.f32.mrf.mxu0
    %v559 = vpop.f32.mrf.mxu0
    %v560 = vadd.f32 %v415, %v559
    %v561 = vpop.f32.mrf.mxu0
    %562 = vmatprep.mubr.bf16.mxu0 0
    %563 = vmatmul.mubr.bf16.gmra.mxu0 %v174
    %v564 = vpop.f32.mrf.mxu0
    %v565 = vadd.f32 %v420, %v564
    %v566 = vpop.f32.mrf.mxu0
    %v567 = vpop.f32.mrf.mxu0
    %v568 = vadd.f32 %v423, %v567
    %v569 = vpop.f32.mrf.mxu0
    %570 = vdwg.mxu0
    %vm571 = vcmask 1045504
    %v572 = vrot.slane %v151, 2
    %v573 = vrot.slane %v152, 2
    %v574 = vsel %vm571, %v572, %v573
    %v575 = vrot.slane %v153, 2
    %v576 = vsel %vm571, %v573, %v575
    %v577 = vrot.slane %v154, 2
    %v578 = vsel %vm571, %v575, %v577
    %v579 = vrot.slane %v155, 2
    %v580 = vsel %vm571, %v577, %v579
    %v581 = vrot.slane %v156, 2
    %v582 = vsel %vm571, %v579, %v581
    %v583 = vrot.slane %v157, 2
    %v584 = vsel %vm571, %v581, %v583
    %v585 = vrot.slane %v158, 2
    %v586 = vsel %vm571, %v583, %v585
    %v587 = vrot.slane %v159, 2
    %v588 = vsel %vm571, %v585, %v587
    %v589 = vrot.slane %v160, 2
    %v590 = vsel %vm571, %v587, %v589
    %v591 = vrot.slane %v161, 2
    %v592 = vsel %vm571, %v589, %v591
    %v593 = vrot.slane %v162, 2
    %v594 = vsel %vm571, %v591, %v593
    %v595 = vrot.slane %v163, 2
    %v596 = vsel %vm571, %v593, %v595
    %v597 = vrot.slane %v164, 2
    %v598 = vsel %vm571, %v595, %v597
    %v599 = vrot.slane %v165, 2
    %v600 = vsel %vm571, %v597, %v599
    %v601 = vrot.slane %v166, 2
    %v602 = vsel %vm571, %v599, %v601
    %v619 = vsel %vm571, %v601, 0.0
    %v620 = vpack.c.bf16 %v576, %v574
    %v621 = vpack.c.bf16 %v580, %v578
    %v622 = vpack.c.bf16 %v584, %v582
    %v623 = vpack.c.bf16 %v588, %v586
    %v624 = vpack.c.bf16 %v592, %v590
    %v625 = vpack.c.bf16 %v596, %v594
    %v626 = vpack.c.bf16 %v600, %v598
    %v627 = vpack.c.bf16 %v619, %v602
    %s628 = scalar_lea.vmem [#allocation2], 128
    %v629 = vld [vmem:[%s628] sm:$0xf]
    %v630 = vld [vmem:[%s628 + $0x4] sm:$0xf]
    %v631 = vld [vmem:[%s628 + $0x8] sm:$0xf]
    %v632 = vld [vmem:[%s628 + $0xc] sm:$0xf]
    %v633 = vld [vmem:[%s628 + $0x10] sm:$0xf]
    %v634 = vld [vmem:[%s628 + $0x14] sm:$0xf]
    %v635 = vld [vmem:[%s628 + $0x18] sm:$0xf]
    %v636 = vld [vmem:[%s628 + $0x1c] sm:$0xf]
    %v637 = vld [vmem:[%s628 + $0x20] sm:$0xf]
    %v638 = vld [vmem:[%s628 + $0x24] sm:$0xf]
    %v639 = vld [vmem:[%s628 + $0x28] sm:$0xf]
    %v640 = vld [vmem:[%s628 + $0x2c] sm:$0xf]
    %v641 = vld [vmem:[%s628 + $0x30] sm:$0xf]
    %v642 = vld [vmem:[%s628 + $0x34] sm:$0xf]
    %v643 = vld [vmem:[%s628 + $0x38] sm:$0xf]
    %v644 = vld [vmem:[%s628 + $0x3c] sm:$0xf]
    %v661 = vunpack.c.l.b16 %v629
    %v662 = vunpack.c.l.b16 %v630
    %v663 = vunpack.c.l.b16 %v631
    %v664 = vunpack.c.l.b16 %v632
    %v665 = vunpack.c.l.b16 %v633
    %v666 = vunpack.c.l.b16 %v634
    %v667 = vunpack.c.l.b16 %v635
    %v668 = vunpack.c.l.b16 %v636
    %v669 = vunpack.c.l.b16 %v637
    %v670 = vunpack.c.l.b16 %v638
    %v671 = vunpack.c.l.b16 %v639
    %v672 = vunpack.c.l.b16 %v640
    %v673 = vunpack.c.l.b16 %v641
    %v674 = vunpack.c.l.b16 %v642
    %v675 = vunpack.c.l.b16 %v643
    %v676 = vunpack.c.l.b16 %v644
    %v677 = vpack.c.b16 %v662, %v661
    %v678 = vpack.c.b16 %v664, %v663
    %v679 = vpack.c.b16 %v666, %v665
    %v680 = vpack.c.b16 %v668, %v667
    %v681 = vpack.c.b16 %v670, %v669
    %v682 = vpack.c.b16 %v672, %v671
    %v683 = vpack.c.b16 %v674, %v673
    %v684 = vpack.c.b16 %v676, %v675
    %693 = vmatprep.subr.bf16.mxu0 0
    %694 = vmatpush1.bf16.msra.mxu0 %v684
    %695 = vmatprep.subr.bf16.mxu0 0
    %696 = vmatpush1.bf16.msra.mxu0 %v683
    %697 = vmatprep.subr.bf16.mxu0 0
    %698 = vmatpush1.bf16.msra.mxu0 %v682
    %699 = vmatprep.subr.bf16.mxu0 0
    %700 = vmatpush1.bf16.msra.mxu0 %v681
    %701 = vmatprep.subr.bf16.mxu0 0
    %702 = vmatpush1.bf16.msra.mxu0 %v680
    %703 = vmatprep.subr.bf16.mxu0 0
    %704 = vmatpush1.bf16.msra.mxu0 %v679
    %705 = vmatprep.subr.bf16.mxu0 0
    %706 = vmatpush1.bf16.msra.mxu0 %v678
    %707 = vmatprep.subr.bf16.mxu0 0
    %708 = vmatpush1.bf16.msra.mxu0 %v677
    %709 = vmatprep.subr.bf16.mxu0 0
    %710 = vmatpush2.bf16.msra.mxu0 0
    %711 = vmatprep.subr.bf16.mxu0 0
    %712 = vmatpush2.bf16.msra.mxu0 0
    %713 = vmatprep.subr.bf16.mxu0 0
    %714 = vmatpush2.bf16.msra.mxu0 0
    %715 = vmatprep.subr.bf16.mxu0 0
    %716 = vmatpush2.bf16.msra.mxu0 0
    %717 = vmatprep.subr.bf16.mxu0 0
    %718 = vmatpush2.bf16.msra.mxu0 0
    %719 = vmatprep.subr.bf16.mxu0 0
    %720 = vmatpush2.bf16.msra.mxu0 0
    %721 = vmatprep.subr.bf16.mxu0 0
    %722 = vmatpush2.bf16.msra.mxu0 0
    %723 = vmatprep.subr.bf16.mxu0 0
    %724 = vmatpush2.bf16.msra.mxu0 0
    %725 = vmatprep.mubr.bf16.mxu0 0
    %726 = vmatmul.mubr.bf16.gmra.mxu0 %v620
    %v727 = vpop.f32.mrf.mxu0
    %v728 = vadd.f32 0.0, %v727
    %v729 = vpop.f32.mrf.mxu0
    %v730 = vpop.f32.mrf.mxu0
    %v731 = vadd.f32 0.0, %v730
    %v732 = vpop.f32.mrf.mxu0
    %733 = vmatprep.mubr.bf16.mxu0 0
    %734 = vmatmul.mubr.bf16.gmra.mxu0 %v621
    %v735 = vpop.f32.mrf.mxu0
    %v736 = vadd.f32 0.0, %v735
    %v737 = vpop.f32.mrf.mxu0
    %v738 = vpop.f32.mrf.mxu0
    %v739 = vadd.f32 0.0, %v738
    %v740 = vpop.f32.mrf.mxu0
    %741 = vmatprep.mubr.bf16.mxu0 0
    %742 = vmatmul.mubr.bf16.gmra.mxu0 %v622
    %v743 = vpop.f32.mrf.mxu0
    %v744 = vadd.f32 0.0, %v743
    %v745 = vpop.f32.mrf.mxu0
    %v746 = vpop.f32.mrf.mxu0
    %v747 = vadd.f32 0.0, %v746
    %v748 = vpop.f32.mrf.mxu0
    %749 = vmatprep.mubr.bf16.mxu0 0
    %750 = vmatmul.mubr.bf16.gmra.mxu0 %v623
    %v751 = vpop.f32.mrf.mxu0
    %v752 = vadd.f32 0.0, %v751
    %v753 = vpop.f32.mrf.mxu0
    %v754 = vpop.f32.mrf.mxu0
    %v755 = vadd.f32 0.0, %v754
    %v756 = vpop.f32.mrf.mxu0
    %757 = vmatprep.mubr.bf16.mxu0 0
    %758 = vmatmul.mubr.bf16.gmra.mxu0 %v624
    %v759 = vpop.f32.mrf.mxu0
    %v760 = vadd.f32 0.0, %v759
    %v761 = vpop.f32.mrf.mxu0
    %v762 = vpop.f32.mrf.mxu0
    %v763 = vadd.f32 0.0, %v762
    %v764 = vpop.f32.mrf.mxu0
    %765 = vmatprep.mubr.bf16.mxu0 0
    %766 = vmatmul.mubr.bf16.gmra.mxu0 %v625
    %v767 = vpop.f32.mrf.mxu0
    %v768 = vadd.f32 0.0, %v767
    %v769 = vpop.f32.mrf.mxu0
    %v770 = vpop.f32.mrf.mxu0
    %v771 = vadd.f32 0.0, %v770
    %v772 = vpop.f32.mrf.mxu0
    %773 = vmatprep.mubr.bf16.mxu0 0
    %774 = vmatmul.mubr.bf16.gmra.mxu0 %v626
    %v775 = vpop.f32.mrf.mxu0
    %v776 = vadd.f32 0.0, %v775
    %v777 = vpop.f32.mrf.mxu0
    %v778 = vpop.f32.mrf.mxu0
    %v779 = vadd.f32 0.0, %v778
    %v780 = vpop.f32.mrf.mxu0
    %781 = vmatprep.mubr.bf16.mxu0 0
    %782 = vmatmul.mubr.bf16.gmra.mxu0 %v627
    %v783 = vpop.f32.mrf.mxu0
    %v784 = vadd.f32 0.0, %v783
    %v785 = vpop.f32.mrf.mxu0
    %v786 = vpop.f32.mrf.mxu0
    %v787 = vadd.f32 0.0, %v786
    %v788 = vpop.f32.mrf.mxu0
    %789 = vdwg.mxu0
    %v790 = vadd.f32 %v509, %v728
    %v791 = vadd.f32 %v512, %v731
    %v792 = vadd.f32 %v517, %v736
    %v793 = vadd.f32 %v520, %v739
    %v794 = vadd.f32 %v525, %v744
    %v795 = vadd.f32 %v528, %v747
    %v796 = vadd.f32 %v533, %v752
    %v797 = vadd.f32 %v536, %v755
    %v798 = vadd.f32 %v541, %v760
    %v799 = vadd.f32 %v544, %v763
    %v800 = vadd.f32 %v549, %v768
    %v801 = vadd.f32 %v552, %v771
    %v802 = vadd.f32 %v557, %v776
    %v803 = vadd.f32 %v560, %v779
    %v804 = vadd.f32 %v565, %v784
    %v805 = vadd.f32 %v568, %v787
    %v806 = vld [vmem:[%s3] sm:$0x1]
    %v808 = vlaneseq
    %v809 = vshrl.u32 %v808, 7
    %v810 = vsub.s32 0, %v809
    %v811 = vrot.slane %v806, %v810
    %v813 = vadd.f32 %v790, %v811
    %v814 = vadd.f32 %v791, %v811
    %v815 = vadd.f32 %v792, %v811
    %v816 = vadd.f32 %v793, %v811
    %v817 = vadd.f32 %v794, %v811
    %v818 = vadd.f32 %v795, %v811
    %v819 = vadd.f32 %v796, %v811
    %v820 = vadd.f32 %v797, %v811
    %v821 = vadd.f32 %v798, %v811
    %v822 = vadd.f32 %v799, %v811
    %v823 = vadd.f32 %v800, %v811
    %v824 = vadd.f32 %v801, %v811
    %v825 = vadd.f32 %v802, %v811
    %v826 = vadd.f32 %v803, %v811
    %v827 = vadd.f32 %v804, %v811
    %v828 = vadd.f32 %v805, %v811
    %vm829 = vcmp.lt.f32.partialorder %v135, 14.0
    %vm830 = vcmp.lt.f32.partialorder %v136, 14.0
    %vm831 = vcmp.lt.f32.partialorder %v137, 14.0
    %vm832 = vcmp.lt.f32.partialorder %v138, 14.0
    %vm833 = vcmp.lt.f32.partialorder %v139, 14.0
    %vm834 = vcmp.lt.f32.partialorder %v140, 14.0
    %vm835 = vcmp.lt.f32.partialorder %v141, 14.0
    %vm836 = vcmp.lt.f32.partialorder %v142, 14.0
    %vm837 = vcmp.lt.f32.partialorder %v143, 14.0
    %vm838 = vcmp.lt.f32.partialorder %v144, 14.0
    %vm839 = vcmp.lt.f32.partialorder %v145, 14.0
    %vm840 = vcmp.lt.f32.partialorder %v146, 14.0
    %vm841 = vcmp.lt.f32.partialorder %v147, 14.0
    %vm842 = vcmp.lt.f32.partialorder %v148, 14.0
    %vm843 = vcmp.lt.f32.partialorder %v149, 14.0
    %vm844 = vcmp.lt.f32.partialorder %v150, 14.0
    %v845 = vsel %vm829, 1, 0
    %v846 = vsel %vm830, 1, 0
    %v847 = vsel %vm831, 1, 0
    %v848 = vsel %vm832, 1, 0
    %v849 = vsel %vm833, 1, 0
    %v850 = vsel %vm834, 1, 0
    %v851 = vsel %vm835, 1, 0
    %v852 = vsel %vm836, 1, 0
    %v853 = vsel %vm837, 1, 0
    %v854 = vsel %vm838, 1, 0
    %v855 = vsel %vm839, 1, 0
    %v856 = vsel %vm840, 1, 0
    %v857 = vsel %vm841, 1, 0
    %v858 = vsel %vm842, 1, 0
    %v859 = vsel %vm843, 1, 0
    %v860 = vsel %vm844, 1, 0
    %v861 = vcvt.s32.f32 %v845
    %v862 = vcvt.s32.f32 %v846
    %v863 = vcvt.s32.f32 %v847
    %v864 = vcvt.s32.f32 %v848
    %v865 = vcvt.s32.f32 %v849
    %v866 = vcvt.s32.f32 %v850
    %v867 = vcvt.s32.f32 %v851
    %v868 = vcvt.s32.f32 %v852
    %v869 = vcvt.s32.f32 %v853
    %v870 = vcvt.s32.f32 %v854
    %v871 = vcvt.s32.f32 %v855
    %v872 = vcvt.s32.f32 %v856
    %v873 = vcvt.s32.f32 %v857
    %v874 = vcvt.s32.f32 %v858
    %v875 = vcvt.s32.f32 %v859
    %v876 = vcvt.s32.f32 %v860
    %v877 = vld [vmem:[%s4] sm:$0x1]
    %v878 = vld [vmem:[%s5] sm:$0x1]
    %880 = vset.pattern.permute.xlu0 0
    %881 = vperm.xlu0 %880, %v861
    %v882 = vpop.permute.xlu0 %881
    %885 = vset.pattern.permute.xlu0 0
    %886 = vperm.xlu0 %885, %v862
    %v887 = vpop.permute.xlu0 %886
    %890 = vset.pattern.permute.xlu0 0
    %891 = vperm.xlu0 %890, %v863
    %v892 = vpop.permute.xlu0 %891
    %895 = vset.pattern.permute.xlu0 0
    %896 = vperm.xlu0 %895, %v864
    %v897 = vpop.permute.xlu0 %896
    %900 = vset.pattern.permute.xlu0 0
    %901 = vperm.xlu0 %900, %v865
    %v902 = vpop.permute.xlu0 %901
    %905 = vset.pattern.permute.xlu0 0
    %906 = vperm.xlu0 %905, %v866
    %v907 = vpop.permute.xlu0 %906
    %910 = vset.pattern.permute.xlu0 0
    %911 = vperm.xlu0 %910, %v867
    %v912 = vpop.permute.xlu0 %911
    %915 = vset.pattern.permute.xlu0 0
    %916 = vperm.xlu0 %915, %v868
    %v917 = vpop.permute.xlu0 %916
    %920 = vset.pattern.permute.xlu0 0
    %921 = vperm.xlu0 %920, %v869
    %v922 = vpop.permute.xlu0 %921
    %925 = vset.pattern.permute.xlu0 0
    %926 = vperm.xlu0 %925, %v870
    %v927 = vpop.permute.xlu0 %926
    %930 = vset.pattern.permute.xlu0 0
    %931 = vperm.xlu0 %930, %v871
    %v932 = vpop.permute.xlu0 %931
    %935 = vset.pattern.permute.xlu0 0
    %936 = vperm.xlu0 %935, %v872
    %v937 = vpop.permute.xlu0 %936
    %940 = vset.pattern.permute.xlu0 0
    %941 = vperm.xlu0 %940, %v873
    %v942 = vpop.permute.xlu0 %941
    %945 = vset.pattern.permute.xlu0 0
    %946 = vperm.xlu0 %945, %v874
    %v947 = vpop.permute.xlu0 %946
    %950 = vset.pattern.permute.xlu0 0
    %951 = vperm.xlu0 %950, %v875
    %v952 = vpop.permute.xlu0 %951
    %955 = vset.pattern.permute.xlu0 0
    %956 = vperm.xlu0 %955, %v876
    %v957 = vpop.permute.xlu0 %956
    %v959 = vmul.f32 %v813, %v882
    %v960 = vmul.f32 %v814, %v887
    %v961 = vmul.f32 %v815, %v892
    %v962 = vmul.f32 %v816, %v897
    %v963 = vmul.f32 %v817, %v902
    %v964 = vmul.f32 %v818, %v907
    %v965 = vmul.f32 %v819, %v912
    %v966 = vmul.f32 %v820, %v917
    %v967 = vmul.f32 %v821, %v922
    %v968 = vmul.f32 %v822, %v927
    %v969 = vmul.f32 %v823, %v932
    %v970 = vmul.f32 %v824, %v937
    %v971 = vmul.f32 %v825, %v942
    %v972 = vmul.f32 %v826, %v947
    %v973 = vmul.f32 %v827, %v952
    %v974 = vmul.f32 %v828, %v957
    %v975 = vadd.f32 %v959, %v960
    %v976 = vadd.f32 %v975, %v961
    %v977 = vadd.f32 %v976, %v962
    %v978 = vadd.f32 %v977, %v963
    %v979 = vadd.f32 %v978, %v964
    %v980 = vadd.f32 %v979, %v965
    %v981 = vadd.f32 %v980, %v966
    %v982 = vadd.f32 %v981, %v967
    %v983 = vadd.f32 %v982, %v968
    %v984 = vadd.f32 %v983, %v969
    %v985 = vadd.f32 %v984, %v970
    %v986 = vadd.f32 %v985, %v971
    %v987 = vadd.f32 %v986, %v972
    %v988 = vadd.f32 %v987, %v973
    %v989 = vadd.f32 %v988, %v974
    %v990 = vrot.slane %v989, 4
    %v991 = vadd.f32 %v989, %v990
    %v992 = vrot.slane %v991, 2
    %v993 = vadd.f32 %v991, %v992
    %v994 = vrot.slane %v993, 1
    %v995 = vadd.f32 %v993, %v994
    %v996 = vmul.f32 %v995, 0.008928572
    %v997 = vmul.f32 %v959, %v813
    %v998 = vmul.f32 %v960, %v814
    %v999 = vmul.f32 %v961, %v815
    %v1000 = vmul.f32 %v962, %v816
    %v1001 = vmul.f32 %v963, %v817
    %v1002 = vmul.f32 %v964, %v818
    %v1003 = vmul.f32 %v965, %v819
    %v1004 = vmul.f32 %v966, %v820
    %v1005 = vmul.f32 %v967, %v821
    %v1006 = vmul.f32 %v968, %v822
    %v1007 = vmul.f32 %v969, %v823
    %v1008 = vmul.f32 %v970, %v824
    %v1009 = vmul.f32 %v971, %v825
    %v1010 = vmul.f32 %v972, %v826
    %v1011 = vmul.f32 %v973, %v827
    %v1012 = vmul.f32 %v974, %v828
    %v1013 = vadd.f32 %v997, %v998
    %v1014 = vadd.f32 %v1013, %v999
    %v1015 = vadd.f32 %v1014, %v1000
    %v1016 = vadd.f32 %v1015, %v1001
    %v1017 = vadd.f32 %v1016, %v1002
    %v1018 = vadd.f32 %v1017, %v1003
    %v1019 = vadd.f32 %v1018, %v1004
    %v1020 = vadd.f32 %v1019, %v1005
    %v1021 = vadd.f32 %v1020, %v1006
    %v1022 = vadd.f32 %v1021, %v1007
    %v1023 = vadd.f32 %v1022, %v1008
    %v1024 = vadd.f32 %v1023, %v1009
    %v1025 = vadd.f32 %v1024, %v1010
    %v1026 = vadd.f32 %v1025, %v1011
    %v1027 = vadd.f32 %v1026, %v1012
    %v1028 = vrot.slane %v1027, 4
    %v1029 = vadd.f32 %v1027, %v1028
    %v1030 = vrot.slane %v1029, 2
    %v1031 = vadd.f32 %v1029, %v1030
    %v1032 = vrot.slane %v1031, 1
    %v1033 = vadd.f32 %v1031, %v1032
    %v1034 = vmul.f32 %v1033, 0.008928572
    %v1035 = vmul.f32 %v996, %v996
    %v1036 = vsub.f32 %v1034, %v1035
    %v1037 = vsub.f32 %v813, %v996
    %v1038 = vsub.f32 %v814, %v996
    %v1039 = vsub.f32 %v815, %v996
    %v1040 = vsub.f32 %v816, %v996
    %v1041 = vsub.f32 %v817, %v996
    %v1042 = vsub.f32 %v818, %v996
    %v1043 = vsub.f32 %v819, %v996
    %v1044 = vsub.f32 %v820, %v996
    %v1045 = vsub.f32 %v821, %v996
    %v1046 = vsub.f32 %v822, %v996
    %v1047 = vsub.f32 %v823, %v996
    %v1048 = vsub.f32 %v824, %v996
    %v1049 = vsub.f32 %v825, %v996
    %v1050 = vsub.f32 %v826, %v996
    %v1051 = vsub.f32 %v827, %v996
    %v1052 = vsub.f32 %v828, %v996
    %v1054 = vlaneseq
    %v1055 = vshrl.u32 %v1054, 7
    %v1056 = vsub.s32 0, %v1055
    %v1057 = vrot.slane %v877, %v1056
    %v1059 = vmul.f32 %v1057, %v1037
    %v1060 = vmul.f32 %v1057, %v1038
    %v1061 = vmul.f32 %v1057, %v1039
    %v1062 = vmul.f32 %v1057, %v1040
    %v1063 = vmul.f32 %v1057, %v1041
    %v1064 = vmul.f32 %v1057, %v1042
    %v1065 = vmul.f32 %v1057, %v1043
    %v1066 = vmul.f32 %v1057, %v1044
    %v1067 = vmul.f32 %v1057, %v1045
    %v1068 = vmul.f32 %v1057, %v1046
    %v1069 = vmul.f32 %v1057, %v1047
    %v1070 = vmul.f32 %v1057, %v1048
    %v1071 = vmul.f32 %v1057, %v1049
    %v1072 = vmul.f32 %v1057, %v1050
    %v1073 = vmul.f32 %v1057, %v1051
    %v1074 = vmul.f32 %v1057, %v1052
    %v1075 = vadd.f32 %v1036, 1e-05
    %v1076 = vrsqrt.pop %v1075
    %v1077 = vmul.f32 %v1059, %v1076
    %v1078 = vmul.f32 %v1060, %v1076
    %v1079 = vmul.f32 %v1061, %v1076
    %v1080 = vmul.f32 %v1062, %v1076
    %v1081 = vmul.f32 %v1063, %v1076
    %v1082 = vmul.f32 %v1064, %v1076
    %v1083 = vmul.f32 %v1065, %v1076
    %v1084 = vmul.f32 %v1066, %v1076
    %v1085 = vmul.f32 %v1067, %v1076
    %v1086 = vmul.f32 %v1068, %v1076
    %v1087 = vmul.f32 %v1069, %v1076
    %v1088 = vmul.f32 %v1070, %v1076
    %v1089 = vmul.f32 %v1071, %v1076
    %v1090 = vmul.f32 %v1072, %v1076
    %v1091 = vmul.f32 %v1073, %v1076
    %v1092 = vmul.f32 %v1074, %v1076
    %v1094 = vlaneseq
    %v1095 = vshrl.u32 %v1094, 7
    %v1096 = vsub.s32 0, %v1095
    %v1097 = vrot.slane %v878, %v1096
    %v1099 = vadd.f32 %v1077, %v1097
    %v1100 = vadd.f32 %v1078, %v1097
    %v1101 = vadd.f32 %v1079, %v1097
    %v1102 = vadd.f32 %v1080, %v1097
    %v1103 = vadd.f32 %v1081, %v1097
    %v1104 = vadd.f32 %v1082, %v1097
    %v1105 = vadd.f32 %v1083, %v1097
    %v1106 = vadd.f32 %v1084, %v1097
    %v1107 = vadd.f32 %v1085, %v1097
    %v1108 = vadd.f32 %v1086, %v1097
    %v1109 = vadd.f32 %v1087, %v1097
    %v1110 = vadd.f32 %v1088, %v1097
    %v1111 = vadd.f32 %v1089, %v1097
    %v1112 = vadd.f32 %v1090, %v1097
    %v1113 = vadd.f32 %v1091, %v1097
    %v1114 = vadd.f32 %v1092, %v1097
    %v1115 = vmax.f32 %v1099, 0.0
    %v1116 = vmax.f32 %v1100, 0.0
    %v1117 = vmax.f32 %v1101, 0.0
    %v1118 = vmax.f32 %v1102, 0.0
    %v1119 = vmax.f32 %v1103, 0.0
    %v1120 = vmax.f32 %v1104, 0.0
    %v1121 = vmax.f32 %v1105, 0.0
    %v1122 = vmax.f32 %v1106, 0.0
    %v1123 = vmax.f32 %v1107, 0.0
    %v1124 = vmax.f32 %v1108, 0.0
    %v1125 = vmax.f32 %v1109, 0.0
    %v1126 = vmax.f32 %v1110, 0.0
    %v1127 = vmax.f32 %v1111, 0.0
    %v1128 = vmax.f32 %v1112, 0.0
    %v1129 = vmax.f32 %v1113, 0.0
    %v1130 = vmax.f32 %v1114, 0.0
    %v1131 = vpack.c.bf16 %v1116, %v1115
    %v1132 = vpack.c.bf16 %v1118, %v1117
    %v1133 = vpack.c.bf16 %v1120, %v1119
    %v1134 = vpack.c.bf16 %v1122, %v1121
    %v1135 = vpack.c.bf16 %v1124, %v1123
    %v1136 = vpack.c.bf16 %v1126, %v1125
    %v1137 = vpack.c.bf16 %v1128, %v1127
    %v1138 = vpack.c.bf16 %v1130, %v1129
    %v1139 = vld [vmem:[#allocation5] sm:$0xf]
    %v1140 = vld [vmem:[#allocation5 + $0x4] sm:$0xf]
    %v1141 = vld [vmem:[#allocation5 + $0x8] sm:$0xf]
    %v1142 = vld [vmem:[#allocation5 + $0xc] sm:$0xf]
    %v1143 = vld [vmem:[#allocation5 + $0x10] sm:$0xf]
    %v1144 = vld [vmem:[#allocation5 + $0x14] sm:$0xf]
    %v1145 = vld [vmem:[#allocation5 + $0x18] sm:$0xf]
    %v1146 = vld [vmem:[#allocation5 + $0x1c] sm:$0xf]
    %v1147 = vld [vmem:[#allocation5 + $0x20] sm:$0xf]
    %v1148 = vld [vmem:[#allocation5 + $0x24] sm:$0xf]
    %v1149 = vld [vmem:[#allocation5 + $0x28] sm:$0xf]
    %v1150 = vld [vmem:[#allocation5 + $0x2c] sm:$0xf]
    %v1151 = vld [vmem:[#allocation5 + $0x30] sm:$0xf]
    %v1152 = vld [vmem:[#allocation5 + $0x34] sm:$0xf]
    %v1153 = vld [vmem:[#allocation5 + $0x38] sm:$0xf]
    %v1154 = vld [vmem:[#allocation5 + $0x3c] sm:$0xf]
    %v1171 = vrot.slane %v1115, 1
    %v1172 = vrot.slane %v1116, 1
    %v1173 = vsel %vm207, %v1171, %v1172
    %v1174 = vrot.slane %v1117, 1
    %v1175 = vsel %vm207, %v1172, %v1174
    %v1176 = vrot.slane %v1118, 1
    %v1177 = vsel %vm207, %v1174, %v1176
    %v1178 = vrot.slane %v1119, 1
    %v1179 = vsel %vm207, %v1176, %v1178
    %v1180 = vrot.slane %v1120, 1
    %v1181 = vsel %vm207, %v1178, %v1180
    %v1182 = vrot.slane %v1121, 1
    %v1183 = vsel %vm207, %v1180, %v1182
    %v1184 = vrot.slane %v1122, 1
    %v1185 = vsel %vm207, %v1182, %v1184
    %v1186 = vrot.slane %v1123, 1
    %v1187 = vsel %vm207, %v1184, %v1186
    %v1188 = vrot.slane %v1124, 1
    %v1189 = vsel %vm207, %v1186, %v1188
    %v1190 = vrot.slane %v1125, 1
    %v1191 = vsel %vm207, %v1188, %v1190
    %v1192 = vrot.slane %v1126, 1
    %v1193 = vsel %vm207, %v1190, %v1192
    %v1194 = vrot.slane %v1127, 1
    %v1195 = vsel %vm207, %v1192, %v1194
    %v1196 = vrot.slane %v1128, 1
    %v1197 = vsel %vm207, %v1194, %v1196
    %v1198 = vrot.slane %v1129, 1
    %v1199 = vsel %vm207, %v1196, %v1198
    %v1200 = vrot.slane %v1130, 1
    %v1201 = vsel %vm207, %v1198, %v1200
    %v1218 = vsel %vm207, %v1200, 0.0
    %v1219 = vpack.c.bf16 %v1175, %v1173
    %v1220 = vpack.c.bf16 %v1179, %v1177
    %v1221 = vpack.c.bf16 %v1183, %v1181
    %v1222 = vpack.c.bf16 %v1187, %v1185
    %v1223 = vpack.c.bf16 %v1191, %v1189
    %v1224 = vpack.c.bf16 %v1195, %v1193
    %v1225 = vpack.c.bf16 %v1199, %v1197
    %v1226 = vpack.c.bf16 %v1218, %v1201
    %s1227 = scalar_lea.vmem [#allocation5], 64
    %v1228 = vld [vmem:[%s1227] sm:$0xf]
    %v1229 = vld [vmem:[%s1227 + $0x4] sm:$0xf]
    %v1230 = vld [vmem:[%s1227 + $0x8] sm:$0xf]
    %v1231 = vld [vmem:[%s1227 + $0xc] sm:$0xf]
    %v1232 = vld [vmem:[%s1227 + $0x10] sm:$0xf]
    %v1233 = vld [vmem:[%s1227 + $0x14] sm:$0xf]
    %v1234 = vld [vmem:[%s1227 + $0x18] sm:$0xf]
    %v1235 = vld [vmem:[%s1227 + $0x1c] sm:$0xf]
    %v1236 = vld [vmem:[%s1227 + $0x20] sm:$0xf]
    %v1237 = vld [vmem:[%s1227 + $0x24] sm:$0xf]
    %v1238 = vld [vmem:[%s1227 + $0x28] sm:$0xf]
    %v1239 = vld [vmem:[%s1227 + $0x2c] sm:$0xf]
    %v1240 = vld [vmem:[%s1227 + $0x30] sm:$0xf]
    %v1241 = vld [vmem:[%s1227 + $0x34] sm:$0xf]
    %v1242 = vld [vmem:[%s1227 + $0x38] sm:$0xf]
    %v1243 = vld [vmem:[%s1227 + $0x3c] sm:$0xf]
    %v1260 = vunpack.c.l.b16 %v1228
    %v1261 = vunpack.c.l.b16 %v1229
    %v1262 = vunpack.c.l.b16 %v1230
    %v1263 = vunpack.c.l.b16 %v1231
    %v1264 = vunpack.c.l.b16 %v1232
    %v1265 = vunpack.c.l.b16 %v1233
    %v1266 = vunpack.c.l.b16 %v1234
    %v1267 = vunpack.c.l.b16 %v1235
    %v1268 = vunpack.c.l.b16 %v1236
    %v1269 = vunpack.c.l.b16 %v1237
    %v1270 = vunpack.c.l.b16 %v1238
    %v1271 = vunpack.c.l.b16 %v1239
    %v1272 = vunpack.c.l.b16 %v1240
    %v1273 = vunpack.c.l.b16 %v1241
    %v1274 = vunpack.c.l.b16 %v1242
    %v1275 = vunpack.c.l.b16 %v1243
    %v1276 = vpack.c.b16 %v1261, %v1260
    %v1277 = vpack.c.b16 %v1263, %v1262
    %v1278 = vpack.c.b16 %v1265, %v1264
    %v1279 = vpack.c.b16 %v1267, %v1266
    %v1280 = vpack.c.b16 %v1269, %v1268
    %v1281 = vpack.c.b16 %v1271, %v1270
    %v1282 = vpack.c.b16 %v1273, %v1272
    %v1283 = vpack.c.b16 %v1275, %v1274
    %1292 = vmatprep.subr.bf16.mxu0 0
    %1293 = vmatpush1.bf16.msra.mxu0 %v1283
    %1294 = vmatprep.subr.bf16.mxu0 0
    %1295 = vmatpush1.bf16.msra.mxu0 %v1282
    %1296 = vmatprep.subr.bf16.mxu0 0
    %1297 = vmatpush1.bf16.msra.mxu0 %v1281
    %1298 = vmatprep.subr.bf16.mxu0 0
    %1299 = vmatpush1.bf16.msra.mxu0 %v1280
    %1300 = vmatprep.subr.bf16.mxu0 0
    %1301 = vmatpush1.bf16.msra.mxu0 %v1279
    %1302 = vmatprep.subr.bf16.mxu0 0
    %1303 = vmatpush1.bf16.msra.mxu0 %v1278
    %1304 = vmatprep.subr.bf16.mxu0 0
    %1305 = vmatpush1.bf16.msra.mxu0 %v1277
    %1306 = vmatprep.subr.bf16.mxu0 0
    %1307 = vmatpush1.bf16.msra.mxu0 %v1276
    %1308 = vmatprep.subr.bf16.mxu0 0
    %1309 = vmatpush2.bf16.msra.mxu0 0
    %1310 = vmatprep.subr.bf16.mxu0 0
    %1311 = vmatpush2.bf16.msra.mxu0 0
    %1312 = vmatprep.subr.bf16.mxu0 0
    %1313 = vmatpush2.bf16.msra.mxu0 0
    %1314 = vmatprep.subr.bf16.mxu0 0
    %1315 = vmatpush2.bf16.msra.mxu0 0
    %1316 = vmatprep.subr.bf16.mxu0 0
    %1317 = vmatpush2.bf16.msra.mxu0 0
    %1318 = vmatprep.subr.bf16.mxu0 0
    %1319 = vmatpush2.bf16.msra.mxu0 0
    %1320 = vmatprep.subr.bf16.mxu0 0
    %1321 = vmatpush2.bf16.msra.mxu0 0
    %1322 = vmatprep.subr.bf16.mxu0 0
    %1323 = vmatpush2.bf16.msra.mxu0 0
    %1324 = vmatprep.mubr.bf16.mxu0 0
    %1325 = vmatmul.mubr.bf16.gmra.mxu0 %v1219
    %v1326 = vpop.f32.mrf.mxu0
    %v1327 = vadd.f32 0.0, %v1326
    %v1328 = vpop.f32.mrf.mxu0
    %v1329 = vpop.f32.mrf.mxu0
    %v1330 = vadd.f32 0.0, %v1329
    %v1331 = vpop.f32.mrf.mxu0
    %1332 = vmatprep.mubr.bf16.mxu0 0
    %1333 = vmatmul.mubr.bf16.gmra.mxu0 %v1220
    %v1334 = vpop.f32.mrf.mxu0
    %v1335 = vadd.f32 0.0, %v1334
    %v1336 = vpop.f32.mrf.mxu0
    %v1337 = vpop.f32.mrf.mxu0
    %v1338 = vadd.f32 0.0, %v1337
    %v1339 = vpop.f32.mrf.mxu0
    %1340 = vmatprep.mubr.bf16.mxu0 0
    %1341 = vmatmul.mubr.bf16.gmra.mxu0 %v1221
    %v1342 = vpop.f32.mrf.mxu0
    %v1343 = vadd.f32 0.0, %v1342
    %v1344 = vpop.f32.mrf.mxu0
    %v1345 = vpop.f32.mrf.mxu0
    %v1346 = vadd.f32 0.0, %v1345
    %v1347 = vpop.f32.mrf.mxu0
    %1348 = vmatprep.mubr.bf16.mxu0 0
    %1349 = vmatmul.mubr.bf16.gmra.mxu0 %v1222
    %v1350 = vpop.f32.mrf.mxu0
    %v1351 = vadd.f32 0.0, %v1350
    %v1352 = vpop.f32.mrf.mxu0
    %v1353 = vpop.f32.mrf.mxu0
    %v1354 = vadd.f32 0.0, %v1353
    %v1355 = vpop.f32.mrf.mxu0
    %1356 = vmatprep.mubr.bf16.mxu0 0
    %1357 = vmatmul.mubr.bf16.gmra.mxu0 %v1223
    %v1358 = vpop.f32.mrf.mxu0
    %v1359 = vadd.f32 0.0, %v1358
    %v1360 = vpop.f32.mrf.mxu0
    %v1361 = vpop.f32.mrf.mxu0
    %v1362 = vadd.f32 0.0, %v1361
    %v1363 = vpop.f32.mrf.mxu0
    %1364 = vmatprep.mubr.bf16.mxu0 0
    %1365 = vmatmul.mubr.bf16.gmra.mxu0 %v1224
    %v1366 = vpop.f32.mrf.mxu0
    %v1367 = vadd.f32 0.0, %v1366
    %v1368 = vpop.f32.mrf.mxu0
    %v1369 = vpop.f32.mrf.mxu0
    %v1370 = vadd.f32 0.0, %v1369
    %v1371 = vpop.f32.mrf.mxu0
    %1372 = vmatprep.mubr.bf16.mxu0 0
    %1373 = vmatmul.mubr.bf16.gmra.mxu0 %v1225
    %v1374 = vpop.f32.mrf.mxu0
    %v1375 = vadd.f32 0.0, %v1374
    %v1376 = vpop.f32.mrf.mxu0
    %v1377 = vpop.f32.mrf.mxu0
    %v1378 = vadd.f32 0.0, %v1377
    %v1379 = vpop.f32.mrf.mxu0
    %1380 = vmatprep.mubr.bf16.mxu0 0
    %1381 = vmatmul.mubr.bf16.gmra.mxu0 %v1226
    %v1382 = vpop.f32.mrf.mxu0
    %v1383 = vadd.f32 0.0, %v1382
    %v1384 = vpop.f32.mrf.mxu0
    %v1385 = vpop.f32.mrf.mxu0
    %v1386 = vadd.f32 0.0, %v1385
    %v1387 = vpop.f32.mrf.mxu0
    %1388 = vdwg.mxu0
    %v1405 = vunpack.c.l.b16 %v1139
    %v1406 = vunpack.c.l.b16 %v1140
    %v1407 = vunpack.c.l.b16 %v1141
    %v1408 = vunpack.c.l.b16 %v1142
    %v1409 = vunpack.c.l.b16 %v1143
    %v1410 = vunpack.c.l.b16 %v1144
    %v1411 = vunpack.c.l.b16 %v1145
    %v1412 = vunpack.c.l.b16 %v1146
    %v1413 = vunpack.c.l.b16 %v1147
    %v1414 = vunpack.c.l.b16 %v1148
    %v1415 = vunpack.c.l.b16 %v1149
    %v1416 = vunpack.c.l.b16 %v1150
    %v1417 = vunpack.c.l.b16 %v1151
    %v1418 = vunpack.c.l.b16 %v1152
    %v1419 = vunpack.c.l.b16 %v1153
    %v1420 = vunpack.c.l.b16 %v1154
    %v1421 = vpack.c.b16 %v1406, %v1405
    %v1422 = vpack.c.b16 %v1408, %v1407
    %v1423 = vpack.c.b16 %v1410, %v1409
    %v1424 = vpack.c.b16 %v1412, %v1411
    %v1425 = vpack.c.b16 %v1414, %v1413
    %v1426 = vpack.c.b16 %v1416, %v1415
    %v1427 = vpack.c.b16 %v1418, %v1417
    %v1428 = vpack.c.b16 %v1420, %v1419
    %1437 = vmatprep.subr.bf16.mxu0 0
    %1438 = vmatpush1.bf16.msra.mxu0 %v1428
    %1439 = vmatprep.subr.bf16.mxu0 0
    %1440 = vmatpush1.bf16.msra.mxu0 %v1427
    %1441 = vmatprep.subr.bf16.mxu0 0
    %1442 = vmatpush1.bf16.msra.mxu0 %v1426
    %1443 = vmatprep.subr.bf16.mxu0 0
    %1444 = vmatpush1.bf16.msra.mxu0 %v1425
    %1445 = vmatprep.subr.bf16.mxu0 0
    %1446 = vmatpush1.bf16.msra.mxu0 %v1424
    %1447 = vmatprep.subr.bf16.mxu0 0
    %1448 = vmatpush1.bf16.msra.mxu0 %v1423
    %1449 = vmatprep.subr.bf16.mxu0 0
    %1450 = vmatpush1.bf16.msra.mxu0 %v1422
    %1451 = vmatprep.subr.bf16.mxu0 0
    %1452 = vmatpush1.bf16.msra.mxu0 %v1421
    %1453 = vmatprep.subr.bf16.mxu0 0
    %1454 = vmatpush2.bf16.msra.mxu0 0
    %1455 = vmatprep.subr.bf16.mxu0 0
    %1456 = vmatpush2.bf16.msra.mxu0 0
    %1457 = vmatprep.subr.bf16.mxu0 0
    %1458 = vmatpush2.bf16.msra.mxu0 0
    %1459 = vmatprep.subr.bf16.mxu0 0
    %1460 = vmatpush2.bf16.msra.mxu0 0
    %1461 = vmatprep.subr.bf16.mxu0 0
    %1462 = vmatpush2.bf16.msra.mxu0 0
    %1463 = vmatprep.subr.bf16.mxu0 0
    %1464 = vmatpush2.bf16.msra.mxu0 0
    %1465 = vmatprep.subr.bf16.mxu0 0
    %1466 = vmatpush2.bf16.msra.mxu0 0
    %1467 = vmatprep.subr.bf16.mxu0 0
    %1468 = vmatpush2.bf16.msra.mxu0 0
    %1469 = vmatprep.mubr.bf16.mxu0 0
    %1470 = vmatmul.mubr.bf16.gmra.mxu0 %v1131
    %v1471 = vpop.f32.mrf.mxu0
    %v1472 = vadd.f32 %v1327, %v1471
    %v1473 = vpop.f32.mrf.mxu0
    %v1474 = vpop.f32.mrf.mxu0
    %v1475 = vadd.f32 %v1330, %v1474
    %v1476 = vpop.f32.mrf.mxu0
    %1477 = vmatprep.mubr.bf16.mxu0 0
    %1478 = vmatmul.mubr.bf16.gmra.mxu0 %v1132
    %v1479 = vpop.f32.mrf.mxu0
    %v1480 = vadd.f32 %v1335, %v1479
    %v1481 = vpop.f32.mrf.mxu0
    %v1482 = vpop.f32.mrf.mxu0
    %v1483 = vadd.f32 %v1338, %v1482
    %v1484 = vpop.f32.mrf.mxu0
    %1485 = vmatprep.mubr.bf16.mxu0 0
    %1486 = vmatmul.mubr.bf16.gmra.mxu0 %v1133
    %v1487 = vpop.f32.mrf.mxu0
    %v1488 = vadd.f32 %v1343, %v1487
    %v1489 = vpop.f32.mrf.mxu0
    %v1490 = vpop.f32.mrf.mxu0
    %v1491 = vadd.f32 %v1346, %v1490
    %v1492 = vpop.f32.mrf.mxu0
    %1493 = vmatprep.mubr.bf16.mxu0 0
    %1494 = vmatmul.mubr.bf16.gmra.mxu0 %v1134
    %v1495 = vpop.f32.mrf.mxu0
    %v1496 = vadd.f32 %v1351, %v1495
    %v1497 = vpop.f32.mrf.mxu0
    %v1498 = vpop.f32.mrf.mxu0
    %v1499 = vadd.f32 %v1354, %v1498
    %v1500 = vpop.f32.mrf.mxu0
    %1501 = vmatprep.mubr.bf16.mxu0 0
    %1502 = vmatmul.mubr.bf16.gmra.mxu0 %v1135
    %v1503 = vpop.f32.mrf.mxu0
    %v1504 = vadd.f32 %v1359, %v1503
    %v1505 = vpop.f32.mrf.mxu0
    %v1506 = vpop.f32.mrf.mxu0
    %v1507 = vadd.f32 %v1362, %v1506
    %v1508 = vpop.f32.mrf.mxu0
    %1509 = vmatprep.mubr.bf16.mxu0 0
    %1510 = vmatmul.mubr.bf16.gmra.mxu0 %v1136
    %v1511 = vpop.f32.mrf.mxu0
    %v1512 = vadd.f32 %v1367, %v1511
    %v1513 = vpop.f32.mrf.mxu0
    %v1514 = vpop.f32.mrf.mxu0
    %v1515 = vadd.f32 %v1370, %v1514
    %v1516 = vpop.f32.mrf.mxu0
    %1517 = vmatprep.mubr.bf16.mxu0 0
    %1518 = vmatmul.mubr.bf16.gmra.mxu0 %v1137
    %v1519 = vpop.f32.mrf.mxu0
    %v1520 = vadd.f32 %v1375, %v1519
    %v1521 = vpop.f32.mrf.mxu0
    %v1522 = vpop.f32.mrf.mxu0
    %v1523 = vadd.f32 %v1378, %v1522
    %v1524 = vpop.f32.mrf.mxu0
    %1525 = vmatprep.mubr.bf16.mxu0 0
    %1526 = vmatmul.mubr.bf16.gmra.mxu0 %v1138
    %v1527 = vpop.f32.mrf.mxu0
    %v1528 = vadd.f32 %v1383, %v1527
    %v1529 = vpop.f32.mrf.mxu0
    %v1530 = vpop.f32.mrf.mxu0
    %v1531 = vadd.f32 %v1386, %v1530
    %v1532 = vpop.f32.mrf.mxu0
    %1533 = vdwg.mxu0
    %v1534 = vrot.slane %v1115, 2
    %v1535 = vrot.slane %v1116, 2
    %v1536 = vsel %vm571, %v1534, %v1535
    %v1537 = vrot.slane %v1117, 2
    %v1538 = vsel %vm571, %v1535, %v1537
    %v1539 = vrot.slane %v1118, 2
    %v1540 = vsel %vm571, %v1537, %v1539
    %v1541 = vrot.slane %v1119, 2
    %v1542 = vsel %vm571, %v1539, %v1541
    %v1543 = vrot.slane %v1120, 2
    %v1544 = vsel %vm571, %v1541, %v1543
    %v1545 = vrot.slane %v1121, 2
    %v1546 = vsel %vm571, %v1543, %v1545
    %v1547 = vrot.slane %v1122, 2
    %v1548 = vsel %vm571, %v1545, %v1547
    %v1549 = vrot.slane %v1123, 2
    %v1550 = vsel %vm571, %v1547, %v1549
    %v1551 = vrot.slane %v1124, 2
    %v1552 = vsel %vm571, %v1549, %v1551
    %v1553 = vrot.slane %v1125, 2
    %v1554 = vsel %vm571, %v1551, %v1553
    %v1555 = vrot.slane %v1126, 2
    %v1556 = vsel %vm571, %v1553, %v1555
    %v1557 = vrot.slane %v1127, 2
    %v1558 = vsel %vm571, %v1555, %v1557
    %v1559 = vrot.slane %v1128, 2
    %v1560 = vsel %vm571, %v1557, %v1559
    %v1561 = vrot.slane %v1129, 2
    %v1562 = vsel %vm571, %v1559, %v1561
    %v1563 = vrot.slane %v1130, 2
    %v1564 = vsel %vm571, %v1561, %v1563
    %v1581 = vsel %vm571, %v1563, 0.0
    %v1582 = vpack.c.bf16 %v1538, %v1536
    %v1583 = vpack.c.bf16 %v1542, %v1540
    %v1584 = vpack.c.bf16 %v1546, %v1544
    %v1585 = vpack.c.bf16 %v1550, %v1548
    %v1586 = vpack.c.bf16 %v1554, %v1552
    %v1587 = vpack.c.bf16 %v1558, %v1556
    %v1588 = vpack.c.bf16 %v1562, %v1560
    %v1589 = vpack.c.bf16 %v1581, %v1564
    %s1590 = scalar_lea.vmem [#allocation5], 128
    %v1591 = vld [vmem:[%s1590] sm:$0xf]
    %v1592 = vld [vmem:[%s1590 + $0x4] sm:$0xf]
    %v1593 = vld [vmem:[%s1590 + $0x8] sm:$0xf]
    %v1594 = vld [vmem:[%s1590 + $0xc] sm:$0xf]
    %v1595 = vld [vmem:[%s1590 + $0x10] sm:$0xf]
    %v1596 = vld [vmem:[%s1590 + $0x14] sm:$0xf]
    %v1597 = vld [vmem:[%s1590 + $0x18] sm:$0xf]
    %v1598 = vld [vmem:[%s1590 + $0x1c] sm:$0xf]
    %v1599 = vld [vmem:[%s1590 + $0x20] sm:$0xf]
    %v1600 = vld [vmem:[%s1590 + $0x24] sm:$0xf]
    %v1601 = vld [vmem:[%s1590 + $0x28] sm:$0xf]
    %v1602 = vld [vmem:[%s1590 + $0x2c] sm:$0xf]
    %v1603 = vld [vmem:[%s1590 + $0x30] sm:$0xf]
    %v1604 = vld [vmem:[%s1590 + $0x34] sm:$0xf]
    %v1605 = vld [vmem:[%s1590 + $0x38] sm:$0xf]
    %v1606 = vld [vmem:[%s1590 + $0x3c] sm:$0xf]
    %v1623 = vunpack.c.l.b16 %v1591
    %v1624 = vunpack.c.l.b16 %v1592
    %v1625 = vunpack.c.l.b16 %v1593
    %v1626 = vunpack.c.l.b16 %v1594
    %v1627 = vunpack.c.l.b16 %v1595
    %v1628 = vunpack.c.l.b16 %v1596
    %v1629 = vunpack.c.l.b16 %v1597
    %v1630 = vunpack.c.l.b16 %v1598
    %v1631 = vunpack.c.l.b16 %v1599
    %v1632 = vunpack.c.l.b16 %v1600
    %v1633 = vunpack.c.l.b16 %v1601
    %v1634 = vunpack.c.l.b16 %v1602
    %v1635 = vunpack.c.l.b16 %v1603
    %v1636 = vunpack.c.l.b16 %v1604
    %v1637 = vunpack.c.l.b16 %v1605
    %v1638 = vunpack.c.l.b16 %v1606
    %v1639 = vpack.c.b16 %v1624, %v1623
    %v1640 = vpack.c.b16 %v1626, %v1625
    %v1641 = vpack.c.b16 %v1628, %v1627
    %v1642 = vpack.c.b16 %v1630, %v1629
    %v1643 = vpack.c.b16 %v1632, %v1631
    %v1644 = vpack.c.b16 %v1634, %v1633
    %v1645 = vpack.c.b16 %v1636, %v1635
    %v1646 = vpack.c.b16 %v1638, %v1637
    %1655 = vmatprep.subr.bf16.mxu0 0
    %1656 = vmatpush1.bf16.msra.mxu0 %v1646
    %1657 = vmatprep.subr.bf16.mxu0 0
    %1658 = vmatpush1.bf16.msra.mxu0 %v1645
    %1659 = vmatprep.subr.bf16.mxu0 0
    %1660 = vmatpush1.bf16.msra.mxu0 %v1644
    %1661 = vmatprep.subr.bf16.mxu0 0
    %1662 = vmatpush1.bf16.msra.mxu0 %v1643
    %1663 = vmatprep.subr.bf16.mxu0 0
    %1664 = vmatpush1.bf16.msra.mxu0 %v1642
    %1665 = vmatprep.subr.bf16.mxu0 0
    %1666 = vmatpush1.bf16.msra.mxu0 %v1641
    %1667 = vmatprep.subr.bf16.mxu0 0
    %1668 = vmatpush1.bf16.msra.mxu0 %v1640
    %1669 = vmatprep.subr.bf16.mxu0 0
    %1670 = vmatpush1.bf16.msra.mxu0 %v1639
    %1671 = vmatprep.subr.bf16.mxu0 0
    %1672 = vmatpush2.bf16.msra.mxu0 0
    %1673 = vmatprep.subr.bf16.mxu0 0
    %1674 = vmatpush2.bf16.msra.mxu0 0
    %1675 = vmatprep.subr.bf16.mxu0 0
    %1676 = vmatpush2.bf16.msra.mxu0 0
    %1677 = vmatprep.subr.bf16.mxu0 0
    %1678 = vmatpush2.bf16.msra.mxu0 0
    %1679 = vmatprep.subr.bf16.mxu0 0
    %1680 = vmatpush2.bf16.msra.mxu0 0
    %1681 = vmatprep.subr.bf16.mxu0 0
    %1682 = vmatpush2.bf16.msra.mxu0 0
    %1683 = vmatprep.subr.bf16.mxu0 0
    %1684 = vmatpush2.bf16.msra.mxu0 0
    %1685 = vmatprep.subr.bf16.mxu0 0
    %1686 = vmatpush2.bf16.msra.mxu0 0
    %1687 = vmatprep.mubr.bf16.mxu0 0
    %1688 = vmatmul.mubr.bf16.gmra.mxu0 %v1582
    %v1689 = vpop.f32.mrf.mxu0
    %v1690 = vadd.f32 0.0, %v1689
    %v1691 = vpop.f32.mrf.mxu0
    %v1692 = vpop.f32.mrf.mxu0
    %v1693 = vadd.f32 0.0, %v1692
    %v1694 = vpop.f32.mrf.mxu0
    %1695 = vmatprep.mubr.bf16.mxu0 0
    %1696 = vmatmul.mubr.bf16.gmra.mxu0 %v1583
    %v1697 = vpop.f32.mrf.mxu0
    %v1698 = vadd.f32 0.0, %v1697
    %v1699 = vpop.f32.mrf.mxu0
    %v1700 = vpop.f32.mrf.mxu0
    %v1701 = vadd.f32 0.0, %v1700
    %v1702 = vpop.f32.mrf.mxu0
    %1703 = vmatprep.mubr.bf16.mxu0 0
    %1704 = vmatmul.mubr.bf16.gmra.mxu0 %v1584
    %v1705 = vpop.f32.mrf.mxu0
    %v1706 = vadd.f32 0.0, %v1705
    %v1707 = vpop.f32.mrf.mxu0
    %v1708 = vpop.f32.mrf.mxu0
    %v1709 = vadd.f32 0.0, %v1708
    %v1710 = vpop.f32.mrf.mxu0
    %1711 = vmatprep.mubr.bf16.mxu0 0
    %1712 = vmatmul.mubr.bf16.gmra.mxu0 %v1585
    %v1713 = vpop.f32.mrf.mxu0
    %v1714 = vadd.f32 0.0, %v1713
    %v1715 = vpop.f32.mrf.mxu0
    %v1716 = vpop.f32.mrf.mxu0
    %v1717 = vadd.f32 0.0, %v1716
    %v1718 = vpop.f32.mrf.mxu0
    %1719 = vmatprep.mubr.bf16.mxu0 0
    %1720 = vmatmul.mubr.bf16.gmra.mxu0 %v1586
    %v1721 = vpop.f32.mrf.mxu0
    %v1722 = vadd.f32 0.0, %v1721
    %v1723 = vpop.f32.mrf.mxu0
    %v1724 = vpop.f32.mrf.mxu0
    %v1725 = vadd.f32 0.0, %v1724
    %v1726 = vpop.f32.mrf.mxu0
    %1727 = vmatprep.mubr.bf16.mxu0 0
    %1728 = vmatmul.mubr.bf16.gmra.mxu0 %v1587
    %v1729 = vpop.f32.mrf.mxu0
    %v1730 = vadd.f32 0.0, %v1729
    %v1731 = vpop.f32.mrf.mxu0
    %v1732 = vpop.f32.mrf.mxu0
    %v1733 = vadd.f32 0.0, %v1732
    %v1734 = vpop.f32.mrf.mxu0
    %1735 = vmatprep.mubr.bf16.mxu0 0
    %1736 = vmatmul.mubr.bf16.gmra.mxu0 %v1588
    %v1737 = vpop.f32.mrf.mxu0
    %v1738 = vadd.f32 0.0, %v1737
    %v1739 = vpop.f32.mrf.mxu0
    %v1740 = vpop.f32.mrf.mxu0
    %v1741 = vadd.f32 0.0, %v1740
    %v1742 = vpop.f32.mrf.mxu0
    %1743 = vmatprep.mubr.bf16.mxu0 0
    %1744 = vmatmul.mubr.bf16.gmra.mxu0 %v1589
    %v1745 = vpop.f32.mrf.mxu0
    %v1746 = vadd.f32 0.0, %v1745
    %v1747 = vpop.f32.mrf.mxu0
    %v1748 = vpop.f32.mrf.mxu0
    %v1749 = vadd.f32 0.0, %v1748
    %v1750 = vpop.f32.mrf.mxu0
    %1751 = vdwg.mxu0
    %v1752 = vadd.f32 %v1472, %v1690
    %v1753 = vadd.f32 %v1475, %v1693
    %v1754 = vadd.f32 %v1480, %v1698
    %v1755 = vadd.f32 %v1483, %v1701
    %v1756 = vadd.f32 %v1488, %v1706
    %v1757 = vadd.f32 %v1491, %v1709
    %v1758 = vadd.f32 %v1496, %v1714
    %v1759 = vadd.f32 %v1499, %v1717
    %v1760 = vadd.f32 %v1504, %v1722
    %v1761 = vadd.f32 %v1507, %v1725
    %v1762 = vadd.f32 %v1512, %v1730
    %v1763 = vadd.f32 %v1515, %v1733
    %v1764 = vadd.f32 %v1520, %v1738
    %v1765 = vadd.f32 %v1523, %v1741
    %v1766 = vadd.f32 %v1528, %v1746
    %v1767 = vadd.f32 %v1531, %v1749
    %v1768 = vld [vmem:[%s7] sm:$0x1]
    %v1770 = vlaneseq
    %v1771 = vshrl.u32 %v1770, 7
    %v1772 = vsub.s32 0, %v1771
    %v1773 = vrot.slane %v1768, %v1772
    %v1775 = vadd.f32 %v1752, %v1773
    %v1776 = vadd.f32 %v1753, %v1773
    %v1777 = vadd.f32 %v1754, %v1773
    %v1778 = vadd.f32 %v1755, %v1773
    %v1779 = vadd.f32 %v1756, %v1773
    %v1780 = vadd.f32 %v1757, %v1773
    %v1781 = vadd.f32 %v1758, %v1773
    %v1782 = vadd.f32 %v1759, %v1773
    %v1783 = vadd.f32 %v1760, %v1773
    %v1784 = vadd.f32 %v1761, %v1773
    %v1785 = vadd.f32 %v1762, %v1773
    %v1786 = vadd.f32 %v1763, %v1773
    %v1787 = vadd.f32 %v1764, %v1773
    %v1788 = vadd.f32 %v1765, %v1773
    %v1789 = vadd.f32 %v1766, %v1773
    %v1790 = vadd.f32 %v1767, %v1773
    %vm1791 = vcmp.lt.f32.partialorder %v135, 12.0
    %vm1792 = vcmp.lt.f32.partialorder %v136, 12.0
    %vm1793 = vcmp.lt.f32.partialorder %v137, 12.0
    %vm1794 = vcmp.lt.f32.partialorder %v138, 12.0
    %vm1795 = vcmp.lt.f32.partialorder %v139, 12.0
    %vm1796 = vcmp.lt.f32.partialorder %v140, 12.0
    %vm1797 = vcmp.lt.f32.partialorder %v141, 12.0
    %vm1798 = vcmp.lt.f32.partialorder %v142, 12.0
    %vm1799 = vcmp.lt.f32.partialorder %v143, 12.0
    %vm1800 = vcmp.lt.f32.partialorder %v144, 12.0
    %vm1801 = vcmp.lt.f32.partialorder %v145, 12.0
    %vm1802 = vcmp.lt.f32.partialorder %v146, 12.0
    %vm1803 = vcmp.lt.f32.partialorder %v147, 12.0
    %vm1804 = vcmp.lt.f32.partialorder %v148, 12.0
    %vm1805 = vcmp.lt.f32.partialorder %v149, 12.0
    %vm1806 = vcmp.lt.f32.partialorder %v150, 12.0
    %v1807 = vsel %vm1791, 1, 0
    %v1808 = vsel %vm1792, 1, 0
    %v1809 = vsel %vm1793, 1, 0
    %v1810 = vsel %vm1794, 1, 0
    %v1811 = vsel %vm1795, 1, 0
    %v1812 = vsel %vm1796, 1, 0
    %v1813 = vsel %vm1797, 1, 0
    %v1814 = vsel %vm1798, 1, 0
    %v1815 = vsel %vm1799, 1, 0
    %v1816 = vsel %vm1800, 1, 0
    %v1817 = vsel %vm1801, 1, 0
    %v1818 = vsel %vm1802, 1, 0
    %v1819 = vsel %vm1803, 1, 0
    %v1820 = vsel %vm1804, 1, 0
    %v1821 = vsel %vm1805, 1, 0
    %v1822 = vsel %vm1806, 1, 0
    %v1823 = vcvt.s32.f32 %v1807
    %v1824 = vcvt.s32.f32 %v1808
    %v1825 = vcvt.s32.f32 %v1809
    %v1826 = vcvt.s32.f32 %v1810
    %v1827 = vcvt.s32.f32 %v1811
    %v1828 = vcvt.s32.f32 %v1812
    %v1829 = vcvt.s32.f32 %v1813
    %v1830 = vcvt.s32.f32 %v1814
    %v1831 = vcvt.s32.f32 %v1815
    %v1832 = vcvt.s32.f32 %v1816
    %v1833 = vcvt.s32.f32 %v1817
    %v1834 = vcvt.s32.f32 %v1818
    %v1835 = vcvt.s32.f32 %v1819
    %v1836 = vcvt.s32.f32 %v1820
    %v1837 = vcvt.s32.f32 %v1821
    %v1838 = vcvt.s32.f32 %v1822
    %v1839 = vld [vmem:[%s8] sm:$0x1]
    %v1840 = vld [vmem:[%s9] sm:$0x1]
    %1842 = vset.pattern.permute.xlu0 0
    %1843 = vperm.xlu0 %1842, %v1823
    %v1844 = vpop.permute.xlu0 %1843
    %1847 = vset.pattern.permute.xlu0 0
    %1848 = vperm.xlu0 %1847, %v1824
    %v1849 = vpop.permute.xlu0 %1848
    %1852 = vset.pattern.permute.xlu0 0
    %1853 = vperm.xlu0 %1852, %v1825
    %v1854 = vpop.permute.xlu0 %1853
    %1857 = vset.pattern.permute.xlu0 0
    %1858 = vperm.xlu0 %1857, %v1826
    %v1859 = vpop.permute.xlu0 %1858
    %1862 = vset.pattern.permute.xlu0 0
    %1863 = vperm.xlu0 %1862, %v1827
    %v1864 = vpop.permute.xlu0 %1863
    %1867 = vset.pattern.permute.xlu0 0
    %1868 = vperm.xlu0 %1867, %v1828
    %v1869 = vpop.permute.xlu0 %1868
    %1872 = vset.pattern.permute.xlu0 0
    %1873 = vperm.xlu0 %1872, %v1829
    %v1874 = vpop.permute.xlu0 %1873
    %1877 = vset.pattern.permute.xlu0 0
    %1878 = vperm.xlu0 %1877, %v1830
    %v1879 = vpop.permute.xlu0 %1878
    %1882 = vset.pattern.permute.xlu0 0
    %1883 = vperm.xlu0 %1882, %v1831
    %v1884 = vpop.permute.xlu0 %1883
    %1887 = vset.pattern.permute.xlu0 0
    %1888 = vperm.xlu0 %1887, %v1832
    %v1889 = vpop.permute.xlu0 %1888
    %1892 = vset.pattern.permute.xlu0 0
    %1893 = vperm.xlu0 %1892, %v1833
    %v1894 = vpop.permute.xlu0 %1893
    %1897 = vset.pattern.permute.xlu0 0
    %1898 = vperm.xlu0 %1897, %v1834
    %v1899 = vpop.permute.xlu0 %1898
    %1902 = vset.pattern.permute.xlu0 0
    %1903 = vperm.xlu0 %1902, %v1835
    %v1904 = vpop.permute.xlu0 %1903
    %1907 = vset.pattern.permute.xlu0 0
    %1908 = vperm.xlu0 %1907, %v1836
    %v1909 = vpop.permute.xlu0 %1908
    %1912 = vset.pattern.permute.xlu0 0
    %1913 = vperm.xlu0 %1912, %v1837
    %v1914 = vpop.permute.xlu0 %1913
    %1917 = vset.pattern.permute.xlu0 0
    %1918 = vperm.xlu0 %1917, %v1838
    %v1919 = vpop.permute.xlu0 %1918
    %v1921 = vmul.f32 %v1775, %v1844
    %v1922 = vmul.f32 %v1776, %v1849
    %v1923 = vmul.f32 %v1777, %v1854
    %v1924 = vmul.f32 %v1778, %v1859
    %v1925 = vmul.f32 %v1779, %v1864
    %v1926 = vmul.f32 %v1780, %v1869
    %v1927 = vmul.f32 %v1781, %v1874
    %v1928 = vmul.f32 %v1782, %v1879
    %v1929 = vmul.f32 %v1783, %v1884
    %v1930 = vmul.f32 %v1784, %v1889
    %v1931 = vmul.f32 %v1785, %v1894
    %v1932 = vmul.f32 %v1786, %v1899
    %v1933 = vmul.f32 %v1787, %v1904
    %v1934 = vmul.f32 %v1788, %v1909
    %v1935 = vmul.f32 %v1789, %v1914
    %v1936 = vmul.f32 %v1790, %v1919
    %v1937 = vadd.f32 %v1921, %v1922
    %v1938 = vadd.f32 %v1937, %v1923
    %v1939 = vadd.f32 %v1938, %v1924
    %v1940 = vadd.f32 %v1939, %v1925
    %v1941 = vadd.f32 %v1940, %v1926
    %v1942 = vadd.f32 %v1941, %v1927
    %v1943 = vadd.f32 %v1942, %v1928
    %v1944 = vadd.f32 %v1943, %v1929
    %v1945 = vadd.f32 %v1944, %v1930
    %v1946 = vadd.f32 %v1945, %v1931
    %v1947 = vadd.f32 %v1946, %v1932
    %v1948 = vadd.f32 %v1947, %v1933
    %v1949 = vadd.f32 %v1948, %v1934
    %v1950 = vadd.f32 %v1949, %v1935
    %v1951 = vadd.f32 %v1950, %v1936
    %v1952 = vrot.slane %v1951, 4
    %v1953 = vadd.f32 %v1951, %v1952
    %v1954 = vrot.slane %v1953, 2
    %v1955 = vadd.f32 %v1953, %v1954
    %v1956 = vrot.slane %v1955, 1
    %v1957 = vadd.f32 %v1955, %v1956
    %v1958 = vmul.f32 %v1957, 0.010416667
    %v1959 = vmul.f32 %v1921, %v1775
    %v1960 = vmul.f32 %v1922, %v1776
    %v1961 = vmul.f32 %v1923, %v1777
    %v1962 = vmul.f32 %v1924, %v1778
    %v1963 = vmul.f32 %v1925, %v1779
    %v1964 = vmul.f32 %v1926, %v1780
    %v1965 = vmul.f32 %v1927, %v1781
    %v1966 = vmul.f32 %v1928, %v1782
    %v1967 = vmul.f32 %v1929, %v1783
    %v1968 = vmul.f32 %v1930, %v1784
    %v1969 = vmul.f32 %v1931, %v1785
    %v1970 = vmul.f32 %v1932, %v1786
    %v1971 = vmul.f32 %v1933, %v1787
    %v1972 = vmul.f32 %v1934, %v1788
    %v1973 = vmul.f32 %v1935, %v1789
    %v1974 = vmul.f32 %v1936, %v1790
    %v1975 = vadd.f32 %v1959, %v1960
    %v1976 = vadd.f32 %v1975, %v1961
    %v1977 = vadd.f32 %v1976, %v1962
    %v1978 = vadd.f32 %v1977, %v1963
    %v1979 = vadd.f32 %v1978, %v1964
    %v1980 = vadd.f32 %v1979, %v1965
    %v1981 = vadd.f32 %v1980, %v1966
    %v1982 = vadd.f32 %v1981, %v1967
    %v1983 = vadd.f32 %v1982, %v1968
    %v1984 = vadd.f32 %v1983, %v1969
    %v1985 = vadd.f32 %v1984, %v1970
    %v1986 = vadd.f32 %v1985, %v1971
    %v1987 = vadd.f32 %v1986, %v1972
    %v1988 = vadd.f32 %v1987, %v1973
    %v1989 = vadd.f32 %v1988, %v1974
    %v1990 = vrot.slane %v1989, 4
    %v1991 = vadd.f32 %v1989, %v1990
    %v1992 = vrot.slane %v1991, 2
    %v1993 = vadd.f32 %v1991, %v1992
    %v1994 = vrot.slane %v1993, 1
    %v1995 = vadd.f32 %v1993, %v1994
    %v1996 = vmul.f32 %v1995, 0.010416667
    %v1997 = vmul.f32 %v1958, %v1958
    %v1998 = vsub.f32 %v1996, %v1997
    %v1999 = vsub.f32 %v1775, %v1958
    %v2000 = vsub.f32 %v1776, %v1958
    %v2001 = vsub.f32 %v1777, %v1958
    %v2002 = vsub.f32 %v1778, %v1958
    %v2003 = vsub.f32 %v1779, %v1958
    %v2004 = vsub.f32 %v1780, %v1958
    %v2005 = vsub.f32 %v1781, %v1958
    %v2006 = vsub.f32 %v1782, %v1958
    %v2007 = vsub.f32 %v1783, %v1958
    %v2008 = vsub.f32 %v1784, %v1958
    %v2009 = vsub.f32 %v1785, %v1958
    %v2010 = vsub.f32 %v1786, %v1958
    %v2011 = vsub.f32 %v1787, %v1958
    %v2012 = vsub.f32 %v1788, %v1958
    %v2013 = vsub.f32 %v1789, %v1958
    %v2014 = vsub.f32 %v1790, %v1958
    %v2016 = vlaneseq
    %v2017 = vshrl.u32 %v2016, 7
    %v2018 = vsub.s32 0, %v2017
    %v2019 = vrot.slane %v1839, %v2018
    %v2021 = vmul.f32 %v2019, %v1999
    %v2022 = vmul.f32 %v2019, %v2000
    %v2023 = vmul.f32 %v2019, %v2001
    %v2024 = vmul.f32 %v2019, %v2002
    %v2025 = vmul.f32 %v2019, %v2003
    %v2026 = vmul.f32 %v2019, %v2004
    %v2027 = vmul.f32 %v2019, %v2005
    %v2028 = vmul.f32 %v2019, %v2006
    %v2029 = vmul.f32 %v2019, %v2007
    %v2030 = vmul.f32 %v2019, %v2008
    %v2031 = vmul.f32 %v2019, %v2009
    %v2032 = vmul.f32 %v2019, %v2010
    %v2033 = vmul.f32 %v2019, %v2011
    %v2034 = vmul.f32 %v2019, %v2012
    %v2035 = vmul.f32 %v2019, %v2013
    %v2036 = vmul.f32 %v2019, %v2014
    %v2037 = vadd.f32 %v1998, 1e-05
    %v2038 = vrsqrt.pop %v2037
    %v2039 = vmul.f32 %v2021, %v2038
    %v2040 = vmul.f32 %v2022, %v2038
    %v2041 = vmul.f32 %v2023, %v2038
    %v2042 = vmul.f32 %v2024, %v2038
    %v2043 = vmul.f32 %v2025, %v2038
    %v2044 = vmul.f32 %v2026, %v2038
    %v2045 = vmul.f32 %v2027, %v2038
    %v2046 = vmul.f32 %v2028, %v2038
    %v2047 = vmul.f32 %v2029, %v2038
    %v2048 = vmul.f32 %v2030, %v2038
    %v2049 = vmul.f32 %v2031, %v2038
    %v2050 = vmul.f32 %v2032, %v2038
    %v2051 = vmul.f32 %v2033, %v2038
    %v2052 = vmul.f32 %v2034, %v2038
    %v2053 = vmul.f32 %v2035, %v2038
    %v2054 = vmul.f32 %v2036, %v2038
    %v2056 = vlaneseq
    %v2057 = vshrl.u32 %v2056, 7
    %v2058 = vsub.s32 0, %v2057
    %v2059 = vrot.slane %v1840, %v2058
    %v2061 = vadd.f32 %v2039, %v2059
    %v2062 = vadd.f32 %v2040, %v2059
    %v2063 = vadd.f32 %v2041, %v2059
    %v2064 = vadd.f32 %v2042, %v2059
    %v2065 = vadd.f32 %v2043, %v2059
    %v2066 = vadd.f32 %v2044, %v2059
    %v2067 = vadd.f32 %v2045, %v2059
    %v2068 = vadd.f32 %v2046, %v2059
    %v2069 = vadd.f32 %v2047, %v2059
    %v2070 = vadd.f32 %v2048, %v2059
    %v2071 = vadd.f32 %v2049, %v2059
    %v2072 = vadd.f32 %v2050, %v2059
    %v2073 = vadd.f32 %v2051, %v2059
    %v2074 = vadd.f32 %v2052, %v2059
    %v2075 = vadd.f32 %v2053, %v2059
    %v2076 = vadd.f32 %v2054, %v2059
    %v2077 = vmax.f32 %v2061, 0.0
    %v2078 = vmax.f32 %v2062, 0.0
    %v2079 = vmax.f32 %v2063, 0.0
    %v2080 = vmax.f32 %v2064, 0.0
    %v2081 = vmax.f32 %v2065, 0.0
    %v2082 = vmax.f32 %v2066, 0.0
    %v2083 = vmax.f32 %v2067, 0.0
    %v2084 = vmax.f32 %v2068, 0.0
    %v2085 = vmax.f32 %v2069, 0.0
    %v2086 = vmax.f32 %v2070, 0.0
    %v2087 = vmax.f32 %v2071, 0.0
    %v2088 = vmax.f32 %v2072, 0.0
    %v2089 = vmax.f32 %v2073, 0.0
    %v2090 = vmax.f32 %v2074, 0.0
    %v2091 = vmax.f32 %v2075, 0.0
    %v2092 = vmax.f32 %v2076, 0.0
    %v2093 = vpack.c.bf16 %v2078, %v2077
    %v2094 = vpack.c.bf16 %v2080, %v2079
    %v2095 = vpack.c.bf16 %v2082, %v2081
    %v2096 = vpack.c.bf16 %v2084, %v2083
    %v2097 = vpack.c.bf16 %v2086, %v2085
    %v2098 = vpack.c.bf16 %v2088, %v2087
    %v2099 = vpack.c.bf16 %v2090, %v2089
    %v2100 = vpack.c.bf16 %v2092, %v2091
    %v2101 = vld [vmem:[#allocation7] sm:$0xf]
    %v2102 = vld [vmem:[#allocation7 + $0x4] sm:$0xf]
    %v2103 = vld [vmem:[#allocation7 + $0x8] sm:$0xf]
    %v2104 = vld [vmem:[#allocation7 + $0xc] sm:$0xf]
    %v2105 = vld [vmem:[#allocation7 + $0x10] sm:$0xf]
    %v2106 = vld [vmem:[#allocation7 + $0x14] sm:$0xf]
    %v2107 = vld [vmem:[#allocation7 + $0x18] sm:$0xf]
    %v2108 = vld [vmem:[#allocation7 + $0x1c] sm:$0xf]
    %v2109 = vld [vmem:[#allocation7 + $0x20] sm:$0xf]
    %v2110 = vld [vmem:[#allocation7 + $0x24] sm:$0xf]
    %v2111 = vld [vmem:[#allocation7 + $0x28] sm:$0xf]
    %v2112 = vld [vmem:[#allocation7 + $0x2c] sm:$0xf]
    %v2113 = vld [vmem:[#allocation7 + $0x30] sm:$0xf]
    %v2114 = vld [vmem:[#allocation7 + $0x34] sm:$0xf]
    %v2115 = vld [vmem:[#allocation7 + $0x38] sm:$0xf]
    %v2116 = vld [vmem:[#allocation7 + $0x3c] sm:$0xf]
    %v2133 = vrot.slane %v2077, 1
    %v2134 = vrot.slane %v2078, 1
    %v2135 = vsel %vm207, %v2133, %v2134
    %v2136 = vrot.slane %v2079, 1
    %v2137 = vsel %vm207, %v2134, %v2136
    %v2138 = vrot.slane %v2080, 1
    %v2139 = vsel %vm207, %v2136, %v2138
    %v2140 = vrot.slane %v2081, 1
    %v2141 = vsel %vm207, %v2138, %v2140
    %v2142 = vrot.slane %v2082, 1
    %v2143 = vsel %vm207, %v2140, %v2142
    %v2144 = vrot.slane %v2083, 1
    %v2145 = vsel %vm207, %v2142, %v2144
    %v2146 = vrot.slane %v2084, 1
    %v2147 = vsel %vm207, %v2144, %v2146
    %v2148 = vrot.slane %v2085, 1
    %v2149 = vsel %vm207, %v2146, %v2148
    %v2150 = vrot.slane %v2086, 1
    %v2151 = vsel %vm207, %v2148, %v2150
    %v2152 = vrot.slane %v2087, 1
    %v2153 = vsel %vm207, %v2150, %v2152
    %v2154 = vrot.slane %v2088, 1
    %v2155 = vsel %vm207, %v2152, %v2154
    %v2156 = vrot.slane %v2089, 1
    %v2157 = vsel %vm207, %v2154, %v2156
    %v2158 = vrot.slane %v2090, 1
    %v2159 = vsel %vm207, %v2156, %v2158
    %v2160 = vrot.slane %v2091, 1
    %v2161 = vsel %vm207, %v2158, %v2160
    %v2162 = vrot.slane %v2092, 1
    %v2163 = vsel %vm207, %v2160, %v2162
    %v2180 = vsel %vm207, %v2162, 0.0
    %v2181 = vpack.c.bf16 %v2137, %v2135
    %v2182 = vpack.c.bf16 %v2141, %v2139
    %v2183 = vpack.c.bf16 %v2145, %v2143
    %v2184 = vpack.c.bf16 %v2149, %v2147
    %v2185 = vpack.c.bf16 %v2153, %v2151
    %v2186 = vpack.c.bf16 %v2157, %v2155
    %v2187 = vpack.c.bf16 %v2161, %v2159
    %v2188 = vpack.c.bf16 %v2180, %v2163
    %s2189 = scalar_lea.vmem [#allocation7], 64
    %v2190 = vld [vmem:[%s2189] sm:$0xf]
    %v2191 = vld [vmem:[%s2189 + $0x4] sm:$0xf]
    %v2192 = vld [vmem:[%s2189 + $0x8] sm:$0xf]
    %v2193 = vld [vmem:[%s2189 + $0xc] sm:$0xf]
    %v2194 = vld [vmem:[%s2189 + $0x10] sm:$0xf]
    %v2195 = vld [vmem:[%s2189 + $0x14] sm:$0xf]
    %v2196 = vld [vmem:[%s2189 + $0x18] sm:$0xf]
    %v2197 = vld [vmem:[%s2189 + $0x1c] sm:$0xf]
    %v2198 = vld [vmem:[%s2189 + $0x20] sm:$0xf]
    %v2199 = vld [vmem:[%s2189 + $0x24] sm:$0xf]
    %v2200 = vld [vmem:[%s2189 + $0x28] sm:$0xf]
    %v2201 = vld [vmem:[%s2189 + $0x2c] sm:$0xf]
    %v2202 = vld [vmem:[%s2189 + $0x30] sm:$0xf]
    %v2203 = vld [vmem:[%s2189 + $0x34] sm:$0xf]
    %v2204 = vld [vmem:[%s2189 + $0x38] sm:$0xf]
    %v2205 = vld [vmem:[%s2189 + $0x3c] sm:$0xf]
    %v2222 = vunpack.c.l.b16 %v2190
    %v2223 = vunpack.c.l.b16 %v2191
    %v2224 = vunpack.c.l.b16 %v2192
    %v2225 = vunpack.c.l.b16 %v2193
    %v2226 = vunpack.c.l.b16 %v2194
    %v2227 = vunpack.c.l.b16 %v2195
    %v2228 = vunpack.c.l.b16 %v2196
    %v2229 = vunpack.c.l.b16 %v2197
    %v2230 = vunpack.c.l.b16 %v2198
    %v2231 = vunpack.c.l.b16 %v2199
    %v2232 = vunpack.c.l.b16 %v2200
    %v2233 = vunpack.c.l.b16 %v2201
    %v2234 = vunpack.c.l.b16 %v2202
    %v2235 = vunpack.c.l.b16 %v2203
    %v2236 = vunpack.c.l.b16 %v2204
    %v2237 = vunpack.c.l.b16 %v2205
    %v2238 = vpack.c.b16 %v2223, %v2222
    %v2239 = vpack.c.b16 %v2225, %v2224
    %v2240 = vpack.c.b16 %v2227, %v2226
    %v2241 = vpack.c.b16 %v2229, %v2228
    %v2242 = vpack.c.b16 %v2231, %v2230
    %v2243 = vpack.c.b16 %v2233, %v2232
    %v2244 = vpack.c.b16 %v2235, %v2234
    %v2245 = vpack.c.b16 %v2237, %v2236
    %2254 = vmatprep.subr.bf16.mxu0 0
    %2255 = vmatpush1.bf16.msra.mxu0 %v2245
    %2256 = vmatprep.subr.bf16.mxu0 0
    %2257 = vmatpush1.bf16.msra.mxu0 %v2244
    %2258 = vmatprep.subr.bf16.mxu0 0
    %2259 = vmatpush1.bf16.msra.mxu0 %v2243
    %2260 = vmatprep.subr.bf16.mxu0 0
    %2261 = vmatpush1.bf16.msra.mxu0 %v2242
    %2262 = vmatprep.subr.bf16.mxu0 0
    %2263 = vmatpush1.bf16.msra.mxu0 %v2241
    %2264 = vmatprep.subr.bf16.mxu0 0
    %2265 = vmatpush1.bf16.msra.mxu0 %v2240
    %2266 = vmatprep.subr.bf16.mxu0 0
    %2267 = vmatpush1.bf16.msra.mxu0 %v2239
    %2268 = vmatprep.subr.bf16.mxu0 0
    %2269 = vmatpush1.bf16.msra.mxu0 %v2238
    %2270 = vmatprep.subr.bf16.mxu0 0
    %2271 = vmatpush2.bf16.msra.mxu0 0
    %2272 = vmatprep.subr.bf16.mxu0 0
    %2273 = vmatpush2.bf16.msra.mxu0 0
    %2274 = vmatprep.subr.bf16.mxu0 0
    %2275 = vmatpush2.bf16.msra.mxu0 0
    %2276 = vmatprep.subr.bf16.mxu0 0
    %2277 = vmatpush2.bf16.msra.mxu0 0
    %2278 = vmatprep.subr.bf16.mxu0 0
    %2279 = vmatpush2.bf16.msra.mxu0 0
    %2280 = vmatprep.subr.bf16.mxu0 0
    %2281 = vmatpush2.bf16.msra.mxu0 0
    %2282 = vmatprep.subr.bf16.mxu0 0
    %2283 = vmatpush2.bf16.msra.mxu0 0
    %2284 = vmatprep.subr.bf16.mxu0 0
    %2285 = vmatpush2.bf16.msra.mxu0 0
    %2286 = vmatprep.mubr.bf16.mxu0 0
    %2287 = vmatmul.mubr.bf16.gmra.mxu0 %v2181
    %v2288 = vpop.f32.mrf.mxu0
    %v2289 = vadd.f32 0.0, %v2288
    %v2290 = vpop.f32.mrf.mxu0
    %v2291 = vpop.f32.mrf.mxu0
    %v2292 = vadd.f32 0.0, %v2291
    %v2293 = vpop.f32.mrf.mxu0
    %2294 = vmatprep.mubr.bf16.mxu0 0
    %2295 = vmatmul.mubr.bf16.gmra.mxu0 %v2182
    %v2296 = vpop.f32.mrf.mxu0
    %v2297 = vadd.f32 0.0, %v2296
    %v2298 = vpop.f32.mrf.mxu0
    %v2299 = vpop.f32.mrf.mxu0
    %v2300 = vadd.f32 0.0, %v2299
    %v2301 = vpop.f32.mrf.mxu0
    %2302 = vmatprep.mubr.bf16.mxu0 0
    %2303 = vmatmul.mubr.bf16.gmra.mxu0 %v2183
    %v2304 = vpop.f32.mrf.mxu0
    %v2305 = vadd.f32 0.0, %v2304
    %v2306 = vpop.f32.mrf.mxu0
    %v2307 = vpop.f32.mrf.mxu0
    %v2308 = vadd.f32 0.0, %v2307
    %v2309 = vpop.f32.mrf.mxu0
    %2310 = vmatprep.mubr.bf16.mxu0 0
    %2311 = vmatmul.mubr.bf16.gmra.mxu0 %v2184
    %v2312 = vpop.f32.mrf.mxu0
    %v2313 = vadd.f32 0.0, %v2312
    %v2314 = vpop.f32.mrf.mxu0
    %v2315 = vpop.f32.mrf.mxu0
    %v2316 = vadd.f32 0.0, %v2315
    %v2317 = vpop.f32.mrf.mxu0
    %2318 = vmatprep.mubr.bf16.mxu0 0
    %2319 = vmatmul.mubr.bf16.gmra.mxu0 %v2185
    %v2320 = vpop.f32.mrf.mxu0
    %v2321 = vadd.f32 0.0, %v2320
    %v2322 = vpop.f32.mrf.mxu0
    %v2323 = vpop.f32.mrf.mxu0
    %v2324 = vadd.f32 0.0, %v2323
    %v2325 = vpop.f32.mrf.mxu0
    %2326 = vmatprep.mubr.bf16.mxu0 0
    %2327 = vmatmul.mubr.bf16.gmra.mxu0 %v2186
    %v2328 = vpop.f32.mrf.mxu0
    %v2329 = vadd.f32 0.0, %v2328
    %v2330 = vpop.f32.mrf.mxu0
    %v2331 = vpop.f32.mrf.mxu0
    %v2332 = vadd.f32 0.0, %v2331
    %v2333 = vpop.f32.mrf.mxu0
    %2334 = vmatprep.mubr.bf16.mxu0 0
    %2335 = vmatmul.mubr.bf16.gmra.mxu0 %v2187
    %v2336 = vpop.f32.mrf.mxu0
    %v2337 = vadd.f32 0.0, %v2336
    %v2338 = vpop.f32.mrf.mxu0
    %v2339 = vpop.f32.mrf.mxu0
    %v2340 = vadd.f32 0.0, %v2339
    %v2341 = vpop.f32.mrf.mxu0
    %2342 = vmatprep.mubr.bf16.mxu0 0
    %2343 = vmatmul.mubr.bf16.gmra.mxu0 %v2188
    %v2344 = vpop.f32.mrf.mxu0
    %v2345 = vadd.f32 0.0, %v2344
    %v2346 = vpop.f32.mrf.mxu0
    %v2347 = vpop.f32.mrf.mxu0
    %v2348 = vadd.f32 0.0, %v2347
    %v2349 = vpop.f32.mrf.mxu0
    %2350 = vdwg.mxu0
    %v2367 = vunpack.c.l.b16 %v2101
    %v2368 = vunpack.c.l.b16 %v2102
    %v2369 = vunpack.c.l.b16 %v2103
    %v2370 = vunpack.c.l.b16 %v2104
    %v2371 = vunpack.c.l.b16 %v2105
    %v2372 = vunpack.c.l.b16 %v2106
    %v2373 = vunpack.c.l.b16 %v2107
    %v2374 = vunpack.c.l.b16 %v2108
    %v2375 = vunpack.c.l.b16 %v2109
    %v2376 = vunpack.c.l.b16 %v2110
    %v2377 = vunpack.c.l.b16 %v2111
    %v2378 = vunpack.c.l.b16 %v2112
    %v2379 = vunpack.c.l.b16 %v2113
    %v2380 = vunpack.c.l.b16 %v2114
    %v2381 = vunpack.c.l.b16 %v2115
    %v2382 = vunpack.c.l.b16 %v2116
    %v2383 = vpack.c.b16 %v2368, %v2367
    %v2384 = vpack.c.b16 %v2370, %v2369
    %v2385 = vpack.c.b16 %v2372, %v2371
    %v2386 = vpack.c.b16 %v2374, %v2373
    %v2387 = vpack.c.b16 %v2376, %v2375
    %v2388 = vpack.c.b16 %v2378, %v2377
    %v2389 = vpack.c.b16 %v2380, %v2379
    %v2390 = vpack.c.b16 %v2382, %v2381
    %2399 = vmatprep.subr.bf16.mxu0 0
    %2400 = vmatpush1.bf16.msra.mxu0 %v2390
    %2401 = vmatprep.subr.bf16.mxu0 0
    %2402 = vmatpush1.bf16.msra.mxu0 %v2389
    %2403 = vmatprep.subr.bf16.mxu0 0
    %2404 = vmatpush1.bf16.msra.mxu0 %v2388
    %2405 = vmatprep.subr.bf16.mxu0 0
    %2406 = vmatpush1.bf16.msra.mxu0 %v2387
    %2407 = vmatprep.subr.bf16.mxu0 0
    %2408 = vmatpush1.bf16.msra.mxu0 %v2386
    %2409 = vmatprep.subr.bf16.mxu0 0
    %2410 = vmatpush1.bf16.msra.mxu0 %v2385
    %2411 = vmatprep.subr.bf16.mxu0 0
    %2412 = vmatpush1.bf16.msra.mxu0 %v2384
    %2413 = vmatprep.subr.bf16.mxu0 0
    %2414 = vmatpush1.bf16.msra.mxu0 %v2383
    %2415 = vmatprep.subr.bf16.mxu0 0
    %2416 = vmatpush2.bf16.msra.mxu0 0
    %2417 = vmatprep.subr.bf16.mxu0 0
    %2418 = vmatpush2.bf16.msra.mxu0 0
    %2419 = vmatprep.subr.bf16.mxu0 0
    %2420 = vmatpush2.bf16.msra.mxu0 0
    %2421 = vmatprep.subr.bf16.mxu0 0
    %2422 = vmatpush2.bf16.msra.mxu0 0
    %2423 = vmatprep.subr.bf16.mxu0 0
    %2424 = vmatpush2.bf16.msra.mxu0 0
    %2425 = vmatprep.subr.bf16.mxu0 0
    %2426 = vmatpush2.bf16.msra.mxu0 0
    %2427 = vmatprep.subr.bf16.mxu0 0
    %2428 = vmatpush2.bf16.msra.mxu0 0
    %2429 = vmatprep.subr.bf16.mxu0 0
    %2430 = vmatpush2.bf16.msra.mxu0 0
    %2431 = vmatprep.mubr.bf16.mxu0 0
    %2432 = vmatmul.mubr.bf16.gmra.mxu0 %v2093
    %v2433 = vpop.f32.mrf.mxu0
    %v2434 = vadd.f32 %v2289, %v2433
    %v2435 = vpop.f32.mrf.mxu0
    %v2436 = vpop.f32.mrf.mxu0
    %v2437 = vadd.f32 %v2292, %v2436
    %v2438 = vpop.f32.mrf.mxu0
    %2439 = vmatprep.mubr.bf16.mxu0 0
    %2440 = vmatmul.mubr.bf16.gmra.mxu0 %v2094
    %v2441 = vpop.f32.mrf.mxu0
    %v2442 = vadd.f32 %v2297, %v2441
    %v2443 = vpop.f32.mrf.mxu0
    %v2444 = vpop.f32.mrf.mxu0
    %v2445 = vadd.f32 %v2300, %v2444
    %v2446 = vpop.f32.mrf.mxu0
    %2447 = vmatprep.mubr.bf16.mxu0 0
    %2448 = vmatmul.mubr.bf16.gmra.mxu0 %v2095
    %v2449 = vpop.f32.mrf.mxu0
    %v2450 = vadd.f32 %v2305, %v2449
    %v2451 = vpop.f32.mrf.mxu0
    %v2452 = vpop.f32.mrf.mxu0
    %v2453 = vadd.f32 %v2308, %v2452
    %v2454 = vpop.f32.mrf.mxu0
    %2455 = vmatprep.mubr.bf16.mxu0 0
    %2456 = vmatmul.mubr.bf16.gmra.mxu0 %v2096
    %v2457 = vpop.f32.mrf.mxu0
    %v2458 = vadd.f32 %v2313, %v2457
    %v2459 = vpop.f32.mrf.mxu0
    %v2460 = vpop.f32.mrf.mxu0
    %v2461 = vadd.f32 %v2316, %v2460
    %v2462 = vpop.f32.mrf.mxu0
    %2463 = vmatprep.mubr.bf16.mxu0 0
    %2464 = vmatmul.mubr.bf16.gmra.mxu0 %v2097
    %v2465 = vpop.f32.mrf.mxu0
    %v2466 = vadd.f32 %v2321, %v2465
    %v2467 = vpop.f32.mrf.mxu0
    %v2468 = vpop.f32.mrf.mxu0
    %v2469 = vadd.f32 %v2324, %v2468
    %v2470 = vpop.f32.mrf.mxu0
    %2471 = vmatprep.mubr.bf16.mxu0 0
    %2472 = vmatmul.mubr.bf16.gmra.mxu0 %v2098
    %v2473 = vpop.f32.mrf.mxu0
    %v2474 = vadd.f32 %v2329, %v2473
    %v2475 = vpop.f32.mrf.mxu0
    %v2476 = vpop.f32.mrf.mxu0
    %v2477 = vadd.f32 %v2332, %v2476
    %v2478 = vpop.f32.mrf.mxu0
    %2479 = vmatprep.mubr.bf16.mxu0 0
    %2480 = vmatmul.mubr.bf16.gmra.mxu0 %v2099
    %v2481 = vpop.f32.mrf.mxu0
    %v2482 = vadd.f32 %v2337, %v2481
    %v2483 = vpop.f32.mrf.mxu0
    %v2484 = vpop.f32.mrf.mxu0
    %v2485 = vadd.f32 %v2340, %v2484
    %v2486 = vpop.f32.mrf.mxu0
    %2487 = vmatprep.mubr.bf16.mxu0 0
    %2488 = vmatmul.mubr.bf16.gmra.mxu0 %v2100
    %v2489 = vpop.f32.mrf.mxu0
    %v2490 = vadd.f32 %v2345, %v2489
    %v2491 = vpop.f32.mrf.mxu0
    %v2492 = vpop.f32.mrf.mxu0
    %v2493 = vadd.f32 %v2348, %v2492
    %v2494 = vpop.f32.mrf.mxu0
    %2495 = vdwg.mxu0
    %v2496 = vrot.slane %v2077, 2
    %v2497 = vrot.slane %v2078, 2
    %v2498 = vsel %vm571, %v2496, %v2497
    %v2499 = vrot.slane %v2079, 2
    %v2500 = vsel %vm571, %v2497, %v2499
    %v2501 = vrot.slane %v2080, 2
    %v2502 = vsel %vm571, %v2499, %v2501
    %v2503 = vrot.slane %v2081, 2
    %v2504 = vsel %vm571, %v2501, %v2503
    %v2505 = vrot.slane %v2082, 2
    %v2506 = vsel %vm571, %v2503, %v2505
    %v2507 = vrot.slane %v2083, 2
    %v2508 = vsel %vm571, %v2505, %v2507
    %v2509 = vrot.slane %v2084, 2
    %v2510 = vsel %vm571, %v2507, %v2509
    %v2511 = vrot.slane %v2085, 2
    %v2512 = vsel %vm571, %v2509, %v2511
    %v2513 = vrot.slane %v2086, 2
    %v2514 = vsel %vm571, %v2511, %v2513
    %v2515 = vrot.slane %v2087, 2
    %v2516 = vsel %vm571, %v2513, %v2515
    %v2517 = vrot.slane %v2088, 2
    %v2518 = vsel %vm571, %v2515, %v2517
    %v2519 = vrot.slane %v2089, 2
    %v2520 = vsel %vm571, %v2517, %v2519
    %v2521 = vrot.slane %v2090, 2
    %v2522 = vsel %vm571, %v2519, %v2521
    %v2523 = vrot.slane %v2091, 2
    %v2524 = vsel %vm571, %v2521, %v2523
    %v2525 = vrot.slane %v2092, 2
    %v2526 = vsel %vm571, %v2523, %v2525
    %v2543 = vsel %vm571, %v2525, 0.0
    %v2544 = vpack.c.bf16 %v2500, %v2498
    %v2545 = vpack.c.bf16 %v2504, %v2502
    %v2546 = vpack.c.bf16 %v2508, %v2506
    %v2547 = vpack.c.bf16 %v2512, %v2510
    %v2548 = vpack.c.bf16 %v2516, %v2514
    %v2549 = vpack.c.bf16 %v2520, %v2518
    %v2550 = vpack.c.bf16 %v2524, %v2522
    %v2551 = vpack.c.bf16 %v2543, %v2526
    %s2552 = scalar_lea.vmem [#allocation7], 128
    %v2553 = vld [vmem:[%s2552] sm:$0xf]
    %v2554 = vld [vmem:[%s2552 + $0x4] sm:$0xf]
    %v2555 = vld [vmem:[%s2552 + $0x8] sm:$0xf]
    %v2556 = vld [vmem:[%s2552 + $0xc] sm:$0xf]
    %v2557 = vld [vmem:[%s2552 + $0x10] sm:$0xf]
    %v2558 = vld [vmem:[%s2552 + $0x14] sm:$0xf]
    %v2559 = vld [vmem:[%s2552 + $0x18] sm:$0xf]
    %v2560 = vld [vmem:[%s2552 + $0x1c] sm:$0xf]
    %v2561 = vld [vmem:[%s2552 + $0x20] sm:$0xf]
    %v2562 = vld [vmem:[%s2552 + $0x24] sm:$0xf]
    %v2563 = vld [vmem:[%s2552 + $0x28] sm:$0xf]
    %v2564 = vld [vmem:[%s2552 + $0x2c] sm:$0xf]
    %v2565 = vld [vmem:[%s2552 + $0x30] sm:$0xf]
    %v2566 = vld [vmem:[%s2552 + $0x34] sm:$0xf]
    %v2567 = vld [vmem:[%s2552 + $0x38] sm:$0xf]
    %v2568 = vld [vmem:[%s2552 + $0x3c] sm:$0xf]
    %v2585 = vunpack.c.l.b16 %v2553
    %v2586 = vunpack.c.l.b16 %v2554
    %v2587 = vunpack.c.l.b16 %v2555
    %v2588 = vunpack.c.l.b16 %v2556
    %v2589 = vunpack.c.l.b16 %v2557
    %v2590 = vunpack.c.l.b16 %v2558
    %v2591 = vunpack.c.l.b16 %v2559
    %v2592 = vunpack.c.l.b16 %v2560
    %v2593 = vunpack.c.l.b16 %v2561
    %v2594 = vunpack.c.l.b16 %v2562
    %v2595 = vunpack.c.l.b16 %v2563
    %v2596 = vunpack.c.l.b16 %v2564
    %v2597 = vunpack.c.l.b16 %v2565
    %v2598 = vunpack.c.l.b16 %v2566
    %v2599 = vunpack.c.l.b16 %v2567
    %v2600 = vunpack.c.l.b16 %v2568
    %v2601 = vpack.c.b16 %v2586, %v2585
    %v2602 = vpack.c.b16 %v2588, %v2587
    %v2603 = vpack.c.b16 %v2590, %v2589
    %v2604 = vpack.c.b16 %v2592, %v2591
    %v2605 = vpack.c.b16 %v2594, %v2593
    %v2606 = vpack.c.b16 %v2596, %v2595
    %v2607 = vpack.c.b16 %v2598, %v2597
    %v2608 = vpack.c.b16 %v2600, %v2599
    %2617 = vmatprep.subr.bf16.mxu0 0
    %2618 = vmatpush1.bf16.msra.mxu0 %v2608
    %2619 = vmatprep.subr.bf16.mxu0 0
    %2620 = vmatpush1.bf16.msra.mxu0 %v2607
    %2621 = vmatprep.subr.bf16.mxu0 0
    %2622 = vmatpush1.bf16.msra.mxu0 %v2606
    %2623 = vmatprep.subr.bf16.mxu0 0
    %2624 = vmatpush1.bf16.msra.mxu0 %v2605
    %2625 = vmatprep.subr.bf16.mxu0 0
    %2626 = vmatpush1.bf16.msra.mxu0 %v2604
    %2627 = vmatprep.subr.bf16.mxu0 0
    %2628 = vmatpush1.bf16.msra.mxu0 %v2603
    %2629 = vmatprep.subr.bf16.mxu0 0
    %2630 = vmatpush1.bf16.msra.mxu0 %v2602
    %2631 = vmatprep.subr.bf16.mxu0 0
    %2632 = vmatpush1.bf16.msra.mxu0 %v2601
    %2633 = vmatprep.subr.bf16.mxu0 0
    %2634 = vmatpush2.bf16.msra.mxu0 0
    %2635 = vmatprep.subr.bf16.mxu0 0
    %2636 = vmatpush2.bf16.msra.mxu0 0
    %2637 = vmatprep.subr.bf16.mxu0 0
    %2638 = vmatpush2.bf16.msra.mxu0 0
    %2639 = vmatprep.subr.bf16.mxu0 0
    %2640 = vmatpush2.bf16.msra.mxu0 0
    %2641 = vmatprep.subr.bf16.mxu0 0
    %2642 = vmatpush2.bf16.msra.mxu0 0
    %2643 = vmatprep.subr.bf16.mxu0 0
    %2644 = vmatpush2.bf16.msra.mxu0 0
    %2645 = vmatprep.subr.bf16.mxu0 0
    %2646 = vmatpush2.bf16.msra.mxu0 0
    %2647 = vmatprep.subr.bf16.mxu0 0
    %2648 = vmatpush2.bf16.msra.mxu0 0
    %2649 = vmatprep.mubr.bf16.mxu0 0
    %2650 = vmatmul.mubr.bf16.gmra.mxu0 %v2544
    %v2651 = vpop.f32.mrf.mxu0
    %v2652 = vadd.f32 0.0, %v2651
    %v2653 = vpop.f32.mrf.mxu0
    %v2654 = vpop.f32.mrf.mxu0
    %v2655 = vadd.f32 0.0, %v2654
    %v2656 = vpop.f32.mrf.mxu0
    %2657 = vmatprep.mubr.bf16.mxu0 0
    %2658 = vmatmul.mubr.bf16.gmra.mxu0 %v2545
    %v2659 = vpop.f32.mrf.mxu0
    %v2660 = vadd.f32 0.0, %v2659
    %v2661 = vpop.f32.mrf.mxu0
    %v2662 = vpop.f32.mrf.mxu0
    %v2663 = vadd.f32 0.0, %v2662
    %v2664 = vpop.f32.mrf.mxu0
    %2665 = vmatprep.mubr.bf16.mxu0 0
    %2666 = vmatmul.mubr.bf16.gmra.mxu0 %v2546
    %v2667 = vpop.f32.mrf.mxu0
    %v2668 = vadd.f32 0.0, %v2667
    %v2669 = vpop.f32.mrf.mxu0
    %v2670 = vpop.f32.mrf.mxu0
    %v2671 = vadd.f32 0.0, %v2670
    %v2672 = vpop.f32.mrf.mxu0
    %2673 = vmatprep.mubr.bf16.mxu0 0
    %2674 = vmatmul.mubr.bf16.gmra.mxu0 %v2547
    %v2675 = vpop.f32.mrf.mxu0
    %v2676 = vadd.f32 0.0, %v2675
    %v2677 = vpop.f32.mrf.mxu0
    %v2678 = vpop.f32.mrf.mxu0
    %v2679 = vadd.f32 0.0, %v2678
    %v2680 = vpop.f32.mrf.mxu0
    %2681 = vmatprep.mubr.bf16.mxu0 0
    %2682 = vmatmul.mubr.bf16.gmra.mxu0 %v2548
    %v2683 = vpop.f32.mrf.mxu0
    %v2684 = vadd.f32 0.0, %v2683
    %v2685 = vpop.f32.mrf.mxu0
    %v2686 = vpop.f32.mrf.mxu0
    %v2687 = vadd.f32 0.0, %v2686
    %v2688 = vpop.f32.mrf.mxu0
    %2689 = vmatprep.mubr.bf16.mxu0 0
    %2690 = vmatmul.mubr.bf16.gmra.mxu0 %v2549
    %v2691 = vpop.f32.mrf.mxu0
    %v2692 = vadd.f32 0.0, %v2691
    %v2693 = vpop.f32.mrf.mxu0
    %v2694 = vpop.f32.mrf.mxu0
    %v2695 = vadd.f32 0.0, %v2694
    %v2696 = vpop.f32.mrf.mxu0
    %2697 = vmatprep.mubr.bf16.mxu0 0
    %2698 = vmatmul.mubr.bf16.gmra.mxu0 %v2550
    %v2699 = vpop.f32.mrf.mxu0
    %v2700 = vadd.f32 0.0, %v2699
    %v2701 = vpop.f32.mrf.mxu0
    %v2702 = vpop.f32.mrf.mxu0
    %v2703 = vadd.f32 0.0, %v2702
    %v2704 = vpop.f32.mrf.mxu0
    %2705 = vmatprep.mubr.bf16.mxu0 0
    %2706 = vmatmul.mubr.bf16.gmra.mxu0 %v2551
    %v2707 = vpop.f32.mrf.mxu0
    %v2708 = vadd.f32 0.0, %v2707
    %v2709 = vpop.f32.mrf.mxu0
    %v2710 = vpop.f32.mrf.mxu0
    %v2711 = vadd.f32 0.0, %v2710
    %v2712 = vpop.f32.mrf.mxu0
    %2713 = vdwg.mxu0
    %v2714 = vadd.f32 %v2434, %v2652
    %v2715 = vadd.f32 %v2437, %v2655
    %v2716 = vadd.f32 %v2442, %v2660
    %v2717 = vadd.f32 %v2445, %v2663
    %v2718 = vadd.f32 %v2450, %v2668
    %v2719 = vadd.f32 %v2453, %v2671
    %v2720 = vadd.f32 %v2458, %v2676
    %v2721 = vadd.f32 %v2461, %v2679
    %v2722 = vadd.f32 %v2466, %v2684
    %v2723 = vadd.f32 %v2469, %v2687
    %v2724 = vadd.f32 %v2474, %v2692
    %v2725 = vadd.f32 %v2477, %v2695
    %v2726 = vadd.f32 %v2482, %v2700
    %v2727 = vadd.f32 %v2485, %v2703
    %v2728 = vadd.f32 %v2490, %v2708
    %v2729 = vadd.f32 %v2493, %v2711
    %vm2730 = vcmask 1044480
    %v2731 = vrot.slane %v2077, 3
    %v2732 = vrot.slane %v2078, 3
    %v2733 = vsel %vm2730, %v2731, %v2732
    %v2734 = vrot.slane %v2079, 3
    %v2735 = vsel %vm2730, %v2732, %v2734
    %v2736 = vrot.slane %v2080, 3
    %v2737 = vsel %vm2730, %v2734, %v2736
    %v2738 = vrot.slane %v2081, 3
    %v2739 = vsel %vm2730, %v2736, %v2738
    %v2740 = vrot.slane %v2082, 3
    %v2741 = vsel %vm2730, %v2738, %v2740
    %v2742 = vrot.slane %v2083, 3
    %v2743 = vsel %vm2730, %v2740, %v2742
    %v2744 = vrot.slane %v2084, 3
    %v2745 = vsel %vm2730, %v2742, %v2744
    %v2746 = vrot.slane %v2085, 3
    %v2747 = vsel %vm2730, %v2744, %v2746
    %v2748 = vrot.slane %v2086, 3
    %v2749 = vsel %vm2730, %v2746, %v2748
    %v2750 = vrot.slane %v2087, 3
    %v2751 = vsel %vm2730, %v2748, %v2750
    %v2752 = vrot.slane %v2088, 3
    %v2753 = vsel %vm2730, %v2750, %v2752
    %v2754 = vrot.slane %v2089, 3
    %v2755 = vsel %vm2730, %v2752, %v2754
    %v2756 = vrot.slane %v2090, 3
    %v2757 = vsel %vm2730, %v2754, %v2756
    %v2758 = vrot.slane %v2091, 3
    %v2759 = vsel %vm2730, %v2756, %v2758
    %v2760 = vrot.slane %v2092, 3
    %v2761 = vsel %vm2730, %v2758, %v2760
    %v2778 = vsel %vm2730, %v2760, 0.0
    %v2779 = vpack.c.bf16 %v2735, %v2733
    %v2780 = vpack.c.bf16 %v2739, %v2737
    %v2781 = vpack.c.bf16 %v2743, %v2741
    %v2782 = vpack.c.bf16 %v2747, %v2745
    %v2783 = vpack.c.bf16 %v2751, %v2749
    %v2784 = vpack.c.bf16 %v2755, %v2753
    %v2785 = vpack.c.bf16 %v2759, %v2757
    %v2786 = vpack.c.bf16 %v2778, %v2761
    %s2787 = scalar_lea.vmem [#allocation7], 192
    %v2788 = vld [vmem:[%s2787] sm:$0xf]
    %v2789 = vld [vmem:[%s2787 + $0x4] sm:$0xf]
    %v2790 = vld [vmem:[%s2787 + $0x8] sm:$0xf]
    %v2791 = vld [vmem:[%s2787 + $0xc] sm:$0xf]
    %v2792 = vld [vmem:[%s2787 + $0x10] sm:$0xf]
    %v2793 = vld [vmem:[%s2787 + $0x14] sm:$0xf]
    %v2794 = vld [vmem:[%s2787 + $0x18] sm:$0xf]
    %v2795 = vld [vmem:[%s2787 + $0x1c] sm:$0xf]
    %v2796 = vld [vmem:[%s2787 + $0x20] sm:$0xf]
    %v2797 = vld [vmem:[%s2787 + $0x24] sm:$0xf]
    %v2798 = vld [vmem:[%s2787 + $0x28] sm:$0xf]
    %v2799 = vld [vmem:[%s2787 + $0x2c] sm:$0xf]
    %v2800 = vld [vmem:[%s2787 + $0x30] sm:$0xf]
    %v2801 = vld [vmem:[%s2787 + $0x34] sm:$0xf]
    %v2802 = vld [vmem:[%s2787 + $0x38] sm:$0xf]
    %v2803 = vld [vmem:[%s2787 + $0x3c] sm:$0xf]
    %v2820 = vunpack.c.l.b16 %v2788
    %v2821 = vunpack.c.l.b16 %v2789
    %v2822 = vunpack.c.l.b16 %v2790
    %v2823 = vunpack.c.l.b16 %v2791
    %v2824 = vunpack.c.l.b16 %v2792
    %v2825 = vunpack.c.l.b16 %v2793
    %v2826 = vunpack.c.l.b16 %v2794
    %v2827 = vunpack.c.l.b16 %v2795
    %v2828 = vunpack.c.l.b16 %v2796
    %v2829 = vunpack.c.l.b16 %v2797
    %v2830 = vunpack.c.l.b16 %v2798
    %v2831 = vunpack.c.l.b16 %v2799
    %v2832 = vunpack.c.l.b16 %v2800
    %v2833 = vunpack.c.l.b16 %v2801
    %v2834 = vunpack.c.l.b16 %v2802
    %v2835 = vunpack.c.l.b16 %v2803
    %v2836 = vpack.c.b16 %v2821, %v2820
    %v2837 = vpack.c.b16 %v2823, %v2822
    %v2838 = vpack.c.b16 %v2825, %v2824
    %v2839 = vpack.c.b16 %v2827, %v2826
    %v2840 = vpack.c.b16 %v2829, %v2828
    %v2841 = vpack.c.b16 %v2831, %v2830
    %v2842 = vpack.c.b16 %v2833, %v2832
    %v2843 = vpack.c.b16 %v2835, %v2834
    %2852 = vmatprep.subr.bf16.mxu0 0
    %2853 = vmatpush1.bf16.msra.mxu0 %v2843
    %2854 = vmatprep.subr.bf16.mxu0 0
    %2855 = vmatpush1.bf16.msra.mxu0 %v2842
    %2856 = vmatprep.subr.bf16.mxu0 0
    %2857 = vmatpush1.bf16.msra.mxu0 %v2841
    %2858 = vmatprep.subr.bf16.mxu0 0
    %2859 = vmatpush1.bf16.msra.mxu0 %v2840
    %2860 = vmatprep.subr.bf16.mxu0 0
    %2861 = vmatpush1.bf16.msra.mxu0 %v2839
    %2862 = vmatprep.subr.bf16.mxu0 0
    %2863 = vmatpush1.bf16.msra.mxu0 %v2838
    %2864 = vmatprep.subr.bf16.mxu0 0
    %2865 = vmatpush1.bf16.msra.mxu0 %v2837
    %2866 = vmatprep.subr.bf16.mxu0 0
    %2867 = vmatpush1.bf16.msra.mxu0 %v2836
    %2868 = vmatprep.subr.bf16.mxu0 0
    %2869 = vmatpush2.bf16.msra.mxu0 0
    %2870 = vmatprep.subr.bf16.mxu0 0
    %2871 = vmatpush2.bf16.msra.mxu0 0
    %2872 = vmatprep.subr.bf16.mxu0 0
    %2873 = vmatpush2.bf16.msra.mxu0 0
    %2874 = vmatprep.subr.bf16.mxu0 0
    %2875 = vmatpush2.bf16.msra.mxu0 0
    %2876 = vmatprep.subr.bf16.mxu0 0
    %2877 = vmatpush2.bf16.msra.mxu0 0
    %2878 = vmatprep.subr.bf16.mxu0 0
    %2879 = vmatpush2.bf16.msra.mxu0 0
    %2880 = vmatprep.subr.bf16.mxu0 0
    %2881 = vmatpush2.bf16.msra.mxu0 0
    %2882 = vmatprep.subr.bf16.mxu0 0
    %2883 = vmatpush2.bf16.msra.mxu0 0
    %2884 = vmatprep.mubr.bf16.mxu0 0
    %2885 = vmatmul.mubr.bf16.gmra.mxu0 %v2779
    %v2886 = vpop.f32.mrf.mxu0
    %v2887 = vadd.f32 0.0, %v2886
    %v2888 = vpop.f32.mrf.mxu0
    %v2889 = vpop.f32.mrf.mxu0
    %v2890 = vadd.f32 0.0, %v2889
    %v2891 = vpop.f32.mrf.mxu0
    %2892 = vmatprep.mubr.bf16.mxu0 0
    %2893 = vmatmul.mubr.bf16.gmra.mxu0 %v2780
    %v2894 = vpop.f32.mrf.mxu0
    %v2895 = vadd.f32 0.0, %v2894
    %v2896 = vpop.f32.mrf.mxu0
    %v2897 = vpop.f32.mrf.mxu0
    %v2898 = vadd.f32 0.0, %v2897
    %v2899 = vpop.f32.mrf.mxu0
    %2900 = vmatprep.mubr.bf16.mxu0 0
    %2901 = vmatmul.mubr.bf16.gmra.mxu0 %v2781
    %v2902 = vpop.f32.mrf.mxu0
    %v2903 = vadd.f32 0.0, %v2902
    %v2904 = vpop.f32.mrf.mxu0
    %v2905 = vpop.f32.mrf.mxu0
    %v2906 = vadd.f32 0.0, %v2905
    %v2907 = vpop.f32.mrf.mxu0
    %2908 = vmatprep.mubr.bf16.mxu0 0
    %2909 = vmatmul.mubr.bf16.gmra.mxu0 %v2782
    %v2910 = vpop.f32.mrf.mxu0
    %v2911 = vadd.f32 0.0, %v2910
    %v2912 = vpop.f32.mrf.mxu0
    %v2913 = vpop.f32.mrf.mxu0
    %v2914 = vadd.f32 0.0, %v2913
    %v2915 = vpop.f32.mrf.mxu0
    %2916 = vmatprep.mubr.bf16.mxu0 0
    %2917 = vmatmul.mubr.bf16.gmra.mxu0 %v2783
    %v2918 = vpop.f32.mrf.mxu0
    %v2919 = vadd.f32 0.0, %v2918
    %v2920 = vpop.f32.mrf.mxu0
    %v2921 = vpop.f32.mrf.mxu0
    %v2922 = vadd.f32 0.0, %v2921
    %v2923 = vpop.f32.mrf.mxu0
    %2924 = vmatprep.mubr.bf16.mxu0 0
    %2925 = vmatmul.mubr.bf16.gmra.mxu0 %v2784
    %v2926 = vpop.f32.mrf.mxu0
    %v2927 = vadd.f32 0.0, %v2926
    %v2928 = vpop.f32.mrf.mxu0
    %v2929 = vpop.f32.mrf.mxu0
    %v2930 = vadd.f32 0.0, %v2929
    %v2931 = vpop.f32.mrf.mxu0
    %2932 = vmatprep.mubr.bf16.mxu0 0
    %2933 = vmatmul.mubr.bf16.gmra.mxu0 %v2785
    %v2934 = vpop.f32.mrf.mxu0
    %v2935 = vadd.f32 0.0, %v2934
    %v2936 = vpop.f32.mrf.mxu0
    %v2937 = vpop.f32.mrf.mxu0
    %v2938 = vadd.f32 0.0, %v2937
    %v2939 = vpop.f32.mrf.mxu0
    %2940 = vmatprep.mubr.bf16.mxu0 0
    %2941 = vmatmul.mubr.bf16.gmra.mxu0 %v2786
    %v2942 = vpop.f32.mrf.mxu0
    %v2943 = vadd.f32 0.0, %v2942
    %v2944 = vpop.f32.mrf.mxu0
    %v2945 = vpop.f32.mrf.mxu0
    %v2946 = vadd.f32 0.0, %v2945
    %v2947 = vpop.f32.mrf.mxu0
    %2948 = vdwg.mxu0
    %v2949 = vadd.f32 %v2714, %v2887
    %v2950 = vadd.f32 %v2715, %v2890
    %v2951 = vadd.f32 %v2716, %v2895
    %v2952 = vadd.f32 %v2717, %v2898
    %v2953 = vadd.f32 %v2718, %v2903
    %v2954 = vadd.f32 %v2719, %v2906
    %v2955 = vadd.f32 %v2720, %v2911
    %v2956 = vadd.f32 %v2721, %v2914
    %v2957 = vadd.f32 %v2722, %v2919
    %v2958 = vadd.f32 %v2723, %v2922
    %v2959 = vadd.f32 %v2724, %v2927
    %v2960 = vadd.f32 %v2725, %v2930
    %v2961 = vadd.f32 %v2726, %v2935
    %v2962 = vadd.f32 %v2727, %v2938
    %v2963 = vadd.f32 %v2728, %v2943
    %v2964 = vadd.f32 %v2729, %v2946
    %vm2965 = vcmask 1043456
    %v2966 = vrot.slane %v2077, 4
    %v2967 = vrot.slane %v2078, 4
    %v2968 = vsel %vm2965, %v2966, %v2967
    %v2969 = vrot.slane %v2079, 4
    %v2970 = vsel %vm2965, %v2967, %v2969
    %v2971 = vrot.slane %v2080, 4
    %v2972 = vsel %vm2965, %v2969, %v2971
    %v2973 = vrot.slane %v2081, 4
    %v2974 = vsel %vm2965, %v2971, %v2973
    %v2975 = vrot.slane %v2082, 4
    %v2976 = vsel %vm2965, %v2973, %v2975
    %v2977 = vrot.slane %v2083, 4
    %v2978 = vsel %vm2965, %v2975, %v2977
    %v2979 = vrot.slane %v2084, 4
    %v2980 = vsel %vm2965, %v2977, %v2979
    %v2981 = vrot.slane %v2085, 4
    %v2982 = vsel %vm2965, %v2979, %v2981
    %v2983 = vrot.slane %v2086, 4
    %v2984 = vsel %vm2965, %v2981, %v2983
    %v2985 = vrot.slane %v2087, 4
    %v2986 = vsel %vm2965, %v2983, %v2985
    %v2987 = vrot.slane %v2088, 4
    %v2988 = vsel %vm2965, %v2985, %v2987
    %v2989 = vrot.slane %v2089, 4
    %v2990 = vsel %vm2965, %v2987, %v2989
    %v2991 = vrot.slane %v2090, 4
    %v2992 = vsel %vm2965, %v2989, %v2991
    %v2993 = vrot.slane %v2091, 4
    %v2994 = vsel %vm2965, %v2991, %v2993
    %v2995 = vrot.slane %v2092, 4
    %v2996 = vsel %vm2965, %v2993, %v2995
    %v3013 = vsel %vm2965, %v2995, 0.0
    %v3014 = vpack.c.bf16 %v2970, %v2968
    %v3015 = vpack.c.bf16 %v2974, %v2972
    %v3016 = vpack.c.bf16 %v2978, %v2976
    %v3017 = vpack.c.bf16 %v2982, %v2980
    %v3018 = vpack.c.bf16 %v2986, %v2984
    %v3019 = vpack.c.bf16 %v2990, %v2988
    %v3020 = vpack.c.bf16 %v2994, %v2992
    %v3021 = vpack.c.bf16 %v3013, %v2996
    %s3022 = scalar_lea.vmem [#allocation7], 256
    %v3023 = vld [vmem:[%s3022] sm:$0xf]
    %v3024 = vld [vmem:[%s3022 + $0x4] sm:$0xf]
    %v3025 = vld [vmem:[%s3022 + $0x8] sm:$0xf]
    %v3026 = vld [vmem:[%s3022 + $0xc] sm:$0xf]
    %v3027 = vld [vmem:[%s3022 + $0x10] sm:$0xf]
    %v3028 = vld [vmem:[%s3022 + $0x14] sm:$0xf]
    %v3029 = vld [vmem:[%s3022 + $0x18] sm:$0xf]
    %v3030 = vld [vmem:[%s3022 + $0x1c] sm:$0xf]
    %v3031 = vld [vmem:[%s3022 + $0x20] sm:$0xf]
    %v3032 = vld [vmem:[%s3022 + $0x24] sm:$0xf]
    %v3033 = vld [vmem:[%s3022 + $0x28] sm:$0xf]
    %v3034 = vld [vmem:[%s3022 + $0x2c] sm:$0xf]
    %v3035 = vld [vmem:[%s3022 + $0x30] sm:$0xf]
    %v3036 = vld [vmem:[%s3022 + $0x34] sm:$0xf]
    %v3037 = vld [vmem:[%s3022 + $0x38] sm:$0xf]
    %v3038 = vld [vmem:[%s3022 + $0x3c] sm:$0xf]
    %v3055 = vunpack.c.l.b16 %v3023
    %v3056 = vunpack.c.l.b16 %v3024
    %v3057 = vunpack.c.l.b16 %v3025
    %v3058 = vunpack.c.l.b16 %v3026
    %v3059 = vunpack.c.l.b16 %v3027
    %v3060 = vunpack.c.l.b16 %v3028
    %v3061 = vunpack.c.l.b16 %v3029
    %v3062 = vunpack.c.l.b16 %v3030
    %v3063 = vunpack.c.l.b16 %v3031
    %v3064 = vunpack.c.l.b16 %v3032
    %v3065 = vunpack.c.l.b16 %v3033
    %v3066 = vunpack.c.l.b16 %v3034
    %v3067 = vunpack.c.l.b16 %v3035
    %v3068 = vunpack.c.l.b16 %v3036
    %v3069 = vunpack.c.l.b16 %v3037
    %v3070 = vunpack.c.l.b16 %v3038
    %v3071 = vpack.c.b16 %v3056, %v3055
    %v3072 = vpack.c.b16 %v3058, %v3057
    %v3073 = vpack.c.b16 %v3060, %v3059
    %v3074 = vpack.c.b16 %v3062, %v3061
    %v3075 = vpack.c.b16 %v3064, %v3063
    %v3076 = vpack.c.b16 %v3066, %v3065
    %v3077 = vpack.c.b16 %v3068, %v3067
    %v3078 = vpack.c.b16 %v3070, %v3069
    %3087 = vmatprep.subr.bf16.mxu0 0
    %3088 = vmatpush1.bf16.msra.mxu0 %v3078
    %3089 = vmatprep.subr.bf16.mxu0 0
    %3090 = vmatpush1.bf16.msra.mxu0 %v3077
    %3091 = vmatprep.subr.bf16.mxu0 0
    %3092 = vmatpush1.bf16.msra.mxu0 %v3076
    %3093 = vmatprep.subr.bf16.mxu0 0
    %3094 = vmatpush1.bf16.msra.mxu0 %v3075
    %3095 = vmatprep.subr.bf16.mxu0 0
    %3096 = vmatpush1.bf16.msra.mxu0 %v3074
    %3097 = vmatprep.subr.bf16.mxu0 0
    %3098 = vmatpush1.bf16.msra.mxu0 %v3073
    %3099 = vmatprep.subr.bf16.mxu0 0
    %3100 = vmatpush1.bf16.msra.mxu0 %v3072
    %3101 = vmatprep.subr.bf16.mxu0 0
    %3102 = vmatpush1.bf16.msra.mxu0 %v3071
    %3103 = vmatprep.subr.bf16.mxu0 0
    %3104 = vmatpush2.bf16.msra.mxu0 0
    %3105 = vmatprep.subr.bf16.mxu0 0
    %3106 = vmatpush2.bf16.msra.mxu0 0
    %3107 = vmatprep.subr.bf16.mxu0 0
    %3108 = vmatpush2.bf16.msra.mxu0 0
    %3109 = vmatprep.subr.bf16.mxu0 0
    %3110 = vmatpush2.bf16.msra.mxu0 0
    %3111 = vmatprep.subr.bf16.mxu0 0
    %3112 = vmatpush2.bf16.msra.mxu0 0
    %3113 = vmatprep.subr.bf16.mxu0 0
    %3114 = vmatpush2.bf16.msra.mxu0 0
    %3115 = vmatprep.subr.bf16.mxu0 0
    %3116 = vmatpush2.bf16.msra.mxu0 0
    %3117 = vmatprep.subr.bf16.mxu0 0
    %3118 = vmatpush2.bf16.msra.mxu0 0
    %3119 = vmatprep.mubr.bf16.mxu0 0
    %3120 = vmatmul.mubr.bf16.gmra.mxu0 %v3014
    %v3121 = vpop.f32.mrf.mxu0
    %v3122 = vadd.f32 0.0, %v3121
    %v3123 = vpop.f32.mrf.mxu0
    %v3124 = vpop.f32.mrf.mxu0
    %v3125 = vadd.f32 0.0, %v3124
    %v3126 = vpop.f32.mrf.mxu0
    %3127 = vmatprep.mubr.bf16.mxu0 0
    %3128 = vmatmul.mubr.bf16.gmra.mxu0 %v3015
    %v3129 = vpop.f32.mrf.mxu0
    %v3130 = vadd.f32 0.0, %v3129
    %v3131 = vpop.f32.mrf.mxu0
    %v3132 = vpop.f32.mrf.mxu0
    %v3133 = vadd.f32 0.0, %v3132
    %v3134 = vpop.f32.mrf.mxu0
    %3135 = vmatprep.mubr.bf16.mxu0 0
    %3136 = vmatmul.mubr.bf16.gmra.mxu0 %v3016
    %v3137 = vpop.f32.mrf.mxu0
    %v3138 = vadd.f32 0.0, %v3137
    %v3139 = vpop.f32.mrf.mxu0
    %v3140 = vpop.f32.mrf.mxu0
    %v3141 = vadd.f32 0.0, %v3140
    %v3142 = vpop.f32.mrf.mxu0
    %3143 = vmatprep.mubr.bf16.mxu0 0
    %3144 = vmatmul.mubr.bf16.gmra.mxu0 %v3017
    %v3145 = vpop.f32.mrf.mxu0
    %v3146 = vadd.f32 0.0, %v3145
    %v3147 = vpop.f32.mrf.mxu0
    %v3148 = vpop.f32.mrf.mxu0
    %v3149 = vadd.f32 0.0, %v3148
    %v3150 = vpop.f32.mrf.mxu0
    %3151 = vmatprep.mubr.bf16.mxu0 0
    %3152 = vmatmul.mubr.bf16.gmra.mxu0 %v3018
    %v3153 = vpop.f32.mrf.mxu0
    %v3154 = vadd.f32 0.0, %v3153
    %v3155 = vpop.f32.mrf.mxu0
    %v3156 = vpop.f32.mrf.mxu0
    %v3157 = vadd.f32 0.0, %v3156
    %v3158 = vpop.f32.mrf.mxu0
    %3159 = vmatprep.mubr.bf16.mxu0 0
    %3160 = vmatmul.mubr.bf16.gmra.mxu0 %v3019
    %v3161 = vpop.f32.mrf.mxu0
    %v3162 = vadd.f32 0.0, %v3161
    %v3163 = vpop.f32.mrf.mxu0
    %v3164 = vpop.f32.mrf.mxu0
    %v3165 = vadd.f32 0.0, %v3164
    %v3166 = vpop.f32.mrf.mxu0
    %3167 = vmatprep.mubr.bf16.mxu0 0
    %3168 = vmatmul.mubr.bf16.gmra.mxu0 %v3020
    %v3169 = vpop.f32.mrf.mxu0
    %v3170 = vadd.f32 0.0, %v3169
    %v3171 = vpop.f32.mrf.mxu0
    %v3172 = vpop.f32.mrf.mxu0
    %v3173 = vadd.f32 0.0, %v3172
    %v3174 = vpop.f32.mrf.mxu0
    %3175 = vmatprep.mubr.bf16.mxu0 0
    %3176 = vmatmul.mubr.bf16.gmra.mxu0 %v3021
    %v3177 = vpop.f32.mrf.mxu0
    %v3178 = vadd.f32 0.0, %v3177
    %v3179 = vpop.f32.mrf.mxu0
    %v3180 = vpop.f32.mrf.mxu0
    %v3181 = vadd.f32 0.0, %v3180
    %v3182 = vpop.f32.mrf.mxu0
    %3183 = vdwg.mxu0
    %v3184 = vadd.f32 %v2949, %v3122
    %v3185 = vadd.f32 %v2950, %v3125
    %v3186 = vadd.f32 %v2951, %v3130
    %v3187 = vadd.f32 %v2952, %v3133
    %v3188 = vadd.f32 %v2953, %v3138
    %v3189 = vadd.f32 %v2954, %v3141
    %v3190 = vadd.f32 %v2955, %v3146
    %v3191 = vadd.f32 %v2956, %v3149
    %v3192 = vadd.f32 %v2957, %v3154
    %v3193 = vadd.f32 %v2958, %v3157
    %v3194 = vadd.f32 %v2959, %v3162
    %v3195 = vadd.f32 %v2960, %v3165
    %v3196 = vadd.f32 %v2961, %v3170
    %v3197 = vadd.f32 %v2962, %v3173
    %v3198 = vadd.f32 %v2963, %v3178
    %v3199 = vadd.f32 %v2964, %v3181
    %vm3200 = vcmask 1042432
    %v3201 = vrot.slane %v2077, 5
    %v3202 = vrot.slane %v2078, 5
    %v3203 = vsel %vm3200, %v3201, %v3202
    %v3204 = vrot.slane %v2079, 5
    %v3205 = vsel %vm3200, %v3202, %v3204
    %v3206 = vrot.slane %v2080, 5
    %v3207 = vsel %vm3200, %v3204, %v3206
    %v3208 = vrot.slane %v2081, 5
    %v3209 = vsel %vm3200, %v3206, %v3208
    %v3210 = vrot.slane %v2082, 5
    %v3211 = vsel %vm3200, %v3208, %v3210
    %v3212 = vrot.slane %v2083, 5
    %v3213 = vsel %vm3200, %v3210, %v3212
    %v3214 = vrot.slane %v2084, 5
    %v3215 = vsel %vm3200, %v3212, %v3214
    %v3216 = vrot.slane %v2085, 5
    %v3217 = vsel %vm3200, %v3214, %v3216
    %v3218 = vrot.slane %v2086, 5
    %v3219 = vsel %vm3200, %v3216, %v3218
    %v3220 = vrot.slane %v2087, 5
    %v3221 = vsel %vm3200, %v3218, %v3220
    %v3222 = vrot.slane %v2088, 5
    %v3223 = vsel %vm3200, %v3220, %v3222
    %v3224 = vrot.slane %v2089, 5
    %v3225 = vsel %vm3200, %v3222, %v3224
    %v3226 = vrot.slane %v2090, 5
    %v3227 = vsel %vm3200, %v3224, %v3226
    %v3228 = vrot.slane %v2091, 5
    %v3229 = vsel %vm3200, %v3226, %v3228
    %v3230 = vrot.slane %v2092, 5
    %v3231 = vsel %vm3200, %v3228, %v3230
    %v3248 = vsel %vm3200, %v3230, 0.0
    %v3249 = vpack.c.bf16 %v3205, %v3203
    %v3250 = vpack.c.bf16 %v3209, %v3207
    %v3251 = vpack.c.bf16 %v3213, %v3211
    %v3252 = vpack.c.bf16 %v3217, %v3215
    %v3253 = vpack.c.bf16 %v3221, %v3219
    %v3254 = vpack.c.bf16 %v3225, %v3223
    %v3255 = vpack.c.bf16 %v3229, %v3227
    %v3256 = vpack.c.bf16 %v3248, %v3231
    %s3257 = scalar_lea.vmem [#allocation7], 320
    %v3258 = vld [vmem:[%s3257] sm:$0xf]
    %v3259 = vld [vmem:[%s3257 + $0x4] sm:$0xf]
    %v3260 = vld [vmem:[%s3257 + $0x8] sm:$0xf]
    %v3261 = vld [vmem:[%s3257 + $0xc] sm:$0xf]
    %v3262 = vld [vmem:[%s3257 + $0x10] sm:$0xf]
    %v3263 = vld [vmem:[%s3257 + $0x14] sm:$0xf]
    %v3264 = vld [vmem:[%s3257 + $0x18] sm:$0xf]
    %v3265 = vld [vmem:[%s3257 + $0x1c] sm:$0xf]
    %v3266 = vld [vmem:[%s3257 + $0x20] sm:$0xf]
    %v3267 = vld [vmem:[%s3257 + $0x24] sm:$0xf]
    %v3268 = vld [vmem:[%s3257 + $0x28] sm:$0xf]
    %v3269 = vld [vmem:[%s3257 + $0x2c] sm:$0xf]
    %v3270 = vld [vmem:[%s3257 + $0x30] sm:$0xf]
    %v3271 = vld [vmem:[%s3257 + $0x34] sm:$0xf]
    %v3272 = vld [vmem:[%s3257 + $0x38] sm:$0xf]
    %v3273 = vld [vmem:[%s3257 + $0x3c] sm:$0xf]
    %v3290 = vunpack.c.l.b16 %v3258
    %v3291 = vunpack.c.l.b16 %v3259
    %v3292 = vunpack.c.l.b16 %v3260
    %v3293 = vunpack.c.l.b16 %v3261
    %v3294 = vunpack.c.l.b16 %v3262
    %v3295 = vunpack.c.l.b16 %v3263
    %v3296 = vunpack.c.l.b16 %v3264
    %v3297 = vunpack.c.l.b16 %v3265
    %v3298 = vunpack.c.l.b16 %v3266
    %v3299 = vunpack.c.l.b16 %v3267
    %v3300 = vunpack.c.l.b16 %v3268
    %v3301 = vunpack.c.l.b16 %v3269
    %v3302 = vunpack.c.l.b16 %v3270
    %v3303 = vunpack.c.l.b16 %v3271
    %v3304 = vunpack.c.l.b16 %v3272
    %v3305 = vunpack.c.l.b16 %v3273
    %v3306 = vpack.c.b16 %v3291, %v3290
    %v3307 = vpack.c.b16 %v3293, %v3292
    %v3308 = vpack.c.b16 %v3295, %v3294
    %v3309 = vpack.c.b16 %v3297, %v3296
    %v3310 = vpack.c.b16 %v3299, %v3298
    %v3311 = vpack.c.b16 %v3301, %v3300
    %v3312 = vpack.c.b16 %v3303, %v3302
    %v3313 = vpack.c.b16 %v3305, %v3304
    %3322 = vmatprep.subr.bf16.mxu0 0
    %3323 = vmatpush1.bf16.msra.mxu0 %v3313
    %3324 = vmatprep.subr.bf16.mxu0 0
    %3325 = vmatpush1.bf16.msra.mxu0 %v3312
    %3326 = vmatprep.subr.bf16.mxu0 0
    %3327 = vmatpush1.bf16.msra.mxu0 %v3311
    %3328 = vmatprep.subr.bf16.mxu0 0
    %3329 = vmatpush1.bf16.msra.mxu0 %v3310
    %3330 = vmatprep.subr.bf16.mxu0 0
    %3331 = vmatpush1.bf16.msra.mxu0 %v3309
    %3332 = vmatprep.subr.bf16.mxu0 0
    %3333 = vmatpush1.bf16.msra.mxu0 %v3308
    %3334 = vmatprep.subr.bf16.mxu0 0
    %3335 = vmatpush1.bf16.msra.mxu0 %v3307
    %3336 = vmatprep.subr.bf16.mxu0 0
    %3337 = vmatpush1.bf16.msra.mxu0 %v3306
    %3338 = vmatprep.subr.bf16.mxu0 0
    %3339 = vmatpush2.bf16.msra.mxu0 0
    %3340 = vmatprep.subr.bf16.mxu0 0
    %3341 = vmatpush2.bf16.msra.mxu0 0
    %3342 = vmatprep.subr.bf16.mxu0 0
    %3343 = vmatpush2.bf16.msra.mxu0 0
    %3344 = vmatprep.subr.bf16.mxu0 0
    %3345 = vmatpush2.bf16.msra.mxu0 0
    %3346 = vmatprep.subr.bf16.mxu0 0
    %3347 = vmatpush2.bf16.msra.mxu0 0
    %3348 = vmatprep.subr.bf16.mxu0 0
    %3349 = vmatpush2.bf16.msra.mxu0 0
    %3350 = vmatprep.subr.bf16.mxu0 0
    %3351 = vmatpush2.bf16.msra.mxu0 0
    %3352 = vmatprep.subr.bf16.mxu0 0
    %3353 = vmatpush2.bf16.msra.mxu0 0
    %3354 = vmatprep.mubr.bf16.mxu0 0
    %3355 = vmatmul.mubr.bf16.gmra.mxu0 %v3249
    %v3356 = vpop.f32.mrf.mxu0
    %v3357 = vadd.f32 0.0, %v3356
    %v3358 = vpop.f32.mrf.mxu0
    %v3359 = vpop.f32.mrf.mxu0
    %v3360 = vadd.f32 0.0, %v3359
    %v3361 = vpop.f32.mrf.mxu0
    %3362 = vmatprep.mubr.bf16.mxu0 0
    %3363 = vmatmul.mubr.bf16.gmra.mxu0 %v3250
    %v3364 = vpop.f32.mrf.mxu0
    %v3365 = vadd.f32 0.0, %v3364
    %v3366 = vpop.f32.mrf.mxu0
    %v3367 = vpop.f32.mrf.mxu0
    %v3368 = vadd.f32 0.0, %v3367
    %v3369 = vpop.f32.mrf.mxu0
    %3370 = vmatprep.mubr.bf16.mxu0 0
    %3371 = vmatmul.mubr.bf16.gmra.mxu0 %v3251
    %v3372 = vpop.f32.mrf.mxu0
    %v3373 = vadd.f32 0.0, %v3372
    %v3374 = vpop.f32.mrf.mxu0
    %v3375 = vpop.f32.mrf.mxu0
    %v3376 = vadd.f32 0.0, %v3375
    %v3377 = vpop.f32.mrf.mxu0
    %3378 = vmatprep.mubr.bf16.mxu0 0
    %3379 = vmatmul.mubr.bf16.gmra.mxu0 %v3252
    %v3380 = vpop.f32.mrf.mxu0
    %v3381 = vadd.f32 0.0, %v3380
    %v3382 = vpop.f32.mrf.mxu0
    %v3383 = vpop.f32.mrf.mxu0
    %v3384 = vadd.f32 0.0, %v3383
    %v3385 = vpop.f32.mrf.mxu0
    %3386 = vmatprep.mubr.bf16.mxu0 0
    %3387 = vmatmul.mubr.bf16.gmra.mxu0 %v3253
    %v3388 = vpop.f32.mrf.mxu0
    %v3389 = vadd.f32 0.0, %v3388
    %v3390 = vpop.f32.mrf.mxu0
    %v3391 = vpop.f32.mrf.mxu0
    %v3392 = vadd.f32 0.0, %v3391
    %v3393 = vpop.f32.mrf.mxu0
    %3394 = vmatprep.mubr.bf16.mxu0 0
    %3395 = vmatmul.mubr.bf16.gmra.mxu0 %v3254
    %v3396 = vpop.f32.mrf.mxu0
    %v3397 = vadd.f32 0.0, %v3396
    %v3398 = vpop.f32.mrf.mxu0
    %v3399 = vpop.f32.mrf.mxu0
    %v3400 = vadd.f32 0.0, %v3399
    %v3401 = vpop.f32.mrf.mxu0
    %3402 = vmatprep.mubr.bf16.mxu0 0
    %3403 = vmatmul.mubr.bf16.gmra.mxu0 %v3255
    %v3404 = vpop.f32.mrf.mxu0
    %v3405 = vadd.f32 0.0, %v3404
    %v3406 = vpop.f32.mrf.mxu0
    %v3407 = vpop.f32.mrf.mxu0
    %v3408 = vadd.f32 0.0, %v3407
    %v3409 = vpop.f32.mrf.mxu0
    %3410 = vmatprep.mubr.bf16.mxu0 0
    %3411 = vmatmul.mubr.bf16.gmra.mxu0 %v3256
    %v3412 = vpop.f32.mrf.mxu0
    %v3413 = vadd.f32 0.0, %v3412
    %v3414 = vpop.f32.mrf.mxu0
    %v3415 = vpop.f32.mrf.mxu0
    %v3416 = vadd.f32 0.0, %v3415
    %v3417 = vpop.f32.mrf.mxu0
    %3418 = vdwg.mxu0
    %v3419 = vadd.f32 %v3184, %v3357
    %v3420 = vadd.f32 %v3185, %v3360
    %v3421 = vadd.f32 %v3186, %v3365
    %v3422 = vadd.f32 %v3187, %v3368
    %v3423 = vadd.f32 %v3188, %v3373
    %v3424 = vadd.f32 %v3189, %v3376
    %v3425 = vadd.f32 %v3190, %v3381
    %v3426 = vadd.f32 %v3191, %v3384
    %v3427 = vadd.f32 %v3192, %v3389
    %v3428 = vadd.f32 %v3193, %v3392
    %v3429 = vadd.f32 %v3194, %v3397
    %v3430 = vadd.f32 %v3195, %v3400
    %v3431 = vadd.f32 %v3196, %v3405
    %v3432 = vadd.f32 %v3197, %v3408
    %v3433 = vadd.f32 %v3198, %v3413
    %v3434 = vadd.f32 %v3199, %v3416
    %vm3435 = vcmask 1041408
    %v3436 = vrot.slane %v2077, 6
    %v3437 = vrot.slane %v2078, 6
    %v3438 = vsel %vm3435, %v3436, %v3437
    %v3439 = vrot.slane %v2079, 6
    %v3440 = vsel %vm3435, %v3437, %v3439
    %v3441 = vrot.slane %v2080, 6
    %v3442 = vsel %vm3435, %v3439, %v3441
    %v3443 = vrot.slane %v2081, 6
    %v3444 = vsel %vm3435, %v3441, %v3443
    %v3445 = vrot.slane %v2082, 6
    %v3446 = vsel %vm3435, %v3443, %v3445
    %v3447 = vrot.slane %v2083, 6
    %v3448 = vsel %vm3435, %v3445, %v3447
    %v3449 = vrot.slane %v2084, 6
    %v3450 = vsel %vm3435, %v3447, %v3449
    %v3451 = vrot.slane %v2085, 6
    %v3452 = vsel %vm3435, %v3449, %v3451
    %v3453 = vrot.slane %v2086, 6
    %v3454 = vsel %vm3435, %v3451, %v3453
    %v3455 = vrot.slane %v2087, 6
    %v3456 = vsel %vm3435, %v3453, %v3455
    %v3457 = vrot.slane %v2088, 6
    %v3458 = vsel %vm3435, %v3455, %v3457
    %v3459 = vrot.slane %v2089, 6
    %v3460 = vsel %vm3435, %v3457, %v3459
    %v3461 = vrot.slane %v2090, 6
    %v3462 = vsel %vm3435, %v3459, %v3461
    %v3463 = vrot.slane %v2091, 6
    %v3464 = vsel %vm3435, %v3461, %v3463
    %v3465 = vrot.slane %v2092, 6
    %v3466 = vsel %vm3435, %v3463, %v3465
    %v3483 = vsel %vm3435, %v3465, 0.0
    %v3484 = vpack.c.bf16 %v3440, %v3438
    %v3485 = vpack.c.bf16 %v3444, %v3442
    %v3486 = vpack.c.bf16 %v3448, %v3446
    %v3487 = vpack.c.bf16 %v3452, %v3450
    %v3488 = vpack.c.bf16 %v3456, %v3454
    %v3489 = vpack.c.bf16 %v3460, %v3458
    %v3490 = vpack.c.bf16 %v3464, %v3462
    %v3491 = vpack.c.bf16 %v3483, %v3466
    %s3492 = scalar_lea.vmem [#allocation7], 384
    %v3493 = vld [vmem:[%s3492] sm:$0xf]
    %v3494 = vld [vmem:[%s3492 + $0x4] sm:$0xf]
    %v3495 = vld [vmem:[%s3492 + $0x8] sm:$0xf]
    %v3496 = vld [vmem:[%s3492 + $0xc] sm:$0xf]
    %v3497 = vld [vmem:[%s3492 + $0x10] sm:$0xf]
    %v3498 = vld [vmem:[%s3492 + $0x14] sm:$0xf]
    %v3499 = vld [vmem:[%s3492 + $0x18] sm:$0xf]
    %v3500 = vld [vmem:[%s3492 + $0x1c] sm:$0xf]
    %v3501 = vld [vmem:[%s3492 + $0x20] sm:$0xf]
    %v3502 = vld [vmem:[%s3492 + $0x24] sm:$0xf]
    %v3503 = vld [vmem:[%s3492 + $0x28] sm:$0xf]
    %v3504 = vld [vmem:[%s3492 + $0x2c] sm:$0xf]
    %v3505 = vld [vmem:[%s3492 + $0x30] sm:$0xf]
    %v3506 = vld [vmem:[%s3492 + $0x34] sm:$0xf]
    %v3507 = vld [vmem:[%s3492 + $0x38] sm:$0xf]
    %v3508 = vld [vmem:[%s3492 + $0x3c] sm:$0xf]
    %v3525 = vunpack.c.l.b16 %v3493
    %v3526 = vunpack.c.l.b16 %v3494
    %v3527 = vunpack.c.l.b16 %v3495
    %v3528 = vunpack.c.l.b16 %v3496
    %v3529 = vunpack.c.l.b16 %v3497
    %v3530 = vunpack.c.l.b16 %v3498
    %v3531 = vunpack.c.l.b16 %v3499
    %v3532 = vunpack.c.l.b16 %v3500
    %v3533 = vunpack.c.l.b16 %v3501
    %v3534 = vunpack.c.l.b16 %v3502
    %v3535 = vunpack.c.l.b16 %v3503
    %v3536 = vunpack.c.l.b16 %v3504
    %v3537 = vunpack.c.l.b16 %v3505
    %v3538 = vunpack.c.l.b16 %v3506
    %v3539 = vunpack.c.l.b16 %v3507
    %v3540 = vunpack.c.l.b16 %v3508
    %v3541 = vpack.c.b16 %v3526, %v3525
    %v3542 = vpack.c.b16 %v3528, %v3527
    %v3543 = vpack.c.b16 %v3530, %v3529
    %v3544 = vpack.c.b16 %v3532, %v3531
    %v3545 = vpack.c.b16 %v3534, %v3533
    %v3546 = vpack.c.b16 %v3536, %v3535
    %v3547 = vpack.c.b16 %v3538, %v3537
    %v3548 = vpack.c.b16 %v3540, %v3539
    %3557 = vmatprep.subr.bf16.mxu0 0
    %3558 = vmatpush1.bf16.msra.mxu0 %v3548
    %3559 = vmatprep.subr.bf16.mxu0 0
    %3560 = vmatpush1.bf16.msra.mxu0 %v3547
    %3561 = vmatprep.subr.bf16.mxu0 0
    %3562 = vmatpush1.bf16.msra.mxu0 %v3546
    %3563 = vmatprep.subr.bf16.mxu0 0
    %3564 = vmatpush1.bf16.msra.mxu0 %v3545
    %3565 = vmatprep.subr.bf16.mxu0 0
    %3566 = vmatpush1.bf16.msra.mxu0 %v3544
    %3567 = vmatprep.subr.bf16.mxu0 0
    %3568 = vmatpush1.bf16.msra.mxu0 %v3543
    %3569 = vmatprep.subr.bf16.mxu0 0
    %3570 = vmatpush1.bf16.msra.mxu0 %v3542
    %3571 = vmatprep.subr.bf16.mxu0 0
    %3572 = vmatpush1.bf16.msra.mxu0 %v3541
    %3573 = vmatprep.subr.bf16.mxu0 0
    %3574 = vmatpush2.bf16.msra.mxu0 0
    %3575 = vmatprep.subr.bf16.mxu0 0
    %3576 = vmatpush2.bf16.msra.mxu0 0
    %3577 = vmatprep.subr.bf16.mxu0 0
    %3578 = vmatpush2.bf16.msra.mxu0 0
    %3579 = vmatprep.subr.bf16.mxu0 0
    %3580 = vmatpush2.bf16.msra.mxu0 0
    %3581 = vmatprep.subr.bf16.mxu0 0
    %3582 = vmatpush2.bf16.msra.mxu0 0
    %3583 = vmatprep.subr.bf16.mxu0 0
    %3584 = vmatpush2.bf16.msra.mxu0 0
    %3585 = vmatprep.subr.bf16.mxu0 0
    %3586 = vmatpush2.bf16.msra.mxu0 0
    %3587 = vmatprep.subr.bf16.mxu0 0
    %3588 = vmatpush2.bf16.msra.mxu0 0
    %3589 = vmatprep.mubr.bf16.mxu0 0
    %3590 = vmatmul.mubr.bf16.gmra.mxu0 %v3484
    %v3591 = vpop.f32.mrf.mxu0
    %v3592 = vadd.f32 0.0, %v3591
    %v3593 = vpop.f32.mrf.mxu0
    %v3594 = vpop.f32.mrf.mxu0
    %v3595 = vadd.f32 0.0, %v3594
    %v3596 = vpop.f32.mrf.mxu0
    %3597 = vmatprep.mubr.bf16.mxu0 0
    %3598 = vmatmul.mubr.bf16.gmra.mxu0 %v3485
    %v3599 = vpop.f32.mrf.mxu0
    %v3600 = vadd.f32 0.0, %v3599
    %v3601 = vpop.f32.mrf.mxu0
    %v3602 = vpop.f32.mrf.mxu0
    %v3603 = vadd.f32 0.0, %v3602
    %v3604 = vpop.f32.mrf.mxu0
    %3605 = vmatprep.mubr.bf16.mxu0 0
    %3606 = vmatmul.mubr.bf16.gmra.mxu0 %v3486
    %v3607 = vpop.f32.mrf.mxu0
    %v3608 = vadd.f32 0.0, %v3607
    %v3609 = vpop.f32.mrf.mxu0
    %v3610 = vpop.f32.mrf.mxu0
    %v3611 = vadd.f32 0.0, %v3610
    %v3612 = vpop.f32.mrf.mxu0
    %3613 = vmatprep.mubr.bf16.mxu0 0
    %3614 = vmatmul.mubr.bf16.gmra.mxu0 %v3487
    %v3615 = vpop.f32.mrf.mxu0
    %v3616 = vadd.f32 0.0, %v3615
    %v3617 = vpop.f32.mrf.mxu0
    %v3618 = vpop.f32.mrf.mxu0
    %v3619 = vadd.f32 0.0, %v3618
    %v3620 = vpop.f32.mrf.mxu0
    %3621 = vmatprep.mubr.bf16.mxu0 0
    %3622 = vmatmul.mubr.bf16.gmra.mxu0 %v3488
    %v3623 = vpop.f32.mrf.mxu0
    %v3624 = vadd.f32 0.0, %v3623
    %v3625 = vpop.f32.mrf.mxu0
    %v3626 = vpop.f32.mrf.mxu0
    %v3627 = vadd.f32 0.0, %v3626
    %v3628 = vpop.f32.mrf.mxu0
    %3629 = vmatprep.mubr.bf16.mxu0 0
    %3630 = vmatmul.mubr.bf16.gmra.mxu0 %v3489
    %v3631 = vpop.f32.mrf.mxu0
    %v3632 = vadd.f32 0.0, %v3631
    %v3633 = vpop.f32.mrf.mxu0
    %v3634 = vpop.f32.mrf.mxu0
    %v3635 = vadd.f32 0.0, %v3634
    %v3636 = vpop.f32.mrf.mxu0
    %3637 = vmatprep.mubr.bf16.mxu0 0
    %3638 = vmatmul.mubr.bf16.gmra.mxu0 %v3490
    %v3639 = vpop.f32.mrf.mxu0
    %v3640 = vadd.f32 0.0, %v3639
    %v3641 = vpop.f32.mrf.mxu0
    %v3642 = vpop.f32.mrf.mxu0
    %v3643 = vadd.f32 0.0, %v3642
    %v3644 = vpop.f32.mrf.mxu0
    %3645 = vmatprep.mubr.bf16.mxu0 0
    %3646 = vmatmul.mubr.bf16.gmra.mxu0 %v3491
    %v3647 = vpop.f32.mrf.mxu0
    %v3648 = vadd.f32 0.0, %v3647
    %v3649 = vpop.f32.mrf.mxu0
    %v3650 = vpop.f32.mrf.mxu0
    %v3651 = vadd.f32 0.0, %v3650
    %v3652 = vpop.f32.mrf.mxu0
    %3653 = vdwg.mxu0
    %v3654 = vadd.f32 %v3419, %v3592
    %v3655 = vadd.f32 %v3420, %v3595
    %v3656 = vadd.f32 %v3421, %v3600
    %v3657 = vadd.f32 %v3422, %v3603
    %v3658 = vadd.f32 %v3423, %v3608
    %v3659 = vadd.f32 %v3424, %v3611
    %v3660 = vadd.f32 %v3425, %v3616
    %v3661 = vadd.f32 %v3426, %v3619
    %v3662 = vadd.f32 %v3427, %v3624
    %v3663 = vadd.f32 %v3428, %v3627
    %v3664 = vadd.f32 %v3429, %v3632
    %v3665 = vadd.f32 %v3430, %v3635
    %v3666 = vadd.f32 %v3431, %v3640
    %v3667 = vadd.f32 %v3432, %v3643
    %v3668 = vadd.f32 %v3433, %v3648
    %v3669 = vadd.f32 %v3434, %v3651
    %vm3670 = vcmask 1040384
    %v3671 = vrot.slane %v2077, 7
    %v3672 = vrot.slane %v2078, 7
    %v3673 = vsel %vm3670, %v3671, %v3672
    %v3674 = vrot.slane %v2079, 7
    %v3675 = vsel %vm3670, %v3672, %v3674
    %v3676 = vrot.slane %v2080, 7
    %v3677 = vsel %vm3670, %v3674, %v3676
    %v3678 = vrot.slane %v2081, 7
    %v3679 = vsel %vm3670, %v3676, %v3678
    %v3680 = vrot.slane %v2082, 7
    %v3681 = vsel %vm3670, %v3678, %v3680
    %v3682 = vrot.slane %v2083, 7
    %v3683 = vsel %vm3670, %v3680, %v3682
    %v3684 = vrot.slane %v2084, 7
    %v3685 = vsel %vm3670, %v3682, %v3684
    %v3686 = vrot.slane %v2085, 7
    %v3687 = vsel %vm3670, %v3684, %v3686
    %v3688 = vrot.slane %v2086, 7
    %v3689 = vsel %vm3670, %v3686, %v3688
    %v3690 = vrot.slane %v2087, 7
    %v3691 = vsel %vm3670, %v3688, %v3690
    %v3692 = vrot.slane %v2088, 7
    %v3693 = vsel %vm3670, %v3690, %v3692
    %v3694 = vrot.slane %v2089, 7
    %v3695 = vsel %vm3670, %v3692, %v3694
    %v3696 = vrot.slane %v2090, 7
    %v3697 = vsel %vm3670, %v3694, %v3696
    %v3698 = vrot.slane %v2091, 7
    %v3699 = vsel %vm3670, %v3696, %v3698
    %v3700 = vrot.slane %v2092, 7
    %v3701 = vsel %vm3670, %v3698, %v3700
    %v3718 = vsel %vm3670, %v3700, 0.0
    %v3719 = vpack.c.bf16 %v3675, %v3673
    %v3720 = vpack.c.bf16 %v3679, %v3677
    %v3721 = vpack.c.bf16 %v3683, %v3681
    %v3722 = vpack.c.bf16 %v3687, %v3685
    %v3723 = vpack.c.bf16 %v3691, %v3689
    %v3724 = vpack.c.bf16 %v3695, %v3693
    %v3725 = vpack.c.bf16 %v3699, %v3697
    %v3726 = vpack.c.bf16 %v3718, %v3701
    %s3727 = scalar_lea.vmem [#allocation7], 448
    %v3728 = vld [vmem:[%s3727] sm:$0xf]
    %v3729 = vld [vmem:[%s3727 + $0x4] sm:$0xf]
    %v3730 = vld [vmem:[%s3727 + $0x8] sm:$0xf]
    %v3731 = vld [vmem:[%s3727 + $0xc] sm:$0xf]
    %v3732 = vld [vmem:[%s3727 + $0x10] sm:$0xf]
    %v3733 = vld [vmem:[%s3727 + $0x14] sm:$0xf]
    %v3734 = vld [vmem:[%s3727 + $0x18] sm:$0xf]
    %v3735 = vld [vmem:[%s3727 + $0x1c] sm:$0xf]
    %v3736 = vld [vmem:[%s3727 + $0x20] sm:$0xf]
    %v3737 = vld [vmem:[%s3727 + $0x24] sm:$0xf]
    %v3738 = vld [vmem:[%s3727 + $0x28] sm:$0xf]
    %v3739 = vld [vmem:[%s3727 + $0x2c] sm:$0xf]
    %v3740 = vld [vmem:[%s3727 + $0x30] sm:$0xf]
    %v3741 = vld [vmem:[%s3727 + $0x34] sm:$0xf]
    %v3742 = vld [vmem:[%s3727 + $0x38] sm:$0xf]
    %v3743 = vld [vmem:[%s3727 + $0x3c] sm:$0xf]
    %v3760 = vunpack.c.l.b16 %v3728
    %v3761 = vunpack.c.l.b16 %v3729
    %v3762 = vunpack.c.l.b16 %v3730
    %v3763 = vunpack.c.l.b16 %v3731
    %v3764 = vunpack.c.l.b16 %v3732
    %v3765 = vunpack.c.l.b16 %v3733
    %v3766 = vunpack.c.l.b16 %v3734
    %v3767 = vunpack.c.l.b16 %v3735
    %v3768 = vunpack.c.l.b16 %v3736
    %v3769 = vunpack.c.l.b16 %v3737
    %v3770 = vunpack.c.l.b16 %v3738
    %v3771 = vunpack.c.l.b16 %v3739
    %v3772 = vunpack.c.l.b16 %v3740
    %v3773 = vunpack.c.l.b16 %v3741
    %v3774 = vunpack.c.l.b16 %v3742
    %v3775 = vunpack.c.l.b16 %v3743
    %v3776 = vpack.c.b16 %v3761, %v3760
    %v3777 = vpack.c.b16 %v3763, %v3762
    %v3778 = vpack.c.b16 %v3765, %v3764
    %v3779 = vpack.c.b16 %v3767, %v3766
    %v3780 = vpack.c.b16 %v3769, %v3768
    %v3781 = vpack.c.b16 %v3771, %v3770
    %v3782 = vpack.c.b16 %v3773, %v3772
    %v3783 = vpack.c.b16 %v3775, %v3774
    %3792 = vmatprep.subr.bf16.mxu0 0
    %3793 = vmatpush1.bf16.msra.mxu0 %v3783
    %3794 = vmatprep.subr.bf16.mxu0 0
    %3795 = vmatpush1.bf16.msra.mxu0 %v3782
    %3796 = vmatprep.subr.bf16.mxu0 0
    %3797 = vmatpush1.bf16.msra.mxu0 %v3781
    %3798 = vmatprep.subr.bf16.mxu0 0
    %3799 = vmatpush1.bf16.msra.mxu0 %v3780
    %3800 = vmatprep.subr.bf16.mxu0 0
    %3801 = vmatpush1.bf16.msra.mxu0 %v3779
    %3802 = vmatprep.subr.bf16.mxu0 0
    %3803 = vmatpush1.bf16.msra.mxu0 %v3778
    %3804 = vmatprep.subr.bf16.mxu0 0
    %3805 = vmatpush1.bf16.msra.mxu0 %v3777
    %3806 = vmatprep.subr.bf16.mxu0 0
    %3807 = vmatpush1.bf16.msra.mxu0 %v3776
    %3808 = vmatprep.subr.bf16.mxu0 0
    %3809 = vmatpush2.bf16.msra.mxu0 0
    %3810 = vmatprep.subr.bf16.mxu0 0
    %3811 = vmatpush2.bf16.msra.mxu0 0
    %3812 = vmatprep.subr.bf16.mxu0 0
    %3813 = vmatpush2.bf16.msra.mxu0 0
    %3814 = vmatprep.subr.bf16.mxu0 0
    %3815 = vmatpush2.bf16.msra.mxu0 0
    %3816 = vmatprep.subr.bf16.mxu0 0
    %3817 = vmatpush2.bf16.msra.mxu0 0
    %3818 = vmatprep.subr.bf16.mxu0 0
    %3819 = vmatpush2.bf16.msra.mxu0 0
    %3820 = vmatprep.subr.bf16.mxu0 0
    %3821 = vmatpush2.bf16.msra.mxu0 0
    %3822 = vmatprep.subr.bf16.mxu0 0
    %3823 = vmatpush2.bf16.msra.mxu0 0
    %3824 = vmatprep.mubr.bf16.mxu0 0
    %3825 = vmatmul.mubr.bf16.gmra.mxu0 %v3719
    %v3826 = vpop.f32.mrf.mxu0
    %v3827 = vadd.f32 0.0, %v3826
    %v3828 = vpop.f32.mrf.mxu0
    %v3829 = vpop.f32.mrf.mxu0
    %v3830 = vadd.f32 0.0, %v3829
    %v3831 = vpop.f32.mrf.mxu0
    %3832 = vmatprep.mubr.bf16.mxu0 0
    %3833 = vmatmul.mubr.bf16.gmra.mxu0 %v3720
    %v3834 = vpop.f32.mrf.mxu0
    %v3835 = vadd.f32 0.0, %v3834
    %v3836 = vpop.f32.mrf.mxu0
    %v3837 = vpop.f32.mrf.mxu0
    %v3838 = vadd.f32 0.0, %v3837
    %v3839 = vpop.f32.mrf.mxu0
    %3840 = vmatprep.mubr.bf16.mxu0 0
    %3841 = vmatmul.mubr.bf16.gmra.mxu0 %v3721
    %v3842 = vpop.f32.mrf.mxu0
    %v3843 = vadd.f32 0.0, %v3842
    %v3844 = vpop.f32.mrf.mxu0
    %v3845 = vpop.f32.mrf.mxu0
    %v3846 = vadd.f32 0.0, %v3845
    %v3847 = vpop.f32.mrf.mxu0
    %3848 = vmatprep.mubr.bf16.mxu0 0
    %3849 = vmatmul.mubr.bf16.gmra.mxu0 %v3722
    %v3850 = vpop.f32.mrf.mxu0
    %v3851 = vadd.f32 0.0, %v3850
    %v3852 = vpop.f32.mrf.mxu0
    %v3853 = vpop.f32.mrf.mxu0
    %v3854 = vadd.f32 0.0, %v3853
    %v3855 = vpop.f32.mrf.mxu0
    %3856 = vmatprep.mubr.bf16.mxu0 0
    %3857 = vmatmul.mubr.bf16.gmra.mxu0 %v3723
    %v3858 = vpop.f32.mrf.mxu0
    %v3859 = vadd.f32 0.0, %v3858
    %v3860 = vpop.f32.mrf.mxu0
    %v3861 = vpop.f32.mrf.mxu0
    %v3862 = vadd.f32 0.0, %v3861
    %v3863 = vpop.f32.mrf.mxu0
    %3864 = vmatprep.mubr.bf16.mxu0 0
    %3865 = vmatmul.mubr.bf16.gmra.mxu0 %v3724
    %v3866 = vpop.f32.mrf.mxu0
    %v3867 = vadd.f32 0.0, %v3866
    %v3868 = vpop.f32.mrf.mxu0
    %v3869 = vpop.f32.mrf.mxu0
    %v3870 = vadd.f32 0.0, %v3869
    %v3871 = vpop.f32.mrf.mxu0
    %3872 = vmatprep.mubr.bf16.mxu0 0
    %3873 = vmatmul.mubr.bf16.gmra.mxu0 %v3725
    %v3874 = vpop.f32.mrf.mxu0
    %v3875 = vadd.f32 0.0, %v3874
    %v3876 = vpop.f32.mrf.mxu0
    %v3877 = vpop.f32.mrf.mxu0
    %v3878 = vadd.f32 0.0, %v3877
    %v3879 = vpop.f32.mrf.mxu0
    %3880 = vmatprep.mubr.bf16.mxu0 0
    %3881 = vmatmul.mubr.bf16.gmra.mxu0 %v3726
    %v3882 = vpop.f32.mrf.mxu0
    %v3883 = vadd.f32 0.0, %v3882
    %v3884 = vpop.f32.mrf.mxu0
    %v3885 = vpop.f32.mrf.mxu0
    %v3886 = vadd.f32 0.0, %v3885
    %v3887 = vpop.f32.mrf.mxu0
    %3888 = vdwg.mxu0
    %v3889 = vadd.f32 %v3654, %v3827
    %v3890 = vadd.f32 %v3655, %v3830
    %v3891 = vadd.f32 %v3656, %v3835
    %v3892 = vadd.f32 %v3657, %v3838
    %v3893 = vadd.f32 %v3658, %v3843
    %v3894 = vadd.f32 %v3659, %v3846
    %v3895 = vadd.f32 %v3660, %v3851
    %v3896 = vadd.f32 %v3661, %v3854
    %v3897 = vadd.f32 %v3662, %v3859
    %v3898 = vadd.f32 %v3663, %v3862
    %v3899 = vadd.f32 %v3664, %v3867
    %v3900 = vadd.f32 %v3665, %v3870
    %v3901 = vadd.f32 %v3666, %v3875
    %v3902 = vadd.f32 %v3667, %v3878
    %v3903 = vadd.f32 %v3668, %v3883
    %v3904 = vadd.f32 %v3669, %v3886
    %v3905 = vpack.c.bf16 %v2079, %v2078
    %v3906 = vpack.c.bf16 %v2081, %v2080
    %v3907 = vpack.c.bf16 %v2083, %v2082
    %v3908 = vpack.c.bf16 %v2085, %v2084
    %v3909 = vpack.c.bf16 %v2087, %v2086
    %v3910 = vpack.c.bf16 %v2089, %v2088
    %v3911 = vpack.c.bf16 %v2091, %v2090
    %v3912 = vpack.c.bf16 0.0, %v2092
    %s3913 = scalar_lea.vmem [#allocation7], 512
    %v3914 = vld [vmem:[%s3913] sm:$0xf]
    %v3915 = vld [vmem:[%s3913 + $0x4] sm:$0xf]
    %v3916 = vld [vmem:[%s3913 + $0x8] sm:$0xf]
    %v3917 = vld [vmem:[%s3913 + $0xc] sm:$0xf]
    %v3918 = vld [vmem:[%s3913 + $0x10] sm:$0xf]
    %v3919 = vld [vmem:[%s3913 + $0x14] sm:$0xf]
    %v3920 = vld [vmem:[%s3913 + $0x18] sm:$0xf]
    %v3921 = vld [vmem:[%s3913 + $0x1c] sm:$0xf]
    %v3922 = vld [vmem:[%s3913 + $0x20] sm:$0xf]
    %v3923 = vld [vmem:[%s3913 + $0x24] sm:$0xf]
    %v3924 = vld [vmem:[%s3913 + $0x28] sm:$0xf]
    %v3925 = vld [vmem:[%s3913 + $0x2c] sm:$0xf]
    %v3926 = vld [vmem:[%s3913 + $0x30] sm:$0xf]
    %v3927 = vld [vmem:[%s3913 + $0x34] sm:$0xf]
    %v3928 = vld [vmem:[%s3913 + $0x38] sm:$0xf]
    %v3929 = vld [vmem:[%s3913 + $0x3c] sm:$0xf]
    %v3946 = vunpack.c.l.b16 %v3914
    %v3947 = vunpack.c.l.b16 %v3915
    %v3948 = vunpack.c.l.b16 %v3916
    %v3949 = vunpack.c.l.b16 %v3917
    %v3950 = vunpack.c.l.b16 %v3918
    %v3951 = vunpack.c.l.b16 %v3919
    %v3952 = vunpack.c.l.b16 %v3920
    %v3953 = vunpack.c.l.b16 %v3921
    %v3954 = vunpack.c.l.b16 %v3922
    %v3955 = vunpack.c.l.b16 %v3923
    %v3956 = vunpack.c.l.b16 %v3924
    %v3957 = vunpack.c.l.b16 %v3925
    %v3958 = vunpack.c.l.b16 %v3926
    %v3959 = vunpack.c.l.b16 %v3927
    %v3960 = vunpack.c.l.b16 %v3928
    %v3961 = vunpack.c.l.b16 %v3929
    %v3962 = vpack.c.b16 %v3947, %v3946
    %v3963 = vpack.c.b16 %v3949, %v3948
    %v3964 = vpack.c.b16 %v3951, %v3950
    %v3965 = vpack.c.b16 %v3953, %v3952
    %v3966 = vpack.c.b16 %v3955, %v3954
    %v3967 = vpack.c.b16 %v3957, %v3956
    %v3968 = vpack.c.b16 %v3959, %v3958
    %v3969 = vpack.c.b16 %v3961, %v3960
    %3978 = vmatprep.subr.bf16.mxu0 0
    %3979 = vmatpush1.bf16.msra.mxu0 %v3969
    %3980 = vmatprep.subr.bf16.mxu0 0
    %3981 = vmatpush1.bf16.msra.mxu0 %v3968
    %3982 = vmatprep.subr.bf16.mxu0 0
    %3983 = vmatpush1.bf16.msra.mxu0 %v3967
    %3984 = vmatprep.subr.bf16.mxu0 0
    %3985 = vmatpush1.bf16.msra.mxu0 %v3966
    %3986 = vmatprep.subr.bf16.mxu0 0
    %3987 = vmatpush1.bf16.msra.mxu0 %v3965
    %3988 = vmatprep.subr.bf16.mxu0 0
    %3989 = vmatpush1.bf16.msra.mxu0 %v3964
    %3990 = vmatprep.subr.bf16.mxu0 0
    %3991 = vmatpush1.bf16.msra.mxu0 %v3963
    %3992 = vmatprep.subr.bf16.mxu0 0
    %3993 = vmatpush1.bf16.msra.mxu0 %v3962
    %3994 = vmatprep.subr.bf16.mxu0 0
    %3995 = vmatpush2.bf16.msra.mxu0 0
    %3996 = vmatprep.subr.bf16.mxu0 0
    %3997 = vmatpush2.bf16.msra.mxu0 0
    %3998 = vmatprep.subr.bf16.mxu0 0
    %3999 = vmatpush2.bf16.msra.mxu0 0
    %4000 = vmatprep.subr.bf16.mxu0 0
    %4001 = vmatpush2.bf16.msra.mxu0 0
    %4002 = vmatprep.subr.bf16.mxu0 0
    %4003 = vmatpush2.bf16.msra.mxu0 0
    %4004 = vmatprep.subr.bf16.mxu0 0
    %4005 = vmatpush2.bf16.msra.mxu0 0
    %4006 = vmatprep.subr.bf16.mxu0 0
    %4007 = vmatpush2.bf16.msra.mxu0 0
    %4008 = vmatprep.subr.bf16.mxu0 0
    %4009 = vmatpush2.bf16.msra.mxu0 0
    %4010 = vmatprep.mubr.bf16.mxu0 0
    %4011 = vmatmul.mubr.bf16.gmra.mxu0 %v3905
    %v4012 = vpop.f32.mrf.mxu0
    %v4013 = vadd.f32 0.0, %v4012
    %v4014 = vpop.f32.mrf.mxu0
    %v4015 = vpop.f32.mrf.mxu0
    %v4016 = vadd.f32 0.0, %v4015
    %v4017 = vpop.f32.mrf.mxu0
    %4018 = vmatprep.mubr.bf16.mxu0 0
    %4019 = vmatmul.mubr.bf16.gmra.mxu0 %v3906
    %v4020 = vpop.f32.mrf.mxu0
    %v4021 = vadd.f32 0.0, %v4020
    %v4022 = vpop.f32.mrf.mxu0
    %v4023 = vpop.f32.mrf.mxu0
    %v4024 = vadd.f32 0.0, %v4023
    %v4025 = vpop.f32.mrf.mxu0
    %4026 = vmatprep.mubr.bf16.mxu0 0
    %4027 = vmatmul.mubr.bf16.gmra.mxu0 %v3907
    %v4028 = vpop.f32.mrf.mxu0
    %v4029 = vadd.f32 0.0, %v4028
    %v4030 = vpop.f32.mrf.mxu0
    %v4031 = vpop.f32.mrf.mxu0
    %v4032 = vadd.f32 0.0, %v4031
    %v4033 = vpop.f32.mrf.mxu0
    %4034 = vmatprep.mubr.bf16.mxu0 0
    %4035 = vmatmul.mubr.bf16.gmra.mxu0 %v3908
    %v4036 = vpop.f32.mrf.mxu0
    %v4037 = vadd.f32 0.0, %v4036
    %v4038 = vpop.f32.mrf.mxu0
    %v4039 = vpop.f32.mrf.mxu0
    %v4040 = vadd.f32 0.0, %v4039
    %v4041 = vpop.f32.mrf.mxu0
    %4042 = vmatprep.mubr.bf16.mxu0 0
    %4043 = vmatmul.mubr.bf16.gmra.mxu0 %v3909
    %v4044 = vpop.f32.mrf.mxu0
    %v4045 = vadd.f32 0.0, %v4044
    %v4046 = vpop.f32.mrf.mxu0
    %v4047 = vpop.f32.mrf.mxu0
    %v4048 = vadd.f32 0.0, %v4047
    %v4049 = vpop.f32.mrf.mxu0
    %4050 = vmatprep.mubr.bf16.mxu0 0
    %4051 = vmatmul.mubr.bf16.gmra.mxu0 %v3910
    %v4052 = vpop.f32.mrf.mxu0
    %v4053 = vadd.f32 0.0, %v4052
    %v4054 = vpop.f32.mrf.mxu0
    %v4055 = vpop.f32.mrf.mxu0
    %v4056 = vadd.f32 0.0, %v4055
    %v4057 = vpop.f32.mrf.mxu0
    %4058 = vmatprep.mubr.bf16.mxu0 0
    %4059 = vmatmul.mubr.bf16.gmra.mxu0 %v3911
    %v4060 = vpop.f32.mrf.mxu0
    %v4061 = vadd.f32 0.0, %v4060
    %v4062 = vpop.f32.mrf.mxu0
    %v4063 = vpop.f32.mrf.mxu0
    %v4064 = vadd.f32 0.0, %v4063
    %v4065 = vpop.f32.mrf.mxu0
    %4066 = vmatprep.mubr.bf16.mxu0 0
    %4067 = vmatmul.mubr.bf16.gmra.mxu0 %v3912
    %v4068 = vpop.f32.mrf.mxu0
    %v4069 = vadd.f32 0.0, %v4068
    %v4070 = vpop.f32.mrf.mxu0
    %v4071 = vpop.f32.mrf.mxu0
    %v4072 = vadd.f32 0.0, %v4071
    %v4073 = vpop.f32.mrf.mxu0
    %4074 = vdwg.mxu0
    %v4075 = vadd.f32 %v3889, %v4013
    %v4076 = vadd.f32 %v3890, %v4016
    %v4077 = vadd.f32 %v3891, %v4021
    %v4078 = vadd.f32 %v3892, %v4024
    %v4079 = vadd.f32 %v3893, %v4029
    %v4080 = vadd.f32 %v3894, %v4032
    %v4081 = vadd.f32 %v3895, %v4037
    %v4082 = vadd.f32 %v3896, %v4040
    %v4083 = vadd.f32 %v3897, %v4045
    %v4084 = vadd.f32 %v3898, %v4048
    %v4085 = vadd.f32 %v3899, %v4053
    %v4086 = vadd.f32 %v3900, %v4056
    %v4087 = vadd.f32 %v3901, %v4061
    %v4088 = vadd.f32 %v3902, %v4064
    %v4089 = vadd.f32 %v3903, %v4069
    %v4090 = vadd.f32 %v3904, %v4072
    %v4091 = vpack.c.bf16 %v2139, %v2137
    %v4092 = vpack.c.bf16 %v2143, %v2141
    %v4093 = vpack.c.bf16 %v2147, %v2145
    %v4094 = vpack.c.bf16 %v2151, %v2149
    %v4095 = vpack.c.bf16 %v2155, %v2153
    %v4096 = vpack.c.bf16 %v2159, %v2157
    %v4097 = vpack.c.bf16 %v2163, %v2161
    %v4098 = vpack.c.bf16 0.0, %v2180
    %s4099 = scalar_lea.vmem [#allocation7], 576
    %v4100 = vld [vmem:[%s4099] sm:$0xf]
    %v4101 = vld [vmem:[%s4099 + $0x4] sm:$0xf]
    %v4102 = vld [vmem:[%s4099 + $0x8] sm:$0xf]
    %v4103 = vld [vmem:[%s4099 + $0xc] sm:$0xf]
    %v4104 = vld [vmem:[%s4099 + $0x10] sm:$0xf]
    %v4105 = vld [vmem:[%s4099 + $0x14] sm:$0xf]
    %v4106 = vld [vmem:[%s4099 + $0x18] sm:$0xf]
    %v4107 = vld [vmem:[%s4099 + $0x1c] sm:$0xf]
    %v4108 = vld [vmem:[%s4099 + $0x20] sm:$0xf]
    %v4109 = vld [vmem:[%s4099 + $0x24] sm:$0xf]
    %v4110 = vld [vmem:[%s4099 + $0x28] sm:$0xf]
    %v4111 = vld [vmem:[%s4099 + $0x2c] sm:$0xf]
    %v4112 = vld [vmem:[%s4099 + $0x30] sm:$0xf]
    %v4113 = vld [vmem:[%s4099 + $0x34] sm:$0xf]
    %v4114 = vld [vmem:[%s4099 + $0x38] sm:$0xf]
    %v4115 = vld [vmem:[%s4099 + $0x3c] sm:$0xf]
    %v4132 = vunpack.c.l.b16 %v4100
    %v4133 = vunpack.c.l.b16 %v4101
    %v4134 = vunpack.c.l.b16 %v4102
    %v4135 = vunpack.c.l.b16 %v4103
    %v4136 = vunpack.c.l.b16 %v4104
    %v4137 = vunpack.c.l.b16 %v4105
    %v4138 = vunpack.c.l.b16 %v4106
    %v4139 = vunpack.c.l.b16 %v4107
    %v4140 = vunpack.c.l.b16 %v4108
    %v4141 = vunpack.c.l.b16 %v4109
    %v4142 = vunpack.c.l.b16 %v4110
    %v4143 = vunpack.c.l.b16 %v4111
    %v4144 = vunpack.c.l.b16 %v4112
    %v4145 = vunpack.c.l.b16 %v4113
    %v4146 = vunpack.c.l.b16 %v4114
    %v4147 = vunpack.c.l.b16 %v4115
    %v4148 = vpack.c.b16 %v4133, %v4132
    %v4149 = vpack.c.b16 %v4135, %v4134
    %v4150 = vpack.c.b16 %v4137, %v4136
    %v4151 = vpack.c.b16 %v4139, %v4138
    %v4152 = vpack.c.b16 %v4141, %v4140
    %v4153 = vpack.c.b16 %v4143, %v4142
    %v4154 = vpack.c.b16 %v4145, %v4144
    %v4155 = vpack.c.b16 %v4147, %v4146
    %4164 = vmatprep.subr.bf16.mxu0 0
    %4165 = vmatpush1.bf16.msra.mxu0 %v4155
    %4166 = vmatprep.subr.bf16.mxu0 0
    %4167 = vmatpush1.bf16.msra.mxu0 %v4154
    %4168 = vmatprep.subr.bf16.mxu0 0
    %4169 = vmatpush1.bf16.msra.mxu0 %v4153
    %4170 = vmatprep.subr.bf16.mxu0 0
    %4171 = vmatpush1.bf16.msra.mxu0 %v4152
    %4172 = vmatprep.subr.bf16.mxu0 0
    %4173 = vmatpush1.bf16.msra.mxu0 %v4151
    %4174 = vmatprep.subr.bf16.mxu0 0
    %4175 = vmatpush1.bf16.msra.mxu0 %v4150
    %4176 = vmatprep.subr.bf16.mxu0 0
    %4177 = vmatpush1.bf16.msra.mxu0 %v4149
    %4178 = vmatprep.subr.bf16.mxu0 0
    %4179 = vmatpush1.bf16.msra.mxu0 %v4148
    %4180 = vmatprep.subr.bf16.mxu0 0
    %4181 = vmatpush2.bf16.msra.mxu0 0
    %4182 = vmatprep.subr.bf16.mxu0 0
    %4183 = vmatpush2.bf16.msra.mxu0 0
    %4184 = vmatprep.subr.bf16.mxu0 0
    %4185 = vmatpush2.bf16.msra.mxu0 0
    %4186 = vmatprep.subr.bf16.mxu0 0
    %4187 = vmatpush2.bf16.msra.mxu0 0
    %4188 = vmatprep.subr.bf16.mxu0 0
    %4189 = vmatpush2.bf16.msra.mxu0 0
    %4190 = vmatprep.subr.bf16.mxu0 0
    %4191 = vmatpush2.bf16.msra.mxu0 0
    %4192 = vmatprep.subr.bf16.mxu0 0
    %4193 = vmatpush2.bf16.msra.mxu0 0
    %4194 = vmatprep.subr.bf16.mxu0 0
    %4195 = vmatpush2.bf16.msra.mxu0 0
    %4196 = vmatprep.mubr.bf16.mxu0 0
    %4197 = vmatmul.mubr.bf16.gmra.mxu0 %v4091
    %v4198 = vpop.f32.mrf.mxu0
    %v4199 = vadd.f32 0.0, %v4198
    %v4200 = vpop.f32.mrf.mxu0
    %v4201 = vpop.f32.mrf.mxu0
    %v4202 = vadd.f32 0.0, %v4201
    %v4203 = vpop.f32.mrf.mxu0
    %4204 = vmatprep.mubr.bf16.mxu0 0
    %4205 = vmatmul.mubr.bf16.gmra.mxu0 %v4092
    %v4206 = vpop.f32.mrf.mxu0
    %v4207 = vadd.f32 0.0, %v4206
    %v4208 = vpop.f32.mrf.mxu0
    %v4209 = vpop.f32.mrf.mxu0
    %v4210 = vadd.f32 0.0, %v4209
    %v4211 = vpop.f32.mrf.mxu0
    %4212 = vmatprep.mubr.bf16.mxu0 0
    %4213 = vmatmul.mubr.bf16.gmra.mxu0 %v4093
    %v4214 = vpop.f32.mrf.mxu0
    %v4215 = vadd.f32 0.0, %v4214
    %v4216 = vpop.f32.mrf.mxu0
    %v4217 = vpop.f32.mrf.mxu0
    %v4218 = vadd.f32 0.0, %v4217
    %v4219 = vpop.f32.mrf.mxu0
    %4220 = vmatprep.mubr.bf16.mxu0 0
    %4221 = vmatmul.mubr.bf16.gmra.mxu0 %v4094
    %v4222 = vpop.f32.mrf.mxu0
    %v4223 = vadd.f32 0.0, %v4222
    %v4224 = vpop.f32.mrf.mxu0
    %v4225 = vpop.f32.mrf.mxu0
    %v4226 = vadd.f32 0.0, %v4225
    %v4227 = vpop.f32.mrf.mxu0
    %4228 = vmatprep.mubr.bf16.mxu0 0
    %4229 = vmatmul.mubr.bf16.gmra.mxu0 %v4095
    %v4230 = vpop.f32.mrf.mxu0
    %v4231 = vadd.f32 0.0, %v4230
    %v4232 = vpop.f32.mrf.mxu0
    %v4233 = vpop.f32.mrf.mxu0
    %v4234 = vadd.f32 0.0, %v4233
    %v4235 = vpop.f32.mrf.mxu0
    %4236 = vmatprep.mubr.bf16.mxu0 0
    %4237 = vmatmul.mubr.bf16.gmra.mxu0 %v4096
    %v4238 = vpop.f32.mrf.mxu0
    %v4239 = vadd.f32 0.0, %v4238
    %v4240 = vpop.f32.mrf.mxu0
    %v4241 = vpop.f32.mrf.mxu0
    %v4242 = vadd.f32 0.0, %v4241
    %v4243 = vpop.f32.mrf.mxu0
    %4244 = vmatprep.mubr.bf16.mxu0 0
    %4245 = vmatmul.mubr.bf16.gmra.mxu0 %v4097
    %v4246 = vpop.f32.mrf.mxu0
    %v4247 = vadd.f32 0.0, %v4246
    %v4248 = vpop.f32.mrf.mxu0
    %v4249 = vpop.f32.mrf.mxu0
    %v4250 = vadd.f32 0.0, %v4249
    %v4251 = vpop.f32.mrf.mxu0
    %4252 = vmatprep.mubr.bf16.mxu0 0
    %4253 = vmatmul.mubr.bf16.gmra.mxu0 %v4098
    %v4254 = vpop.f32.mrf.mxu0
    %v4255 = vadd.f32 0.0, %v4254
    %v4256 = vpop.f32.mrf.mxu0
    %v4257 = vpop.f32.mrf.mxu0
    %v4258 = vadd.f32 0.0, %v4257
    %v4259 = vpop.f32.mrf.mxu0
    %4260 = vdwg.mxu0
    %v4261 = vadd.f32 %v4075, %v4199
    %v4262 = vadd.f32 %v4076, %v4202
    %v4263 = vadd.f32 %v4077, %v4207
    %v4264 = vadd.f32 %v4078, %v4210
    %v4265 = vadd.f32 %v4079, %v4215
    %v4266 = vadd.f32 %v4080, %v4218
    %v4267 = vadd.f32 %v4081, %v4223
    %v4268 = vadd.f32 %v4082, %v4226
    %v4269 = vadd.f32 %v4083, %v4231
    %v4270 = vadd.f32 %v4084, %v4234
    %v4271 = vadd.f32 %v4085, %v4239
    %v4272 = vadd.f32 %v4086, %v4242
    %v4273 = vadd.f32 %v4087, %v4247
    %v4274 = vadd.f32 %v4088, %v4250
    %v4275 = vadd.f32 %v4089, %v4255
    %v4276 = vadd.f32 %v4090, %v4258
    %v4277 = vpack.c.bf16 %v2502, %v2500
    %v4278 = vpack.c.bf16 %v2506, %v2504
    %v4279 = vpack.c.bf16 %v2510, %v2508
    %v4280 = vpack.c.bf16 %v2514, %v2512
    %v4281 = vpack.c.bf16 %v2518, %v2516
    %v4282 = vpack.c.bf16 %v2522, %v2520
    %v4283 = vpack.c.bf16 %v2526, %v2524
    %v4284 = vpack.c.bf16 0.0, %v2543
    %s4285 = scalar_lea.vmem [#allocation7], 640
    %v4286 = vld [vmem:[%s4285] sm:$0xf]
    %v4287 = vld [vmem:[%s4285 + $0x4] sm:$0xf]
    %v4288 = vld [vmem:[%s4285 + $0x8] sm:$0xf]
    %v4289 = vld [vmem:[%s4285 + $0xc] sm:$0xf]
    %v4290 = vld [vmem:[%s4285 + $0x10] sm:$0xf]
    %v4291 = vld [vmem:[%s4285 + $0x14] sm:$0xf]
    %v4292 = vld [vmem:[%s4285 + $0x18] sm:$0xf]
    %v4293 = vld [vmem:[%s4285 + $0x1c] sm:$0xf]
    %v4294 = vld [vmem:[%s4285 + $0x20] sm:$0xf]
    %v4295 = vld [vmem:[%s4285 + $0x24] sm:$0xf]
    %v4296 = vld [vmem:[%s4285 + $0x28] sm:$0xf]
    %v4297 = vld [vmem:[%s4285 + $0x2c] sm:$0xf]
    %v4298 = vld [vmem:[%s4285 + $0x30] sm:$0xf]
    %v4299 = vld [vmem:[%s4285 + $0x34] sm:$0xf]
    %v4300 = vld [vmem:[%s4285 + $0x38] sm:$0xf]
    %v4301 = vld [vmem:[%s4285 + $0x3c] sm:$0xf]
    %v4318 = vunpack.c.l.b16 %v4286
    %v4319 = vunpack.c.l.b16 %v4287
    %v4320 = vunpack.c.l.b16 %v4288
    %v4321 = vunpack.c.l.b16 %v4289
    %v4322 = vunpack.c.l.b16 %v4290
    %v4323 = vunpack.c.l.b16 %v4291
    %v4324 = vunpack.c.l.b16 %v4292
    %v4325 = vunpack.c.l.b16 %v4293
    %v4326 = vunpack.c.l.b16 %v4294
    %v4327 = vunpack.c.l.b16 %v4295
    %v4328 = vunpack.c.l.b16 %v4296
    %v4329 = vunpack.c.l.b16 %v4297
    %v4330 = vunpack.c.l.b16 %v4298
    %v4331 = vunpack.c.l.b16 %v4299
    %v4332 = vunpack.c.l.b16 %v4300
    %v4333 = vunpack.c.l.b16 %v4301
    %v4334 = vpack.c.b16 %v4319, %v4318
    %v4335 = vpack.c.b16 %v4321, %v4320
    %v4336 = vpack.c.b16 %v4323, %v4322
    %v4337 = vpack.c.b16 %v4325, %v4324
    %v4338 = vpack.c.b16 %v4327, %v4326
    %v4339 = vpack.c.b16 %v4329, %v4328
    %v4340 = vpack.c.b16 %v4331, %v4330
    %v4341 = vpack.c.b16 %v4333, %v4332
    %4350 = vmatprep.subr.bf16.mxu0 0
    %4351 = vmatpush1.bf16.msra.mxu0 %v4341
    %4352 = vmatprep.subr.bf16.mxu0 0
    %4353 = vmatpush1.bf16.msra.mxu0 %v4340
    %4354 = vmatprep.subr.bf16.mxu0 0
    %4355 = vmatpush1.bf16.msra.mxu0 %v4339
    %4356 = vmatprep.subr.bf16.mxu0 0
    %4357 = vmatpush1.bf16.msra.mxu0 %v4338
    %4358 = vmatprep.subr.bf16.mxu0 0
    %4359 = vmatpush1.bf16.msra.mxu0 %v4337
    %4360 = vmatprep.subr.bf16.mxu0 0
    %4361 = vmatpush1.bf16.msra.mxu0 %v4336
    %4362 = vmatprep.subr.bf16.mxu0 0
    %4363 = vmatpush1.bf16.msra.mxu0 %v4335
    %4364 = vmatprep.subr.bf16.mxu0 0
    %4365 = vmatpush1.bf16.msra.mxu0 %v4334
    %4366 = vmatprep.subr.bf16.mxu0 0
    %4367 = vmatpush2.bf16.msra.mxu0 0
    %4368 = vmatprep.subr.bf16.mxu0 0
    %4369 = vmatpush2.bf16.msra.mxu0 0
    %4370 = vmatprep.subr.bf16.mxu0 0
    %4371 = vmatpush2.bf16.msra.mxu0 0
    %4372 = vmatprep.subr.bf16.mxu0 0
    %4373 = vmatpush2.bf16.msra.mxu0 0
    %4374 = vmatprep.subr.bf16.mxu0 0
    %4375 = vmatpush2.bf16.msra.mxu0 0
    %4376 = vmatprep.subr.bf16.mxu0 0
    %4377 = vmatpush2.bf16.msra.mxu0 0
    %4378 = vmatprep.subr.bf16.mxu0 0
    %4379 = vmatpush2.bf16.msra.mxu0 0
    %4380 = vmatprep.subr.bf16.mxu0 0
    %4381 = vmatpush2.bf16.msra.mxu0 0
    %4382 = vmatprep.mubr.bf16.mxu0 0
    %4383 = vmatmul.mubr.bf16.gmra.mxu0 %v4277
    %v4384 = vpop.f32.mrf.mxu0
    %v4385 = vadd.f32 0.0, %v4384
    %v4386 = vpop.f32.mrf.mxu0
    %v4387 = vpop.f32.mrf.mxu0
    %v4388 = vadd.f32 0.0, %v4387
    %v4389 = vpop.f32.mrf.mxu0
    %4390 = vmatprep.mubr.bf16.mxu0 0
    %4391 = vmatmul.mubr.bf16.gmra.mxu0 %v4278
    %v4392 = vpop.f32.mrf.mxu0
    %v4393 = vadd.f32 0.0, %v4392
    %v4394 = vpop.f32.mrf.mxu0
    %v4395 = vpop.f32.mrf.mxu0
    %v4396 = vadd.f32 0.0, %v4395
    %v4397 = vpop.f32.mrf.mxu0
    %4398 = vmatprep.mubr.bf16.mxu0 0
    %4399 = vmatmul.mubr.bf16.gmra.mxu0 %v4279
    %v4400 = vpop.f32.mrf.mxu0
    %v4401 = vadd.f32 0.0, %v4400
    %v4402 = vpop.f32.mrf.mxu0
    %v4403 = vpop.f32.mrf.mxu0
    %v4404 = vadd.f32 0.0, %v4403
    %v4405 = vpop.f32.mrf.mxu0
    %4406 = vmatprep.mubr.bf16.mxu0 0
    %4407 = vmatmul.mubr.bf16.gmra.mxu0 %v4280
    %v4408 = vpop.f32.mrf.mxu0
    %v4409 = vadd.f32 0.0, %v4408
    %v4410 = vpop.f32.mrf.mxu0
    %v4411 = vpop.f32.mrf.mxu0
    %v4412 = vadd.f32 0.0, %v4411
    %v4413 = vpop.f32.mrf.mxu0
    %4414 = vmatprep.mubr.bf16.mxu0 0
    %4415 = vmatmul.mubr.bf16.gmra.mxu0 %v4281
    %v4416 = vpop.f32.mrf.mxu0
    %v4417 = vadd.f32 0.0, %v4416
    %v4418 = vpop.f32.mrf.mxu0
    %v4419 = vpop.f32.mrf.mxu0
    %v4420 = vadd.f32 0.0, %v4419
    %v4421 = vpop.f32.mrf.mxu0
    %4422 = vmatprep.mubr.bf16.mxu0 0
    %4423 = vmatmul.mubr.bf16.gmra.mxu0 %v4282
    %v4424 = vpop.f32.mrf.mxu0
    %v4425 = vadd.f32 0.0, %v4424
    %v4426 = vpop.f32.mrf.mxu0
    %v4427 = vpop.f32.mrf.mxu0
    %v4428 = vadd.f32 0.0, %v4427
    %v4429 = vpop.f32.mrf.mxu0
    %4430 = vmatprep.mubr.bf16.mxu0 0
    %4431 = vmatmul.mubr.bf16.gmra.mxu0 %v4283
    %v4432 = vpop.f32.mrf.mxu0
    %v4433 = vadd.f32 0.0, %v4432
    %v4434 = vpop.f32.mrf.mxu0
    %v4435 = vpop.f32.mrf.mxu0
    %v4436 = vadd.f32 0.0, %v4435
    %v4437 = vpop.f32.mrf.mxu0
    %4438 = vmatprep.mubr.bf16.mxu0 0
    %4439 = vmatmul.mubr.bf16.gmra.mxu0 %v4284
    %v4440 = vpop.f32.mrf.mxu0
    %v4441 = vadd.f32 0.0, %v4440
    %v4442 = vpop.f32.mrf.mxu0
    %v4443 = vpop.f32.mrf.mxu0
    %v4444 = vadd.f32 0.0, %v4443
    %v4445 = vpop.f32.mrf.mxu0
    %4446 = vdwg.mxu0
    %v4447 = vadd.f32 %v4261, %v4385
    %v4448 = vadd.f32 %v4262, %v4388
    %v4449 = vadd.f32 %v4263, %v4393
    %v4450 = vadd.f32 %v4264, %v4396
    %v4451 = vadd.f32 %v4265, %v4401
    %v4452 = vadd.f32 %v4266, %v4404
    %v4453 = vadd.f32 %v4267, %v4409
    %v4454 = vadd.f32 %v4268, %v4412
    %v4455 = vadd.f32 %v4269, %v4417
    %v4456 = vadd.f32 %v4270, %v4420
    %v4457 = vadd.f32 %v4271, %v4425
    %v4458 = vadd.f32 %v4272, %v4428
    %v4459 = vadd.f32 %v4273, %v4433
    %v4460 = vadd.f32 %v4274, %v4436
    %v4461 = vadd.f32 %v4275, %v4441
    %v4462 = vadd.f32 %v4276, %v4444
    %v4463 = vpack.c.bf16 %v2737, %v2735
    %v4464 = vpack.c.bf16 %v2741, %v2739
    %v4465 = vpack.c.bf16 %v2745, %v2743
    %v4466 = vpack.c.bf16 %v2749, %v2747
    %v4467 = vpack.c.bf16 %v2753, %v2751
    %v4468 = vpack.c.bf16 %v2757, %v2755
    %v4469 = vpack.c.bf16 %v2761, %v2759
    %v4470 = vpack.c.bf16 0.0, %v2778
    %s4471 = scalar_lea.vmem [#allocation7], 704
    %v4472 = vld [vmem:[%s4471] sm:$0xf]
    %v4473 = vld [vmem:[%s4471 + $0x4] sm:$0xf]
    %v4474 = vld [vmem:[%s4471 + $0x8] sm:$0xf]
    %v4475 = vld [vmem:[%s4471 + $0xc] sm:$0xf]
    %v4476 = vld [vmem:[%s4471 + $0x10] sm:$0xf]
    %v4477 = vld [vmem:[%s4471 + $0x14] sm:$0xf]
    %v4478 = vld [vmem:[%s4471 + $0x18] sm:$0xf]
    %v4479 = vld [vmem:[%s4471 + $0x1c] sm:$0xf]
    %v4480 = vld [vmem:[%s4471 + $0x20] sm:$0xf]
    %v4481 = vld [vmem:[%s4471 + $0x24] sm:$0xf]
    %v4482 = vld [vmem:[%s4471 + $0x28] sm:$0xf]
    %v4483 = vld [vmem:[%s4471 + $0x2c] sm:$0xf]
    %v4484 = vld [vmem:[%s4471 + $0x30] sm:$0xf]
    %v4485 = vld [vmem:[%s4471 + $0x34] sm:$0xf]
    %v4486 = vld [vmem:[%s4471 + $0x38] sm:$0xf]
    %v4487 = vld [vmem:[%s4471 + $0x3c] sm:$0xf]
    %v4504 = vunpack.c.l.b16 %v4472
    %v4505 = vunpack.c.l.b16 %v4473
    %v4506 = vunpack.c.l.b16 %v4474
    %v4507 = vunpack.c.l.b16 %v4475
    %v4508 = vunpack.c.l.b16 %v4476
    %v4509 = vunpack.c.l.b16 %v4477
    %v4510 = vunpack.c.l.b16 %v4478
    %v4511 = vunpack.c.l.b16 %v4479
    %v4512 = vunpack.c.l.b16 %v4480
    %v4513 = vunpack.c.l.b16 %v4481
    %v4514 = vunpack.c.l.b16 %v4482
    %v4515 = vunpack.c.l.b16 %v4483
    %v4516 = vunpack.c.l.b16 %v4484
    %v4517 = vunpack.c.l.b16 %v4485
    %v4518 = vunpack.c.l.b16 %v4486
    %v4519 = vunpack.c.l.b16 %v4487
    %v4520 = vpack.c.b16 %v4505, %v4504
    %v4521 = vpack.c.b16 %v4507, %v4506
    %v4522 = vpack.c.b16 %v4509, %v4508
    %v4523 = vpack.c.b16 %v4511, %v4510
    %v4524 = vpack.c.b16 %v4513, %v4512
    %v4525 = vpack.c.b16 %v4515, %v4514
    %v4526 = vpack.c.b16 %v4517, %v4516
    %v4527 = vpack.c.b16 %v4519, %v4518
    %4536 = vmatprep.subr.bf16.mxu0 0
    %4537 = vmatpush1.bf16.msra.mxu0 %v4527
    %4538 = vmatprep.subr.bf16.mxu0 0
    %4539 = vmatpush1.bf16.msra.mxu0 %v4526
    %4540 = vmatprep.subr.bf16.mxu0 0
    %4541 = vmatpush1.bf16.msra.mxu0 %v4525
    %4542 = vmatprep.subr.bf16.mxu0 0
    %4543 = vmatpush1.bf16.msra.mxu0 %v4524
    %4544 = vmatprep.subr.bf16.mxu0 0
    %4545 = vmatpush1.bf16.msra.mxu0 %v4523
    %4546 = vmatprep.subr.bf16.mxu0 0
    %4547 = vmatpush1.bf16.msra.mxu0 %v4522
    %4548 = vmatprep.subr.bf16.mxu0 0
    %4549 = vmatpush1.bf16.msra.mxu0 %v4521
    %4550 = vmatprep.subr.bf16.mxu0 0
    %4551 = vmatpush1.bf16.msra.mxu0 %v4520
    %4552 = vmatprep.subr.bf16.mxu0 0
    %4553 = vmatpush2.bf16.msra.mxu0 0
    %4554 = vmatprep.subr.bf16.mxu0 0
    %4555 = vmatpush2.bf16.msra.mxu0 0
    %4556 = vmatprep.subr.bf16.mxu0 0
    %4557 = vmatpush2.bf16.msra.mxu0 0
    %4558 = vmatprep.subr.bf16.mxu0 0
    %4559 = vmatpush2.bf16.msra.mxu0 0
    %4560 = vmatprep.subr.bf16.mxu0 0
    %4561 = vmatpush2.bf16.msra.mxu0 0
    %4562 = vmatprep.subr.bf16.mxu0 0
    %4563 = vmatpush2.bf16.msra.mxu0 0
    %4564 = vmatprep.subr.bf16.mxu0 0
    %4565 = vmatpush2.bf16.msra.mxu0 0
    %4566 = vmatprep.subr.bf16.mxu0 0
    %4567 = vmatpush2.bf16.msra.mxu0 0
    %4568 = vmatprep.mubr.bf16.mxu0 0
    %4569 = vmatmul.mubr.bf16.gmra.mxu0 %v4463
    %v4570 = vpop.f32.mrf.mxu0
    %v4571 = vadd.f32 0.0, %v4570
    %v4572 = vpop.f32.mrf.mxu0
    %v4573 = vpop.f32.mrf.mxu0
    %v4574 = vadd.f32 0.0, %v4573
    %v4575 = vpop.f32.mrf.mxu0
    %4576 = vmatprep.mubr.bf16.mxu0 0
    %4577 = vmatmul.mubr.bf16.gmra.mxu0 %v4464
    %v4578 = vpop.f32.mrf.mxu0
    %v4579 = vadd.f32 0.0, %v4578
    %v4580 = vpop.f32.mrf.mxu0
    %v4581 = vpop.f32.mrf.mxu0
    %v4582 = vadd.f32 0.0, %v4581
    %v4583 = vpop.f32.mrf.mxu0
    %4584 = vmatprep.mubr.bf16.mxu0 0
    %4585 = vmatmul.mubr.bf16.gmra.mxu0 %v4465
    %v4586 = vpop.f32.mrf.mxu0
    %v4587 = vadd.f32 0.0, %v4586
    %v4588 = vpop.f32.mrf.mxu0
    %v4589 = vpop.f32.mrf.mxu0
    %v4590 = vadd.f32 0.0, %v4589
    %v4591 = vpop.f32.mrf.mxu0
    %4592 = vmatprep.mubr.bf16.mxu0 0
    %4593 = vmatmul.mubr.bf16.gmra.mxu0 %v4466
    %v4594 = vpop.f32.mrf.mxu0
    %v4595 = vadd.f32 0.0, %v4594
    %v4596 = vpop.f32.mrf.mxu0
    %v4597 = vpop.f32.mrf.mxu0
    %v4598 = vadd.f32 0.0, %v4597
    %v4599 = vpop.f32.mrf.mxu0
    %4600 = vmatprep.mubr.bf16.mxu0 0
    %4601 = vmatmul.mubr.bf16.gmra.mxu0 %v4467
    %v4602 = vpop.f32.mrf.mxu0
    %v4603 = vadd.f32 0.0, %v4602
    %v4604 = vpop.f32.mrf.mxu0
    %v4605 = vpop.f32.mrf.mxu0
    %v4606 = vadd.f32 0.0, %v4605
    %v4607 = vpop.f32.mrf.mxu0
    %4608 = vmatprep.mubr.bf16.mxu0 0
    %4609 = vmatmul.mubr.bf16.gmra.mxu0 %v4468
    %v4610 = vpop.f32.mrf.mxu0
    %v4611 = vadd.f32 0.0, %v4610
    %v4612 = vpop.f32.mrf.mxu0
    %v4613 = vpop.f32.mrf.mxu0
    %v4614 = vadd.f32 0.0, %v4613
    %v4615 = vpop.f32.mrf.mxu0
    %4616 = vmatprep.mubr.bf16.mxu0 0
    %4617 = vmatmul.mubr.bf16.gmra.mxu0 %v4469
    %v4618 = vpop.f32.mrf.mxu0
    %v4619 = vadd.f32 0.0, %v4618
    %v4620 = vpop.f32.mrf.mxu0
    %v4621 = vpop.f32.mrf.mxu0
    %v4622 = vadd.f32 0.0, %v4621
    %v4623 = vpop.f32.mrf.mxu0
    %4624 = vmatprep.mubr.bf16.mxu0 0
    %4625 = vmatmul.mubr.bf16.gmra.mxu0 %v4470
    %v4626 = vpop.f32.mrf.mxu0
    %v4627 = vadd.f32 0.0, %v4626
    %v4628 = vpop.f32.mrf.mxu0
    %v4629 = vpop.f32.mrf.mxu0
    %v4630 = vadd.f32 0.0, %v4629
    %v4631 = vpop.f32.mrf.mxu0
    %4632 = vdwg.mxu0
    %v4633 = vadd.f32 %v4447, %v4571
    %v4634 = vadd.f32 %v4448, %v4574
    %v4635 = vadd.f32 %v4449, %v4579
    %v4636 = vadd.f32 %v4450, %v4582
    %v4637 = vadd.f32 %v4451, %v4587
    %v4638 = vadd.f32 %v4452, %v4590
    %v4639 = vadd.f32 %v4453, %v4595
    %v4640 = vadd.f32 %v4454, %v4598
    %v4641 = vadd.f32 %v4455, %v4603
    %v4642 = vadd.f32 %v4456, %v4606
    %v4643 = vadd.f32 %v4457, %v4611
    %v4644 = vadd.f32 %v4458, %v4614
    %v4645 = vadd.f32 %v4459, %v4619
    %v4646 = vadd.f32 %v4460, %v4622
    %v4647 = vadd.f32 %v4461, %v4627
    %v4648 = vadd.f32 %v4462, %v4630
    %v4649 = vld [vmem:[%s11] sm:$0x1]
    %v4651 = vlaneseq
    %v4652 = vshrl.u32 %v4651, 7
    %v4653 = vsub.s32 0, %v4652
    %v4654 = vrot.slane %v4649, %v4653
    %v4656 = vadd.f32 %v4633, %v4654
    %v4657 = vadd.f32 %v4634, %v4654
    %v4658 = vadd.f32 %v4635, %v4654
    %v4659 = vadd.f32 %v4636, %v4654
    %v4660 = vadd.f32 %v4637, %v4654
    %v4661 = vadd.f32 %v4638, %v4654
    %v4662 = vadd.f32 %v4639, %v4654
    %v4663 = vadd.f32 %v4640, %v4654
    %v4664 = vadd.f32 %v4641, %v4654
    %v4665 = vadd.f32 %v4642, %v4654
    %v4666 = vadd.f32 %v4643, %v4654
    %v4667 = vadd.f32 %v4644, %v4654
    %v4668 = vadd.f32 %v4645, %v4654
    %v4669 = vadd.f32 %v4646, %v4654
    %v4670 = vadd.f32 %v4647, %v4654
    %v4671 = vadd.f32 %v4648, %v4654
    %vm4672 = vcmp.lt.f32.partialorder %v135, 1.0
    %vm4673 = vcmp.lt.f32.partialorder %v136, 1.0
    %vm4674 = vcmp.lt.f32.partialorder %v137, 1.0
    %vm4675 = vcmp.lt.f32.partialorder %v138, 1.0
    %vm4676 = vcmp.lt.f32.partialorder %v139, 1.0
    %vm4677 = vcmp.lt.f32.partialorder %v140, 1.0
    %vm4678 = vcmp.lt.f32.partialorder %v141, 1.0
    %vm4679 = vcmp.lt.f32.partialorder %v142, 1.0
    %vm4680 = vcmp.lt.f32.partialorder %v143, 1.0
    %vm4681 = vcmp.lt.f32.partialorder %v144, 1.0
    %vm4682 = vcmp.lt.f32.partialorder %v145, 1.0
    %vm4683 = vcmp.lt.f32.partialorder %v146, 1.0
    %vm4684 = vcmp.lt.f32.partialorder %v147, 1.0
    %vm4685 = vcmp.lt.f32.partialorder %v148, 1.0
    %vm4686 = vcmp.lt.f32.partialorder %v149, 1.0
    %vm4687 = vcmp.lt.f32.partialorder %v150, 1.0
    %v4688 = vsel %vm4672, 1, 0
    %v4689 = vsel %vm4673, 1, 0
    %v4690 = vsel %vm4674, 1, 0
    %v4691 = vsel %vm4675, 1, 0
    %v4692 = vsel %vm4676, 1, 0
    %v4693 = vsel %vm4677, 1, 0
    %v4694 = vsel %vm4678, 1, 0
    %v4695 = vsel %vm4679, 1, 0
    %v4696 = vsel %vm4680, 1, 0
    %v4697 = vsel %vm4681, 1, 0
    %v4698 = vsel %vm4682, 1, 0
    %v4699 = vsel %vm4683, 1, 0
    %v4700 = vsel %vm4684, 1, 0
    %v4701 = vsel %vm4685, 1, 0
    %v4702 = vsel %vm4686, 1, 0
    %v4703 = vsel %vm4687, 1, 0
    %v4704 = vcvt.s32.f32 %v4688
    %v4705 = vcvt.s32.f32 %v4689
    %v4706 = vcvt.s32.f32 %v4690
    %v4707 = vcvt.s32.f32 %v4691
    %v4708 = vcvt.s32.f32 %v4692
    %v4709 = vcvt.s32.f32 %v4693
    %v4710 = vcvt.s32.f32 %v4694
    %v4711 = vcvt.s32.f32 %v4695
    %v4712 = vcvt.s32.f32 %v4696
    %v4713 = vcvt.s32.f32 %v4697
    %v4714 = vcvt.s32.f32 %v4698
    %v4715 = vcvt.s32.f32 %v4699
    %v4716 = vcvt.s32.f32 %v4700
    %v4717 = vcvt.s32.f32 %v4701
    %v4718 = vcvt.s32.f32 %v4702
    %v4719 = vcvt.s32.f32 %v4703
    %v4720 = vld [vmem:[%s12] sm:$0x1]
    %v4721 = vld [vmem:[%s13] sm:$0x1]
    %4723 = vset.pattern.permute.xlu0 0
    %4724 = vperm.xlu0 %4723, %v4704
    %v4725 = vpop.permute.xlu0 %4724
    %4728 = vset.pattern.permute.xlu0 0
    %4729 = vperm.xlu0 %4728, %v4705
    %v4730 = vpop.permute.xlu0 %4729
    %4733 = vset.pattern.permute.xlu0 0
    %4734 = vperm.xlu0 %4733, %v4706
    %v4735 = vpop.permute.xlu0 %4734
    %4738 = vset.pattern.permute.xlu0 0
    %4739 = vperm.xlu0 %4738, %v4707
    %v4740 = vpop.permute.xlu0 %4739
    %4743 = vset.pattern.permute.xlu0 0
    %4744 = vperm.xlu0 %4743, %v4708
    %v4745 = vpop.permute.xlu0 %4744
    %4748 = vset.pattern.permute.xlu0 0
    %4749 = vperm.xlu0 %4748, %v4709
    %v4750 = vpop.permute.xlu0 %4749
    %4753 = vset.pattern.permute.xlu0 0
    %4754 = vperm.xlu0 %4753, %v4710
    %v4755 = vpop.permute.xlu0 %4754
    %4758 = vset.pattern.permute.xlu0 0
    %4759 = vperm.xlu0 %4758, %v4711
    %v4760 = vpop.permute.xlu0 %4759
    %4763 = vset.pattern.permute.xlu0 0
    %4764 = vperm.xlu0 %4763, %v4712
    %v4765 = vpop.permute.xlu0 %4764
    %4768 = vset.pattern.permute.xlu0 0
    %4769 = vperm.xlu0 %4768, %v4713
    %v4770 = vpop.permute.xlu0 %4769
    %4773 = vset.pattern.permute.xlu0 0
    %4774 = vperm.xlu0 %4773, %v4714
    %v4775 = vpop.permute.xlu0 %4774
    %4778 = vset.pattern.permute.xlu0 0
    %4779 = vperm.xlu0 %4778, %v4715
    %v4780 = vpop.permute.xlu0 %4779
    %4783 = vset.pattern.permute.xlu0 0
    %4784 = vperm.xlu0 %4783, %v4716
    %v4785 = vpop.permute.xlu0 %4784
    %4788 = vset.pattern.permute.xlu0 0
    %4789 = vperm.xlu0 %4788, %v4717
    %v4790 = vpop.permute.xlu0 %4789
    %4793 = vset.pattern.permute.xlu0 0
    %4794 = vperm.xlu0 %4793, %v4718
    %v4795 = vpop.permute.xlu0 %4794
    %4798 = vset.pattern.permute.xlu0 0
    %4799 = vperm.xlu0 %4798, %v4719
    %v4800 = vpop.permute.xlu0 %4799
    %v4802 = vmul.f32 %v4656, %v4725
    %v4803 = vmul.f32 %v4657, %v4730
    %v4804 = vmul.f32 %v4658, %v4735
    %v4805 = vmul.f32 %v4659, %v4740
    %v4806 = vmul.f32 %v4660, %v4745
    %v4807 = vmul.f32 %v4661, %v4750
    %v4808 = vmul.f32 %v4662, %v4755
    %v4809 = vmul.f32 %v4663, %v4760
    %v4810 = vmul.f32 %v4664, %v4765
    %v4811 = vmul.f32 %v4665, %v4770
    %v4812 = vmul.f32 %v4666, %v4775
    %v4813 = vmul.f32 %v4667, %v4780
    %v4814 = vmul.f32 %v4668, %v4785
    %v4815 = vmul.f32 %v4669, %v4790
    %v4816 = vmul.f32 %v4670, %v4795
    %v4817 = vmul.f32 %v4671, %v4800
    %v4818 = vadd.f32 %v4802, %v4803
    %v4819 = vadd.f32 %v4818, %v4804
    %v4820 = vadd.f32 %v4819, %v4805
    %v4821 = vadd.f32 %v4820, %v4806
    %v4822 = vadd.f32 %v4821, %v4807
    %v4823 = vadd.f32 %v4822, %v4808
    %v4824 = vadd.f32 %v4823, %v4809
    %v4825 = vadd.f32 %v4824, %v4810
    %v4826 = vadd.f32 %v4825, %v4811
    %v4827 = vadd.f32 %v4826, %v4812
    %v4828 = vadd.f32 %v4827, %v4813
    %v4829 = vadd.f32 %v4828, %v4814
    %v4830 = vadd.f32 %v4829, %v4815
    %v4831 = vadd.f32 %v4830, %v4816
    %v4832 = vadd.f32 %v4831, %v4817
    %v4833 = vrot.slane %v4832, 4
    %v4834 = vadd.f32 %v4832, %v4833
    %v4835 = vrot.slane %v4834, 2
    %v4836 = vadd.f32 %v4834, %v4835
    %v4837 = vrot.slane %v4836, 1
    %v4838 = vadd.f32 %v4836, %v4837
    %v4839 = vmul.f32 %v4838, 0.125
    %v4840 = vmul.f32 %v4802, %v4656
    %v4841 = vmul.f32 %v4803, %v4657
    %v4842 = vmul.f32 %v4804, %v4658
    %v4843 = vmul.f32 %v4805, %v4659
    %v4844 = vmul.f32 %v4806, %v4660
    %v4845 = vmul.f32 %v4807, %v4661
    %v4846 = vmul.f32 %v4808, %v4662
    %v4847 = vmul.f32 %v4809, %v4663
    %v4848 = vmul.f32 %v4810, %v4664
    %v4849 = vmul.f32 %v4811, %v4665
    %v4850 = vmul.f32 %v4812, %v4666
    %v4851 = vmul.f32 %v4813, %v4667
    %v4852 = vmul.f32 %v4814, %v4668
    %v4853 = vmul.f32 %v4815, %v4669
    %v4854 = vmul.f32 %v4816, %v4670
    %v4855 = vmul.f32 %v4817, %v4671
    %v4856 = vadd.f32 %v4840, %v4841
    %v4857 = vadd.f32 %v4856, %v4842
    %v4858 = vadd.f32 %v4857, %v4843
    %v4859 = vadd.f32 %v4858, %v4844
    %v4860 = vadd.f32 %v4859, %v4845
    %v4861 = vadd.f32 %v4860, %v4846
    %v4862 = vadd.f32 %v4861, %v4847
    %v4863 = vadd.f32 %v4862, %v4848
    %v4864 = vadd.f32 %v4863, %v4849
    %v4865 = vadd.f32 %v4864, %v4850
    %v4866 = vadd.f32 %v4865, %v4851
    %v4867 = vadd.f32 %v4866, %v4852
    %v4868 = vadd.f32 %v4867, %v4853
    %v4869 = vadd.f32 %v4868, %v4854
    %v4870 = vadd.f32 %v4869, %v4855
    %v4871 = vrot.slane %v4870, 4
    %v4872 = vadd.f32 %v4870, %v4871
    %v4873 = vrot.slane %v4872, 2
    %v4874 = vadd.f32 %v4872, %v4873
    %v4875 = vrot.slane %v4874, 1
    %v4876 = vadd.f32 %v4874, %v4875
    %v4877 = vmul.f32 %v4876, 0.125
    %v4878 = vmul.f32 %v4839, %v4839
    %v4879 = vsub.f32 %v4877, %v4878
    %v4880 = vsub.f32 %v4656, %v4839
    %v4881 = vsub.f32 %v4657, %v4839
    %v4882 = vsub.f32 %v4658, %v4839
    %v4883 = vsub.f32 %v4659, %v4839
    %v4884 = vsub.f32 %v4660, %v4839
    %v4885 = vsub.f32 %v4661, %v4839
    %v4886 = vsub.f32 %v4662, %v4839
    %v4887 = vsub.f32 %v4663, %v4839
    %v4888 = vsub.f32 %v4664, %v4839
    %v4889 = vsub.f32 %v4665, %v4839
    %v4890 = vsub.f32 %v4666, %v4839
    %v4891 = vsub.f32 %v4667, %v4839
    %v4892 = vsub.f32 %v4668, %v4839
    %v4893 = vsub.f32 %v4669, %v4839
    %v4894 = vsub.f32 %v4670, %v4839
    %v4895 = vsub.f32 %v4671, %v4839
    %v4897 = vlaneseq
    %v4898 = vshrl.u32 %v4897, 7
    %v4899 = vsub.s32 0, %v4898
    %v4900 = vrot.slane %v4720, %v4899
    %v4902 = vmul.f32 %v4900, %v4880
    %v4903 = vmul.f32 %v4900, %v4881
    %v4904 = vmul.f32 %v4900, %v4882
    %v4905 = vmul.f32 %v4900, %v4883
    %v4906 = vmul.f32 %v4900, %v4884
    %v4907 = vmul.f32 %v4900, %v4885
    %v4908 = vmul.f32 %v4900, %v4886
    %v4909 = vmul.f32 %v4900, %v4887
    %v4910 = vmul.f32 %v4900, %v4888
    %v4911 = vmul.f32 %v4900, %v4889
    %v4912 = vmul.f32 %v4900, %v4890
    %v4913 = vmul.f32 %v4900, %v4891
    %v4914 = vmul.f32 %v4900, %v4892
    %v4915 = vmul.f32 %v4900, %v4893
    %v4916 = vmul.f32 %v4900, %v4894
    %v4917 = vmul.f32 %v4900, %v4895
    %v4918 = vadd.f32 %v4879, 1e-05
    %v4919 = vrsqrt.pop %v4918
    %v4920 = vmul.f32 %v4902, %v4919
    %v4921 = vmul.f32 %v4903, %v4919
    %v4922 = vmul.f32 %v4904, %v4919
    %v4923 = vmul.f32 %v4905, %v4919
    %v4924 = vmul.f32 %v4906, %v4919
    %v4925 = vmul.f32 %v4907, %v4919
    %v4926 = vmul.f32 %v4908, %v4919
    %v4927 = vmul.f32 %v4909, %v4919
    %v4928 = vmul.f32 %v4910, %v4919
    %v4929 = vmul.f32 %v4911, %v4919
    %v4930 = vmul.f32 %v4912, %v4919
    %v4931 = vmul.f32 %v4913, %v4919
    %v4932 = vmul.f32 %v4914, %v4919
    %v4933 = vmul.f32 %v4915, %v4919
    %v4934 = vmul.f32 %v4916, %v4919
    %v4935 = vmul.f32 %v4917, %v4919
    %v4937 = vlaneseq
    %v4938 = vshrl.u32 %v4937, 7
    %v4939 = vsub.s32 0, %v4938
    %v4940 = vrot.slane %v4721, %v4939
    %v4942 = vadd.f32 %v4920, %v4940
    %v4943 = vadd.f32 %v4921, %v4940
    %v4944 = vadd.f32 %v4922, %v4940
    %v4945 = vadd.f32 %v4923, %v4940
    %v4946 = vadd.f32 %v4924, %v4940
    %v4947 = vadd.f32 %v4925, %v4940
    %v4948 = vadd.f32 %v4926, %v4940
    %v4949 = vadd.f32 %v4927, %v4940
    %v4950 = vadd.f32 %v4928, %v4940
    %v4951 = vadd.f32 %v4929, %v4940
    %v4952 = vadd.f32 %v4930, %v4940
    %v4953 = vadd.f32 %v4931, %v4940
    %v4954 = vadd.f32 %v4932, %v4940
    %v4955 = vadd.f32 %v4933, %v4940
    %v4956 = vadd.f32 %v4934, %v4940
    %v4957 = vadd.f32 %v4935, %v4940
    %v4958 = vmax.f32 %v4942, 0.0
    %v4959 = vmax.f32 %v4943, 0.0
    %v4960 = vmax.f32 %v4944, 0.0
    %v4961 = vmax.f32 %v4945, 0.0
    %v4962 = vmax.f32 %v4946, 0.0
    %v4963 = vmax.f32 %v4947, 0.0
    %v4964 = vmax.f32 %v4948, 0.0
    %v4965 = vmax.f32 %v4949, 0.0
    %v4966 = vmax.f32 %v4950, 0.0
    %v4967 = vmax.f32 %v4951, 0.0
    %v4968 = vmax.f32 %v4952, 0.0
    %v4969 = vmax.f32 %v4953, 0.0
    %v4970 = vmax.f32 %v4954, 0.0
    %v4971 = vmax.f32 %v4955, 0.0
    %v4972 = vmax.f32 %v4956, 0.0
    %v4973 = vmax.f32 %v4957, 0.0
    %v4974 = vpack.c.bf16 %v4959, %v4958
    %v4975 = vpack.c.bf16 %v4961, %v4960
    %v4976 = vpack.c.bf16 %v4963, %v4962
    %v4977 = vpack.c.bf16 %v4965, %v4964
    %v4978 = vpack.c.bf16 %v4967, %v4966
    %v4979 = vpack.c.bf16 %v4969, %v4968
    %v4980 = vpack.c.bf16 %v4971, %v4970
    %v4981 = vpack.c.bf16 %v4973, %v4972
    %v4982 = vld [vmem:[#allocation8] sm:$0xf]
    %v4983 = vld [vmem:[#allocation8 + $0x4] sm:$0xf]
    %v4984 = vld [vmem:[#allocation8 + $0x8] sm:$0xf]
    %v4985 = vld [vmem:[#allocation8 + $0xc] sm:$0xf]
    %v4986 = vld [vmem:[#allocation8 + $0x10] sm:$0xf]
    %v4987 = vld [vmem:[#allocation8 + $0x14] sm:$0xf]
    %v4988 = vld [vmem:[#allocation8 + $0x18] sm:$0xf]
    %v4989 = vld [vmem:[#allocation8 + $0x1c] sm:$0xf]
    %v4990 = vld [vmem:[#allocation8 + $0x20] sm:$0xf]
    %v4991 = vld [vmem:[#allocation8 + $0x24] sm:$0xf]
    %v4992 = vld [vmem:[#allocation8 + $0x28] sm:$0xf]
    %v4993 = vld [vmem:[#allocation8 + $0x2c] sm:$0xf]
    %v4994 = vld [vmem:[#allocation8 + $0x30] sm:$0xf]
    %v4995 = vld [vmem:[#allocation8 + $0x34] sm:$0xf]
    %v4996 = vld [vmem:[#allocation8 + $0x38] sm:$0xf]
    %v4997 = vld [vmem:[#allocation8 + $0x3c] sm:$0xf]
    %v4998 = vld [vmem:[%s15] sm:$0x1]
    %v5000 = vlaneseq
    %v5001 = vshrl.u32 %v5000, 7
    %v5002 = vsub.s32 0, %v5001
    %v5003 = vrot.slane %v4998, %v5002
    %v5021 = vunpack.c.l.b16 %v4982
    %v5022 = vunpack.c.l.b16 %v4983
    %v5023 = vunpack.c.l.b16 %v4984
    %v5024 = vunpack.c.l.b16 %v4985
    %v5025 = vunpack.c.l.b16 %v4986
    %v5026 = vunpack.c.l.b16 %v4987
    %v5027 = vunpack.c.l.b16 %v4988
    %v5028 = vunpack.c.l.b16 %v4989
    %v5029 = vunpack.c.l.b16 %v4990
    %v5030 = vunpack.c.l.b16 %v4991
    %v5031 = vunpack.c.l.b16 %v4992
    %v5032 = vunpack.c.l.b16 %v4993
    %v5033 = vunpack.c.l.b16 %v4994
    %v5034 = vunpack.c.l.b16 %v4995
    %v5035 = vunpack.c.l.b16 %v4996
    %v5036 = vunpack.c.l.b16 %v4997
    %v5037 = vpack.c.b16 %v5022, %v5021
    %v5038 = vpack.c.b16 %v5024, %v5023
    %v5039 = vpack.c.b16 %v5026, %v5025
    %v5040 = vpack.c.b16 %v5028, %v5027
    %v5041 = vpack.c.b16 %v5030, %v5029
    %v5042 = vpack.c.b16 %v5032, %v5031
    %v5043 = vpack.c.b16 %v5034, %v5033
    %v5044 = vpack.c.b16 %v5036, %v5035
    %5053 = vmatprep.subr.bf16.mxu0 0
    %5054 = vmatpush1.bf16.msra.mxu0 %v5044
    %5055 = vmatprep.subr.bf16.mxu0 0
    %5056 = vmatpush1.bf16.msra.mxu0 %v5043
    %5057 = vmatprep.subr.bf16.mxu0 0
    %5058 = vmatpush1.bf16.msra.mxu0 %v5042
    %5059 = vmatprep.subr.bf16.mxu0 0
    %5060 = vmatpush1.bf16.msra.mxu0 %v5041
    %5061 = vmatprep.subr.bf16.mxu0 0
    %5062 = vmatpush1.bf16.msra.mxu0 %v5040
    %5063 = vmatprep.subr.bf16.mxu0 0
    %5064 = vmatpush1.bf16.msra.mxu0 %v5039
    %5065 = vmatprep.subr.bf16.mxu0 0
    %5066 = vmatpush1.bf16.msra.mxu0 %v5038
    %5067 = vmatprep.subr.bf16.mxu0 0
    %5068 = vmatpush1.bf16.msra.mxu0 %v5037
    %5069 = vmatprep.subr.bf16.mxu0 0
    %5070 = vmatpush2.bf16.msra.mxu0 0
    %5071 = vmatprep.subr.bf16.mxu0 0
    %5072 = vmatpush2.bf16.msra.mxu0 0
    %5073 = vmatprep.subr.bf16.mxu0 0
    %5074 = vmatpush2.bf16.msra.mxu0 0
    %5075 = vmatprep.subr.bf16.mxu0 0
    %5076 = vmatpush2.bf16.msra.mxu0 0
    %5077 = vmatprep.subr.bf16.mxu0 0
    %5078 = vmatpush2.bf16.msra.mxu0 0
    %5079 = vmatprep.subr.bf16.mxu0 0
    %5080 = vmatpush2.bf16.msra.mxu0 0
    %5081 = vmatprep.subr.bf16.mxu0 0
    %5082 = vmatpush2.bf16.msra.mxu0 0
    %5083 = vmatprep.subr.bf16.mxu0 0
    %5084 = vmatpush2.bf16.msra.mxu0 0
    %5085 = vmatprep.mubr.bf16.mxu0 0
    %5086 = vmatmul.mubr.bf16.gmra.mxu0 %v4974
    %v5087 = vpop.f32.mrf.mxu0
    %v5088 = vadd.f32 %v5003, %v5087
    %v5089 = vpop.f32.mrf.mxu0
    %v5090 = vpop.f32.mrf.mxu0
    %v5091 = vadd.f32 %v5003, %v5090
    %v5092 = vpop.f32.mrf.mxu0
    %5093 = vmatprep.mubr.bf16.mxu0 0
    %5094 = vmatmul.mubr.bf16.gmra.mxu0 %v4975
    %v5095 = vpop.f32.mrf.mxu0
    %v5096 = vadd.f32 %v5003, %v5095
    %v5097 = vpop.f32.mrf.mxu0
    %v5098 = vpop.f32.mrf.mxu0
    %v5099 = vadd.f32 %v5003, %v5098
    %v5100 = vpop.f32.mrf.mxu0
    %5101 = vmatprep.mubr.bf16.mxu0 0
    %5102 = vmatmul.mubr.bf16.gmra.mxu0 %v4976
    %v5103 = vpop.f32.mrf.mxu0
    %v5104 = vadd.f32 %v5003, %v5103
    %v5105 = vpop.f32.mrf.mxu0
    %v5106 = vpop.f32.mrf.mxu0
    %v5107 = vadd.f32 %v5003, %v5106
    %v5108 = vpop.f32.mrf.mxu0
    %5109 = vmatprep.mubr.bf16.mxu0 0
    %5110 = vmatmul.mubr.bf16.gmra.mxu0 %v4977
    %v5111 = vpop.f32.mrf.mxu0
    %v5112 = vadd.f32 %v5003, %v5111
    %v5113 = vpop.f32.mrf.mxu0
    %v5114 = vpop.f32.mrf.mxu0
    %v5115 = vadd.f32 %v5003, %v5114
    %v5116 = vpop.f32.mrf.mxu0
    %5117 = vmatprep.mubr.bf16.mxu0 0
    %5118 = vmatmul.mubr.bf16.gmra.mxu0 %v4978
    %v5119 = vpop.f32.mrf.mxu0
    %v5120 = vadd.f32 %v5003, %v5119
    %v5121 = vpop.f32.mrf.mxu0
    %v5122 = vpop.f32.mrf.mxu0
    %v5123 = vadd.f32 %v5003, %v5122
    %v5124 = vpop.f32.mrf.mxu0
    %5125 = vmatprep.mubr.bf16.mxu0 0
    %5126 = vmatmul.mubr.bf16.gmra.mxu0 %v4979
    %v5127 = vpop.f32.mrf.mxu0
    %v5128 = vadd.f32 %v5003, %v5127
    %v5129 = vpop.f32.mrf.mxu0
    %v5130 = vpop.f32.mrf.mxu0
    %v5131 = vadd.f32 %v5003, %v5130
    %v5132 = vpop.f32.mrf.mxu0
    %5133 = vmatprep.mubr.bf16.mxu0 0
    %5134 = vmatmul.mubr.bf16.gmra.mxu0 %v4980
    %v5135 = vpop.f32.mrf.mxu0
    %v5136 = vadd.f32 %v5003, %v5135
    %v5137 = vpop.f32.mrf.mxu0
    %v5138 = vpop.f32.mrf.mxu0
    %v5139 = vadd.f32 %v5003, %v5138
    %v5140 = vpop.f32.mrf.mxu0
    %5141 = vmatprep.mubr.bf16.mxu0 0
    %5142 = vmatmul.mubr.bf16.gmra.mxu0 %v4981
    %v5143 = vpop.f32.mrf.mxu0
    %v5144 = vadd.f32 %v5003, %v5143
    %v5145 = vpop.f32.mrf.mxu0
    %v5146 = vpop.f32.mrf.mxu0
    %v5147 = vadd.f32 %v5003, %v5146
    %v5148 = vpop.f32.mrf.mxu0
    %5149 = vdwg.mxu0
    %v5150 = vld [vmem:[%s16] sm:$0x1]
    %v5151 = vld [vmem:[%s17] sm:$0x1]
    %v5152 = vmul.f32 %v5088, %v4725
    %v5153 = vmul.f32 %v5091, %v4730
    %v5154 = vmul.f32 %v5096, %v4735
    %v5155 = vmul.f32 %v5099, %v4740
    %v5156 = vmul.f32 %v5104, %v4745
    %v5157 = vmul.f32 %v5107, %v4750
    %v5158 = vmul.f32 %v5112, %v4755
    %v5159 = vmul.f32 %v5115, %v4760
    %v5160 = vmul.f32 %v5120, %v4765
    %v5161 = vmul.f32 %v5123, %v4770
    %v5162 = vmul.f32 %v5128, %v4775
    %v5163 = vmul.f32 %v5131, %v4780
    %v5164 = vmul.f32 %v5136, %v4785
    %v5165 = vmul.f32 %v5139, %v4790
    %v5166 = vmul.f32 %v5144, %v4795
    %v5167 = vmul.f32 %v5147, %v4800
    %v5168 = vadd.f32 %v5152, %v5153
    %v5169 = vadd.f32 %v5168, %v5154
    %v5170 = vadd.f32 %v5169, %v5155
    %v5171 = vadd.f32 %v5170, %v5156
    %v5172 = vadd.f32 %v5171, %v5157
    %v5173 = vadd.f32 %v5172, %v5158
    %v5174 = vadd.f32 %v5173, %v5159
    %v5175 = vadd.f32 %v5174, %v5160
    %v5176 = vadd.f32 %v5175, %v5161
    %v5177 = vadd.f32 %v5176, %v5162
    %v5178 = vadd.f32 %v5177, %v5163
    %v5179 = vadd.f32 %v5178, %v5164
    %v5180 = vadd.f32 %v5179, %v5165
    %v5181 = vadd.f32 %v5180, %v5166
    %v5182 = vadd.f32 %v5181, %v5167
    %v5183 = vrot.slane %v5182, 4
    %v5184 = vadd.f32 %v5182, %v5183
    %v5185 = vrot.slane %v5184, 2
    %v5186 = vadd.f32 %v5184, %v5185
    %v5187 = vrot.slane %v5186, 1
    %v5188 = vadd.f32 %v5186, %v5187
    %v5189 = vmul.f32 %v5188, 0.125
    %v5190 = vmul.f32 %v5152, %v5088
    %v5191 = vmul.f32 %v5153, %v5091
    %v5192 = vmul.f32 %v5154, %v5096
    %v5193 = vmul.f32 %v5155, %v5099
    %v5194 = vmul.f32 %v5156, %v5104
    %v5195 = vmul.f32 %v5157, %v5107
    %v5196 = vmul.f32 %v5158, %v5112
    %v5197 = vmul.f32 %v5159, %v5115
    %v5198 = vmul.f32 %v5160, %v5120
    %v5199 = vmul.f32 %v5161, %v5123
    %v5200 = vmul.f32 %v5162, %v5128
    %v5201 = vmul.f32 %v5163, %v5131
    %v5202 = vmul.f32 %v5164, %v5136
    %v5203 = vmul.f32 %v5165, %v5139
    %v5204 = vmul.f32 %v5166, %v5144
    %v5205 = vmul.f32 %v5167, %v5147
    %v5206 = vadd.f32 %v5190, %v5191
    %v5207 = vadd.f32 %v5206, %v5192
    %v5208 = vadd.f32 %v5207, %v5193
    %v5209 = vadd.f32 %v5208, %v5194
    %v5210 = vadd.f32 %v5209, %v5195
    %v5211 = vadd.f32 %v5210, %v5196
    %v5212 = vadd.f32 %v5211, %v5197
    %v5213 = vadd.f32 %v5212, %v5198
    %v5214 = vadd.f32 %v5213, %v5199
    %v5215 = vadd.f32 %v5214, %v5200
    %v5216 = vadd.f32 %v5215, %v5201
    %v5217 = vadd.f32 %v5216, %v5202
    %v5218 = vadd.f32 %v5217, %v5203
    %v5219 = vadd.f32 %v5218, %v5204
    %v5220 = vadd.f32 %v5219, %v5205
    %v5221 = vrot.slane %v5220, 4
    %v5222 = vadd.f32 %v5220, %v5221
    %v5223 = vrot.slane %v5222, 2
    %v5224 = vadd.f32 %v5222, %v5223
    %v5225 = vrot.slane %v5224, 1
    %v5226 = vadd.f32 %v5224, %v5225
    %v5227 = vmul.f32 %v5226, 0.125
    %v5228 = vmul.f32 %v5189, %v5189
    %v5229 = vsub.f32 %v5227, %v5228
    %v5230 = vsub.f32 %v5088, %v5189
    %v5231 = vsub.f32 %v5091, %v5189
    %v5232 = vsub.f32 %v5096, %v5189
    %v5233 = vsub.f32 %v5099, %v5189
    %v5234 = vsub.f32 %v5104, %v5189
    %v5235 = vsub.f32 %v5107, %v5189
    %v5236 = vsub.f32 %v5112, %v5189
    %v5237 = vsub.f32 %v5115, %v5189
    %v5238 = vsub.f32 %v5120, %v5189
    %v5239 = vsub.f32 %v5123, %v5189
    %v5240 = vsub.f32 %v5128, %v5189
    %v5241 = vsub.f32 %v5131, %v5189
    %v5242 = vsub.f32 %v5136, %v5189
    %v5243 = vsub.f32 %v5139, %v5189
    %v5244 = vsub.f32 %v5144, %v5189
    %v5245 = vsub.f32 %v5147, %v5189
    %v5247 = vlaneseq
    %v5248 = vshrl.u32 %v5247, 7
    %v5249 = vsub.s32 0, %v5248
    %v5250 = vrot.slane %v5150, %v5249
    %v5252 = vmul.f32 %v5250, %v5230
    %v5253 = vmul.f32 %v5250, %v5231
    %v5254 = vmul.f32 %v5250, %v5232
    %v5255 = vmul.f32 %v5250, %v5233
    %v5256 = vmul.f32 %v5250, %v5234
    %v5257 = vmul.f32 %v5250, %v5235
    %v5258 = vmul.f32 %v5250, %v5236
    %v5259 = vmul.f32 %v5250, %v5237
    %v5260 = vmul.f32 %v5250, %v5238
    %v5261 = vmul.f32 %v5250, %v5239
    %v5262 = vmul.f32 %v5250, %v5240
    %v5263 = vmul.f32 %v5250, %v5241
    %v5264 = vmul.f32 %v5250, %v5242
    %v5265 = vmul.f32 %v5250, %v5243
    %v5266 = vmul.f32 %v5250, %v5244
    %v5267 = vmul.f32 %v5250, %v5245
    %v5268 = vadd.f32 %v5229, 1e-05
    %v5269 = vrsqrt.pop %v5268
    %v5270 = vmul.f32 %v5252, %v5269
    %v5271 = vmul.f32 %v5253, %v5269
    %v5272 = vmul.f32 %v5254, %v5269
    %v5273 = vmul.f32 %v5255, %v5269
    %v5274 = vmul.f32 %v5256, %v5269
    %v5275 = vmul.f32 %v5257, %v5269
    %v5276 = vmul.f32 %v5258, %v5269
    %v5277 = vmul.f32 %v5259, %v5269
    %v5278 = vmul.f32 %v5260, %v5269
    %v5279 = vmul.f32 %v5261, %v5269
    %v5280 = vmul.f32 %v5262, %v5269
    %v5281 = vmul.f32 %v5263, %v5269
    %v5282 = vmul.f32 %v5264, %v5269
    %v5283 = vmul.f32 %v5265, %v5269
    %v5284 = vmul.f32 %v5266, %v5269
    %v5285 = vmul.f32 %v5267, %v5269
    %v5287 = vlaneseq
    %v5288 = vshrl.u32 %v5287, 7
    %v5289 = vsub.s32 0, %v5288
    %v5290 = vrot.slane %v5151, %v5289
    %v5292 = vadd.f32 %v5270, %v5290
    %v5293 = vadd.f32 %v5271, %v5290
    %v5294 = vadd.f32 %v5272, %v5290
    %v5295 = vadd.f32 %v5273, %v5290
    %v5296 = vadd.f32 %v5274, %v5290
    %v5297 = vadd.f32 %v5275, %v5290
    %v5298 = vadd.f32 %v5276, %v5290
    %v5299 = vadd.f32 %v5277, %v5290
    %v5300 = vadd.f32 %v5278, %v5290
    %v5301 = vadd.f32 %v5279, %v5290
    %v5302 = vadd.f32 %v5280, %v5290
    %v5303 = vadd.f32 %v5281, %v5290
    %v5304 = vadd.f32 %v5282, %v5290
    %v5305 = vadd.f32 %v5283, %v5290
    %v5306 = vadd.f32 %v5284, %v5290
    %v5307 = vadd.f32 %v5285, %v5290
    %v5308 = vmax.f32 %v5292, 0.0
    %v5309 = vmax.f32 %v5293, 0.0
    %v5310 = vmax.f32 %v5294, 0.0
    %v5311 = vmax.f32 %v5295, 0.0
    %v5312 = vmax.f32 %v5296, 0.0
    %v5313 = vmax.f32 %v5297, 0.0
    %v5314 = vmax.f32 %v5298, 0.0
    %v5315 = vmax.f32 %v5299, 0.0
    %v5316 = vmax.f32 %v5300, 0.0
    %v5317 = vmax.f32 %v5301, 0.0
    %v5318 = vmax.f32 %v5302, 0.0
    %v5319 = vmax.f32 %v5303, 0.0
    %v5320 = vmax.f32 %v5304, 0.0
    %v5321 = vmax.f32 %v5305, 0.0
    %v5322 = vmax.f32 %v5306, 0.0
    %v5323 = vmax.f32 %v5307, 0.0
    %v5324 = vpack.c.bf16 %v5309, %v5308
    %v5325 = vpack.c.bf16 %v5311, %v5310
    %v5326 = vpack.c.bf16 %v5313, %v5312
    %v5327 = vpack.c.bf16 %v5315, %v5314
    %v5328 = vpack.c.bf16 %v5317, %v5316
    %v5329 = vpack.c.bf16 %v5319, %v5318
    %v5330 = vpack.c.bf16 %v5321, %v5320
    %v5331 = vpack.c.bf16 %v5323, %v5322
    %v5332 = vld [vmem:[#allocation10] sm:$0xf]
    %v5333 = vld [vmem:[#allocation10 + $0x4] sm:$0xf]
    %v5334 = vld [vmem:[#allocation10 + $0x8] sm:$0xf]
    %v5335 = vld [vmem:[#allocation10 + $0xc] sm:$0xf]
    %v5336 = vld [vmem:[#allocation10 + $0x10] sm:$0xf]
    %v5337 = vld [vmem:[#allocation10 + $0x14] sm:$0xf]
    %v5338 = vld [vmem:[#allocation10 + $0x18] sm:$0xf]
    %v5339 = vld [vmem:[#allocation10 + $0x1c] sm:$0xf]
    %v5340 = vld [vmem:[#allocation10 + $0x20] sm:$0xf]
    %v5341 = vld [vmem:[#allocation10 + $0x24] sm:$0xf]
    %v5342 = vld [vmem:[#allocation10 + $0x28] sm:$0xf]
    %v5343 = vld [vmem:[#allocation10 + $0x2c] sm:$0xf]
    %v5344 = vld [vmem:[#allocation10 + $0x30] sm:$0xf]
    %v5345 = vld [vmem:[#allocation10 + $0x34] sm:$0xf]
    %v5346 = vld [vmem:[#allocation10 + $0x38] sm:$0xf]
    %v5347 = vld [vmem:[#allocation10 + $0x3c] sm:$0xf]
    %v5348 = vld [vmem:[%s19] sm:$0x1]
    %v5350 = vlaneseq
    %v5351 = vshrl.u32 %v5350, 7
    %v5352 = vsub.s32 0, %v5351
    %v5353 = vrot.slane %v5348, %v5352
    %v5371 = vunpack.c.l.b16 %v5332
    %v5372 = vunpack.c.l.b16 %v5333
    %v5373 = vunpack.c.l.b16 %v5334
    %v5374 = vunpack.c.l.b16 %v5335
    %v5375 = vunpack.c.l.b16 %v5336
    %v5376 = vunpack.c.l.b16 %v5337
    %v5377 = vunpack.c.l.b16 %v5338
    %v5378 = vunpack.c.l.b16 %v5339
    %v5379 = vunpack.c.l.b16 %v5340
    %v5380 = vunpack.c.l.b16 %v5341
    %v5381 = vunpack.c.l.b16 %v5342
    %v5382 = vunpack.c.l.b16 %v5343
    %v5383 = vunpack.c.l.b16 %v5344
    %v5384 = vunpack.c.l.b16 %v5345
    %v5385 = vunpack.c.l.b16 %v5346
    %v5386 = vunpack.c.l.b16 %v5347
    %v5387 = vpack.c.b16 %v5372, %v5371
    %v5388 = vpack.c.b16 %v5374, %v5373
    %v5389 = vpack.c.b16 %v5376, %v5375
    %v5390 = vpack.c.b16 %v5378, %v5377
    %v5391 = vpack.c.b16 %v5380, %v5379
    %v5392 = vpack.c.b16 %v5382, %v5381
    %v5393 = vpack.c.b16 %v5384, %v5383
    %v5394 = vpack.c.b16 %v5386, %v5385
    %5403 = vmatprep.subr.bf16.mxu0 0
    %5404 = vmatpush1.bf16.msra.mxu0 %v5394
    %5405 = vmatprep.subr.bf16.mxu0 0
    %5406 = vmatpush1.bf16.msra.mxu0 %v5393
    %5407 = vmatprep.subr.bf16.mxu0 0
    %5408 = vmatpush1.bf16.msra.mxu0 %v5392
    %5409 = vmatprep.subr.bf16.mxu0 0
    %5410 = vmatpush1.bf16.msra.mxu0 %v5391
    %5411 = vmatprep.subr.bf16.mxu0 0
    %5412 = vmatpush1.bf16.msra.mxu0 %v5390
    %5413 = vmatprep.subr.bf16.mxu0 0
    %5414 = vmatpush1.bf16.msra.mxu0 %v5389
    %5415 = vmatprep.subr.bf16.mxu0 0
    %5416 = vmatpush1.bf16.msra.mxu0 %v5388
    %5417 = vmatprep.subr.bf16.mxu0 0
    %5418 = vmatpush1.bf16.msra.mxu0 %v5387
    %5419 = vmatprep.subr.bf16.mxu0 0
    %5420 = vmatpush2.bf16.msra.mxu0 0
    %5421 = vmatprep.subr.bf16.mxu0 0
    %5422 = vmatpush2.bf16.msra.mxu0 0
    %5423 = vmatprep.subr.bf16.mxu0 0
    %5424 = vmatpush2.bf16.msra.mxu0 0
    %5425 = vmatprep.subr.bf16.mxu0 0
    %5426 = vmatpush2.bf16.msra.mxu0 0
    %5427 = vmatprep.subr.bf16.mxu0 0
    %5428 = vmatpush2.bf16.msra.mxu0 0
    %5429 = vmatprep.subr.bf16.mxu0 0
    %5430 = vmatpush2.bf16.msra.mxu0 0
    %5431 = vmatprep.subr.bf16.mxu0 0
    %5432 = vmatpush2.bf16.msra.mxu0 0
    %5433 = vmatprep.subr.bf16.mxu0 0
    %5434 = vmatpush2.bf16.msra.mxu0 0
    %5435 = vmatprep.mubr.bf16.mxu0 0
    %5436 = vmatmul.mubr.bf16.gmra.mxu0 %v5324
    %v5437 = vpop.f32.mrf.mxu0
    %v5438 = vadd.f32 %v5353, %v5437
    %v5439 = vpop.f32.mrf.mxu0
    %v5440 = vpop.f32.mrf.mxu0
    %v5441 = vadd.f32 %v5353, %v5440
    %v5442 = vpop.f32.mrf.mxu0
    %5443 = vmatprep.mubr.bf16.mxu0 0
    %5444 = vmatmul.mubr.bf16.gmra.mxu0 %v5325
    %v5445 = vpop.f32.mrf.mxu0
    %v5446 = vadd.f32 %v5353, %v5445
    %v5447 = vpop.f32.mrf.mxu0
    %v5448 = vpop.f32.mrf.mxu0
    %v5449 = vadd.f32 %v5353, %v5448
    %v5450 = vpop.f32.mrf.mxu0
    %5451 = vmatprep.mubr.bf16.mxu0 0
    %5452 = vmatmul.mubr.bf16.gmra.mxu0 %v5326
    %v5453 = vpop.f32.mrf.mxu0
    %v5454 = vadd.f32 %v5353, %v5453
    %v5455 = vpop.f32.mrf.mxu0
    %v5456 = vpop.f32.mrf.mxu0
    %v5457 = vadd.f32 %v5353, %v5456
    %v5458 = vpop.f32.mrf.mxu0
    %5459 = vmatprep.mubr.bf16.mxu0 0
    %5460 = vmatmul.mubr.bf16.gmra.mxu0 %v5327
    %v5461 = vpop.f32.mrf.mxu0
    %v5462 = vadd.f32 %v5353, %v5461
    %v5463 = vpop.f32.mrf.mxu0
    %v5464 = vpop.f32.mrf.mxu0
    %v5465 = vadd.f32 %v5353, %v5464
    %v5466 = vpop.f32.mrf.mxu0
    %5467 = vmatprep.mubr.bf16.mxu0 0
    %5468 = vmatmul.mubr.bf16.gmra.mxu0 %v5328
    %v5469 = vpop.f32.mrf.mxu0
    %v5470 = vadd.f32 %v5353, %v5469
    %v5471 = vpop.f32.mrf.mxu0
    %v5472 = vpop.f32.mrf.mxu0
    %v5473 = vadd.f32 %v5353, %v5472
    %v5474 = vpop.f32.mrf.mxu0
    %5475 = vmatprep.mubr.bf16.mxu0 0
    %5476 = vmatmul.mubr.bf16.gmra.mxu0 %v5329
    %v5477 = vpop.f32.mrf.mxu0
    %v5478 = vadd.f32 %v5353, %v5477
    %v5479 = vpop.f32.mrf.mxu0
    %v5480 = vpop.f32.mrf.mxu0
    %v5481 = vadd.f32 %v5353, %v5480
    %v5482 = vpop.f32.mrf.mxu0
    %5483 = vmatprep.mubr.bf16.mxu0 0
    %5484 = vmatmul.mubr.bf16.gmra.mxu0 %v5330
    %v5485 = vpop.f32.mrf.mxu0
    %v5486 = vadd.f32 %v5353, %v5485
    %v5487 = vpop.f32.mrf.mxu0
    %v5488 = vpop.f32.mrf.mxu0
    %v5489 = vadd.f32 %v5353, %v5488
    %v5490 = vpop.f32.mrf.mxu0
    %5491 = vmatprep.mubr.bf16.mxu0 0
    %5492 = vmatmul.mubr.bf16.gmra.mxu0 %v5331
    %v5493 = vpop.f32.mrf.mxu0
    %v5494 = vadd.f32 %v5353, %v5493
    %v5495 = vpop.f32.mrf.mxu0
    %v5496 = vpop.f32.mrf.mxu0
    %v5497 = vadd.f32 %v5353, %v5496
    %v5498 = vpop.f32.mrf.mxu0
    %5499 = vdwg.mxu0
    %5500 = vst [vmem:[#allocation11] sm:$0xff] %v5438
    %5501 = vst [vmem:[#allocation11 + $0x8] sm:$0xff] %v5441
    %5502 = vst [vmem:[#allocation11 + $0x10] sm:$0xff] %v5446
    %5503 = vst [vmem:[#allocation11 + $0x18] sm:$0xff] %v5449
    %5504 = vst [vmem:[#allocation11 + $0x20] sm:$0xff] %v5454
    %5505 = vst [vmem:[#allocation11 + $0x28] sm:$0xff] %v5457
    %5506 = vst [vmem:[#allocation11 + $0x30] sm:$0xff] %v5462
    %5507 = vst [vmem:[#allocation11 + $0x38] sm:$0xff] %v5465
    %5508 = vst [vmem:[#allocation11 + $0x40] sm:$0xff] %v5470
    %5509 = vst [vmem:[#allocation11 + $0x48] sm:$0xff] %v5473
    %5510 = vst [vmem:[#allocation11 + $0x50] sm:$0xff] %v5478
    %5511 = vst [vmem:[#allocation11 + $0x58] sm:$0xff] %v5481
    %5512 = vst [vmem:[#allocation11 + $0x60] sm:$0xff] %v5486
    %5513 = vst [vmem:[#allocation11 + $0x68] sm:$0xff] %v5489
    %5514 = vst [vmem:[#allocation11 + $0x70] sm:$0xff] %v5494
    %5515 = vst [vmem:[#allocation11 + $0x78] sm:$0xff] %v5497
    // Predicated region
    $region102: #{tpu_custom_call.1} parent=1 // pred_check
      _
    $region103: #{tpu_custom_call.1} parent=1 // pred_check_branch
      %5517 = sbr.rel (0) target = $region105
    $region104: #{tpu_custom_call.1} parent=1 // pred_region
      %s5519 = ssub.s32 2048, 2048
      %5520 = vsyncadd [#allocation4], %s5519
      %s5521 = sshll.u32 [#allocation11], 4
      %s5522 = int_to_ptr.vmem [resolvable:$true] %s5521
      %5527 = dma.vmem_to_hbm [thread:$0]  %s5522, 2048, %s20, [#allocation4], 128, 128, 8
    $region105: #{tpu_custom_call.1} parent=1 // pred_fallthru
      _
    // Predicated region
    $region106: #{tpu_custom_call.1} parent=1 // pred_check
      _
    $region107: #{tpu_custom_call.1} parent=1 // pred_check_branch
      %5529 = sbr.rel (0) target = $region109
    $region108: #{tpu_custom_call.1} parent=1 // pred_region
      %5530 = dma.done [#allocation4], 2048
    $region109: #{tpu_custom_call.1} parent=1 // pred_fallthru
      _
    %5531 = vsyncpa [#allocation3], 1
    %5532 = vsyncpa [#allocation6], 1
    %5533 = vsyncpa [#allocation9], 1
    %5534 = vsyncpa [#allocation4], 1

</llo_original>
